<compile_context>
chip_gen: v7x
topology: tpu7x:2x2x1
jax: 0.10.0
libtpu: 0.0.40
codegen_flags: <defaults>
</compile_context>

<pallas_src>
import functools

import jax
import jax.numpy as jnp
from jax import lax
from jax.experimental import pallas as pl
from jax.experimental.pallas import tpu as pltpu


def _round_up(x: int, m: int) -> int:
    return ((x + m - 1) // m) * m


def _tie_kernel(x_ref, w_ref, trig_ref, ln_ref, o_ref, *, cq, pack, e_dim):
    """One grid step: processes tq * pack time-interval rows.

    x_ref   : [tq, pack]      f32  intervals (flat row n -> x[n // pack, n % pack])
    w_ref   : [128, E]        f32  fused weight (one-hot emb | periodic proj | bias)
    trig_ref: [2, 128]        f32  row 0 = frequencies, row 1 = phase offsets
    ln_ref  : [2, E]          f32  row 0 = LayerNorm gamma, row 1 = beta
    o_ref   : [tq, pack * E]  f32  lane-dense packed output
    """
    tq = o_ref.shape[0]
    n_chunks = tq // cq

    # Hoisted constants (loaded / built once per grid step, not per chunk).
    w = w_ref[...]                            # [128, E]
    freq = trig_ref[0:1, :]                   # [1, 128]
    off = trig_ref[1:2, :]                    # [1, 128]
    gamma = ln_ref[0:1, :]                    # [1, E]
    beta = ln_ref[1:2, :]                     # [1, E]
    lane = lax.broadcasted_iota(jnp.int32, (cq, 128), 1)

    def chunk_body(c, carry):
        base = pl.multiple_of(c * cq, cq)
        for r in range(pack):                                 # static unroll
            t = x_ref[pl.ds(base, cq), r:r + 1]               # [cq, 1]
            pos = t > 0.0
            mask = pos.astype(jnp.float32)                    # [cq, 1]
            safe = jnp.where(pos, t, 1.0)                     # [cq, 1]
            # torch: clamp((log(t+1)*4).long(), 0, 63); .long() truncates toward
            # zero and the value is >= 0, so astype(int32) matches.
            bucket = jnp.clip((jnp.log(safe + 1.0) * 4.0).astype(jnp.int32),
                              0, 63)                          # [cq, 1]
            # Fused feature row: one-hot | sin | cos (shifted sin) | constant 1.
            feat = ((lane == bucket).astype(jnp.float32)
                    + jnp.sin(safe * freq + off))             # [cq, 128]
            comb = jnp.dot(feat, w,
                           preferred_element_type=jnp.float32) * mask   # [cq, E]
            # LayerNorm over the feature axis (eps = 1e-5, affine).
            mu = jnp.mean(comb, axis=-1, keepdims=True)
            cen = comb - mu
            var = jnp.mean(cen * cen, axis=-1, keepdims=True)
            y = cen * lax.rsqrt(var + 1e-5) * gamma + beta    # [cq, E]
            o_ref[pl.ds(base, cq), r * e_dim:(r + 1) * e_dim] = y
        return carry

    lax.fori_loop(0, n_chunks, chunk_body, 0, unroll=True)


def init_params(embedding_dim: int, key):
    half = embedding_dim // 2
    k0, k1, k2, k3 = jax.random.split(key, 4)
    return {
        "emb": jax.random.normal(k0, (64, half), jnp.float32),            # nn.Embedding weight
        "freqs": (jax.random.normal(k1, (1, 6), jnp.float32) * 0.01),     # periodic_frequencies
        "proj_w": jax.random.normal(k2, (12, half), jnp.float32) * 0.1,   # Linear weight (transposed)
        "proj_b": jax.random.normal(k3, (1, half), jnp.float32) * 0.1,    # Linear bias
        "gamma": jnp.ones((1, embedding_dim), jnp.float32),               # LayerNorm weight
        "beta": jnp.zeros((1, embedding_dim), jnp.float32),               # LayerNorm bias
    }


def _fuse_params(params):
    """Build the fused [128, E] weight and the folded constant blocks."""
    emb = params["emb"].astype(jnp.float32)          # [64, half]
    freqs = params["freqs"].astype(jnp.float32)      # [1, 6]
    proj_w = params["proj_w"].astype(jnp.float32)    # [12, half]
    proj_b = params["proj_b"].astype(jnp.float32)    # [1, half]
    half = emb.shape[1]
    e_dim = 2 * half

    w = jnp.zeros((128, e_dim), jnp.float32)
    w = w.at[0:64, 0:half].set(emb)                  # one-hot lanes -> log embedding
    w = w.at[64:70, half:e_dim].set(proj_w[0:6])     # sin lanes
    w = w.at[70:76, half:e_dim].set(proj_w[6:12])    # cos lanes
    w = w.at[76, half:e_dim].set(proj_b[0])          # constant-1 lane -> bias

    freq_ext = jnp.zeros((128,), jnp.float32)
    freq_ext = freq_ext.at[64:70].set(freqs[0]).at[70:76].set(freqs[0])
    off_ext = jnp.zeros((128,), jnp.float32).at[70:77].set(jnp.pi / 2.0)
    trig = jnp.stack([freq_ext, off_ext], axis=0)    # [2, 128]

    ln = jnp.concatenate([params["gamma"].astype(jnp.float32),
                          params["beta"].astype(jnp.float32)], axis=0)  # [2, E]
    return w, trig, ln


@functools.partial(jax.jit, static_argnames=("tile_rows", "chunk_rows"))
def time_interval_encoder(time_intervals, params, tile_rows: int = 4096,
                          chunk_rows: int = 256):
    # tile_rows: rows per grid step (v6e ~4096; v7x can use ~8192).
    # chunk_rows: in-kernel compute sub-tile (bounds vreg pressure).
    B, S = time_intervals.shape
    half = params["emb"].shape[1]
    e_dim = 2 * half
    n_rows = B * S

    # Lane packing factor: pack rows per 128-lane output row when E < 128.
    pack = 128 // e_dim if (e_dim < 128 and 128 % e_dim == 0) else 1
    cq = _round_up(max(8, chunk_rows // pack), 8)              # packed rows / chunk
    tq_req = max(cq, _round_up(max(1, tile_rows // pack), cq))

    q_needed = _round_up(-(-n_rows // pack), cq)
    # Keep >= 2 grid steps when there is enough work (v7x megacore sharding).
    q_half = _round_up(-(-q_needed // 2), cq)
    tq = min(tq_req, max(cq, q_half))
    q_total = _round_up(q_needed, tq)
    n_padded = q_total * pack

    w, trig, ln = _fuse_params(params)

    x = time_intervals.astype(jnp.float32).reshape(n_rows)
    if n_padded != n_rows:
        x = jnp.pad(x, (0, n_padded - n_rows))     # padded rows: t=0 -> masked -> beta
    x2 = x.reshape(q_total, pack)

    grid = (q_total // tq,)
    kernel = functools.partial(_tie_kernel, cq=cq, pack=pack, e_dim=e_dim)
    out = pl.pallas_call(
        kernel,
        out_shape=jax.ShapeDtypeStruct((q_total, pack * e_dim), jnp.float32),
        grid_spec=pltpu.PrefetchScalarGridSpec(
            num_scalar_prefetch=0,
            grid=grid,
            in_specs=[
                pl.BlockSpec((tq, pack), lambda i: (i, 0)),        # intervals
                pl.BlockSpec((128, e_dim), lambda i: (0, 0)),      # fused weight
                pl.BlockSpec((2, 128), lambda i: (0, 0)),          # freq / phase offsets
                pl.BlockSpec((2, e_dim), lambda i: (0, 0)),        # LN gamma / beta
            ],
            out_specs=pl.BlockSpec((tq, pack * e_dim), lambda i: (i, 0)),
        ),
        compiler_params=pltpu.CompilerParams(
            dimension_semantics=("parallel",)),
    )(x2, w, trig, ln)

    out = out.reshape(q_total * pack, e_dim)        # free row-major un-pack
    if n_padded != n_rows:
        # TODO(synk): the [:n_rows] slice costs one extra output-sized XLA copy
        # when B*S is not tile-aligned; avoided entirely when it is aligned.
        out = out[:n_rows]
    return out.reshape(B, S, e_dim)


def _reference(time_intervals, params):
    """Pure-JAX reference mirroring the PyTorch forward."""
    t = time_intervals.astype(jnp.float32)
    mask = (t > 0).astype(jnp.float32)
    safe = jnp.where(t > 0, t, jnp.ones_like(t))
    log_values = jnp.log(safe + 1.0)
    bucket = jnp.clip((log_values * 4.0).astype(jnp.int32), 0, 63)
    log_feat = params["emb"][bucket]
    phases = safe[..., None] * params["freqs"][0]
    periodic = jnp.concatenate([jnp.sin(phases), jnp.cos(phases)], axis=-1)
    per_feat = periodic @ params["proj_w"] + params["proj_b"][0]
    combined = jnp.concatenate([log_feat, per_feat], axis=-1) * mask[..., None]
    mean = jnp.mean(combined, axis=-1, keepdims=True)
    var = jnp.mean((combined - mean) ** 2, axis=-1, keepdims=True)
    normed = (combined - mean) * lax.rsqrt(var + 1e-5)
    return normed * params["gamma"][0] + params["beta"][0]


if __name__ == "__main__":
    key = jax.random.PRNGKey(0)
    kp, kx, km = jax.random.split(key, 3)

    embedding_dim = 32
    B, S = 2, 8
    params = init_params(embedding_dim, kp)

    # Deterministic time intervals: mostly positive seconds, a few zeros (masked).
    intervals = jax.random.uniform(kx, (B, S), jnp.float32, 0.0, 3600.0)
    zero_mask = jax.random.bernoulli(km, 0.25, (B, S))
    intervals = jnp.where(zero_mask, 0.0, intervals)

    out = time_interval_encoder(intervals, params)
    out = jax.block_until_ready(out)

    ref = _reference(intervals, params)
    assert out.shape == (B, S, embedding_dim), out.shape
    assert jnp.allclose(out, ref, atol=2e-4, rtol=2e-4), "mismatch vs reference"

    print("KERNEL_OK")
</pallas_src>

<mosaic_0001>
module attributes {stable_mosaic.version = 11 : i64} {
  func.func @_tie_kernel(%arg0: i32, %arg1: memref<64x4xf32, #tpu.memory_space<vmem>>, %arg2: memref<128x32xf32, #tpu.memory_space<vmem>>, %arg3: memref<2x128xf32, #tpu.memory_space<vmem>>, %arg4: memref<2x32xf32, #tpu.memory_space<vmem>>, %arg5: memref<64x128xf32, #tpu.memory_space<vmem>>) attributes {dimension_semantics = [#tpu.dimension_semantics<parallel>], iteration_bounds = array<i64: 1>, scalar_prefetch = 0 : i64, scratch_operands = 0 : i64, tpu.core_type = #tpu.core_type<tc>, window_params = [{transform_indices = @transform_0, window_bounds = array<i64: 64, 4>}, {pipeline_mode = #tpu.pipeline_mode<synchronous>, transform_indices = @transform_1, window_bounds = array<i64: 128, 32>}, {pipeline_mode = #tpu.pipeline_mode<synchronous>, transform_indices = @transform_2, window_bounds = array<i64: 2, 128>}, {pipeline_mode = #tpu.pipeline_mode<synchronous>, transform_indices = @transform_3, window_bounds = array<i64: 2, 32>}, {transform_indices = @transform_4, window_bounds = array<i64: 64, 128>}]} {
    %c0 = arith.constant 0 : index
    %c0_0 = arith.constant 0 : index
    %0 = vector.load %arg2[%c0, %c0_0] : memref<128x32xf32, #tpu.memory_space<vmem>>, vector<128x32xf32>
    %c0_1 = arith.constant 0 : index
    %c0_2 = arith.constant 0 : index
    %1 = vector.load %arg3[%c0_1, %c0_2] : memref<2x128xf32, #tpu.memory_space<vmem>>, vector<1x128xf32>
    %c1 = arith.constant 1 : index
    %c0_3 = arith.constant 0 : index
    %2 = vector.load %arg3[%c1, %c0_3] : memref<2x128xf32, #tpu.memory_space<vmem>>, vector<1x128xf32>
    %c0_4 = arith.constant 0 : index
    %c0_5 = arith.constant 0 : index
    %3 = vector.load %arg4[%c0_4, %c0_5] : memref<2x32xf32, #tpu.memory_space<vmem>>, vector<1x32xf32>
    %c1_6 = arith.constant 1 : index
    %c0_7 = arith.constant 0 : index
    %4 = vector.load %arg4[%c1_6, %c0_7] : memref<2x32xf32, #tpu.memory_space<vmem>>, vector<1x32xf32>
    %5 = tpu.iota {dimensions = array<i32: 1>} : vector<64x128xi32>
    %c0_i32 = arith.constant 0 : i32
    %c64_i32 = arith.constant 64 : i32
    %6 = arith.muli %c0_i32, %c64_i32 : i32
    %7 = tpu.assume_multiple %6, 64 : i32
    %8 = arith.index_cast %7 : i32 to index
    %c0_8 = arith.constant 0 : index
    %9 = vector.load %arg1[%8, %c0_8] : memref<64x4xf32, #tpu.memory_space<vmem>>, vector<64x1xf32>
    %cst = arith.constant 0.000000e+00 : f32
    %10 = vector.broadcast %cst : f32 to vector<64x1xf32>
    %11 = arith.cmpf ogt, %9, %10 : vector<64x1xf32>
    %12 = arith.extui %11 : vector<64x1xi1> to vector<64x1xi32>
    %13 = arith.sitofp %12 : vector<64x1xi32> to vector<64x1xf32>
    %cst_9 = arith.constant 1.000000e+00 : f32
    %14 = vector.broadcast %cst_9 : f32 to vector<64x1xf32>
    %15 = arith.select %11, %9, %14 : vector<64x1xi1>, vector<64x1xf32>
    %cst_10 = arith.constant 1.000000e+00 : f32
    %16 = vector.broadcast %cst_10 : f32 to vector<64x1xf32>
    %17 = arith.addf %15, %16 : vector<64x1xf32>
    %18 = math.log %17 : vector<64x1xf32>
    %cst_11 = arith.constant 4.000000e+00 : f32
    %19 = vector.broadcast %cst_11 : f32 to vector<64x1xf32>
    %20 = arith.mulf %18, %19 : vector<64x1xf32>
    %21 = arith.fptosi %20 : vector<64x1xf32> to vector<64x1xi32>
    %c0_i32_12 = arith.constant 0 : i32
    %c63_i32 = arith.constant 63 : i32
    %22 = vector.broadcast %c0_i32_12 : i32 to vector<64x1xi32>
    %23 = arith.maxsi %22, %21 : vector<64x1xi32>
    %24 = vector.broadcast %c63_i32 : i32 to vector<64x1xi32>
    %25 = arith.minsi %24, %23 : vector<64x1xi32>
    %26 = vector.broadcast %25 : vector<64x1xi32> to vector<64x128xi32>
    %27 = arith.cmpi eq, %5, %26 : vector<64x128xi32>
    %28 = arith.extui %27 : vector<64x128xi1> to vector<64x128xi32>
    %29 = arith.sitofp %28 : vector<64x128xi32> to vector<64x128xf32>
    %30 = vector.broadcast %15 : vector<64x1xf32> to vector<64x128xf32>
    %31 = vector.broadcast %1 : vector<1x128xf32> to vector<64x128xf32>
    %32 = arith.mulf %30, %31 : vector<64x128xf32>
    %33 = vector.broadcast %2 : vector<1x128xf32> to vector<64x128xf32>
    %34 = arith.addf %32, %33 : vector<64x128xf32>
    %35 = math.sin %34 : vector<64x128xf32>
    %36 = arith.addf %29, %35 : vector<64x128xf32>
    %cst_13 = arith.constant dense<0.000000e+00> : vector<64x32xf32>
    %37 = tpu.matmul %36, %0, %cst_13 {dimension_numbers = #tpu.dot_dimension_numbers<[1], [0], [0], [1], [0, 0, 1, 1], [], []>} : vector<64x128xf32>, vector<128x32xf32>, vector<64x32xf32> -> vector<64x32xf32>
    %38 = vector.broadcast %13 : vector<64x1xf32> to vector<64x32xf32>
    %39 = arith.mulf %37, %38 : vector<64x32xf32>
    %cst_14 = arith.constant dense<0.000000e+00> : vector<64xf32>
    %40 = vector.multi_reduction <add>, %39, %cst_14 [1] : vector<64x32xf32> to vector<64xf32>
    %41 = vector.shape_cast %40 : vector<64xf32> to vector<64x1xf32>
    %cst_15 = arith.constant 3.200000e+01 : f32
    %42 = vector.broadcast %cst_15 : f32 to vector<64x1xf32>
    %43 = arith.divf %41, %42 : vector<64x1xf32>
    %44 = vector.broadcast %43 : vector<64x1xf32> to vector<64x32xf32>
    %45 = arith.subf %39, %44 : vector<64x32xf32>
    %46 = arith.mulf %45, %45 : vector<64x32xf32>
    %cst_16 = arith.constant dense<0.000000e+00> : vector<64xf32>
    %47 = vector.multi_reduction <add>, %46, %cst_16 [1] : vector<64x32xf32> to vector<64xf32>
    %48 = vector.shape_cast %47 : vector<64xf32> to vector<64x1xf32>
    %cst_17 = arith.constant 3.200000e+01 : f32
    %49 = vector.broadcast %cst_17 : f32 to vector<64x1xf32>
    %50 = arith.divf %48, %49 : vector<64x1xf32>
    %cst_18 = arith.constant 9.99999974E-6 : f32
    %51 = vector.broadcast %cst_18 : f32 to vector<64x1xf32>
    %52 = arith.addf %50, %51 : vector<64x1xf32>
    %53 = math.rsqrt %52 : vector<64x1xf32>
    %54 = vector.broadcast %53 : vector<64x1xf32> to vector<64x32xf32>
    %55 = arith.mulf %45, %54 : vector<64x32xf32>
    %56 = vector.broadcast %3 : vector<1x32xf32> to vector<64x32xf32>
    %57 = arith.mulf %55, %56 : vector<64x32xf32>
    %58 = vector.broadcast %4 : vector<1x32xf32> to vector<64x32xf32>
    %59 = arith.addf %57, %58 : vector<64x32xf32>
    %60 = arith.index_cast %7 : i32 to index
    %c0_19 = arith.constant 0 : index
    %61 = vector.load %arg5[%60, %c0_19] : memref<64x128xf32, #tpu.memory_space<vmem>>, vector<64x32xf32>
    tpu.vector_store %arg5[%60, %c0_19], %59 {strides = array<i32>} : memref<64x128xf32, #tpu.memory_space<vmem>>, vector<64x32xf32>,
    %62 = arith.index_cast %7 : i32 to index
    %c1_20 = arith.constant 1 : index
    %63 = vector.load %arg1[%62, %c1_20] : memref<64x4xf32, #tpu.memory_space<vmem>>, vector<64x1xf32>
    %cst_21 = arith.constant 0.000000e+00 : f32
    %64 = vector.broadcast %cst_21 : f32 to vector<64x1xf32>
    %65 = arith.cmpf ogt, %63, %64 : vector<64x1xf32>
    %66 = arith.extui %65 : vector<64x1xi1> to vector<64x1xi32>
    %67 = arith.sitofp %66 : vector<64x1xi32> to vector<64x1xf32>
    %cst_22 = arith.constant 1.000000e+00 : f32
    %68 = vector.broadcast %cst_22 : f32 to vector<64x1xf32>
    %69 = arith.select %65, %63, %68 : vector<64x1xi1>, vector<64x1xf32>
    %cst_23 = arith.constant 1.000000e+00 : f32
    %70 = vector.broadcast %cst_23 : f32 to vector<64x1xf32>
    %71 = arith.addf %69, %70 : vector<64x1xf32>
    %72 = math.log %71 : vector<64x1xf32>
    %cst_24 = arith.constant 4.000000e+00 : f32
    %73 = vector.broadcast %cst_24 : f32 to vector<64x1xf32>
    %74 = arith.mulf %72, %73 : vector<64x1xf32>
    %75 = arith.fptosi %74 : vector<64x1xf32> to vector<64x1xi32>
    %c0_i32_25 = arith.constant 0 : i32
    %c63_i32_26 = arith.constant 63 : i32
    %76 = vector.broadcast %c0_i32_25 : i32 to vector<64x1xi32>
    %77 = arith.maxsi %76, %75 : vector<64x1xi32>
    %78 = vector.broadcast %c63_i32_26 : i32 to vector<64x1xi32>
    %79 = arith.minsi %78, %77 : vector<64x1xi32>
    %80 = vector.broadcast %79 : vector<64x1xi32> to vector<64x128xi32>
    %81 = arith.cmpi eq, %5, %80 : vector<64x128xi32>
    %82 = arith.extui %81 : vector<64x128xi1> to vector<64x128xi32>
    %83 = arith.sitofp %82 : vector<64x128xi32> to vector<64x128xf32>
    %84 = vector.broadcast %69 : vector<64x1xf32> to vector<64x128xf32>
    %85 = vector.broadcast %1 : vector<1x128xf32> to vector<64x128xf32>
    %86 = arith.mulf %84, %85 : vector<64x128xf32>
    %87 = vector.broadcast %2 : vector<1x128xf32> to vector<64x128xf32>
    %88 = arith.addf %86, %87 : vector<64x128xf32>
    %89 = math.sin %88 : vector<64x128xf32>
    %90 = arith.addf %83, %89 : vector<64x128xf32>
    %cst_27 = arith.constant dense<0.000000e+00> : vector<64x32xf32>
    %91 = tpu.matmul %90, %0, %cst_27 {dimension_numbers = #tpu.dot_dimension_numbers<[1], [0], [0], [1], [0, 0, 1, 1], [], []>} : vector<64x128xf32>, vector<128x32xf32>, vector<64x32xf32> -> vector<64x32xf32>
    %92 = vector.broadcast %67 : vector<64x1xf32> to vector<64x32xf32>
    %93 = arith.mulf %91, %92 : vector<64x32xf32>
    %cst_28 = arith.constant dense<0.000000e+00> : vector<64xf32>
    %94 = vector.multi_reduction <add>, %93, %cst_28 [1] : vector<64x32xf32> to vector<64xf32>
    %95 = vector.shape_cast %94 : vector<64xf32> to vector<64x1xf32>
    %cst_29 = arith.constant 3.200000e+01 : f32
    %96 = vector.broadcast %cst_29 : f32 to vector<64x1xf32>
    %97 = arith.divf %95, %96 : vector<64x1xf32>
    %98 = vector.broadcast %97 : vector<64x1xf32> to vector<64x32xf32>
    %99 = arith.subf %93, %98 : vector<64x32xf32>
    %100 = arith.mulf %99, %99 : vector<64x32xf32>
    %cst_30 = arith.constant dense<0.000000e+00> : vector<64xf32>
    %101 = vector.multi_reduction <add>, %100, %cst_30 [1] : vector<64x32xf32> to vector<64xf32>
    %102 = vector.shape_cast %101 : vector<64xf32> to vector<64x1xf32>
    %cst_31 = arith.constant 3.200000e+01 : f32
    %103 = vector.broadcast %cst_31 : f32 to vector<64x1xf32>
    %104 = arith.divf %102, %103 : vector<64x1xf32>
    %cst_32 = arith.constant 9.99999974E-6 : f32
    %105 = vector.broadcast %cst_32 : f32 to vector<64x1xf32>
    %106 = arith.addf %104, %105 : vector<64x1xf32>
    %107 = math.rsqrt %106 : vector<64x1xf32>
    %108 = vector.broadcast %107 : vector<64x1xf32> to vector<64x32xf32>
    %109 = arith.mulf %99, %108 : vector<64x32xf32>
    %110 = vector.broadcast %3 : vector<1x32xf32> to vector<64x32xf32>
    %111 = arith.mulf %109, %110 : vector<64x32xf32>
    %112 = vector.broadcast %4 : vector<1x32xf32> to vector<64x32xf32>
    %113 = arith.addf %111, %112 : vector<64x32xf32>
    %114 = arith.index_cast %7 : i32 to index
    %c32 = arith.constant 32 : index
    %115 = vector.load %arg5[%114, %c32] : memref<64x128xf32, #tpu.memory_space<vmem>>, vector<64x32xf32>
    tpu.vector_store %arg5[%114, %c32], %113 {strides = array<i32>} : memref<64x128xf32, #tpu.memory_space<vmem>>, vector<64x32xf32>,
    %116 = arith.index_cast %7 : i32 to index
    %c2 = arith.constant 2 : index
    %117 = vector.load %arg1[%116, %c2] : memref<64x4xf32, #tpu.memory_space<vmem>>, vector<64x1xf32>
    %cst_33 = arith.constant 0.000000e+00 : f32
    %118 = vector.broadcast %cst_33 : f32 to vector<64x1xf32>
    %119 = arith.cmpf ogt, %117, %118 : vector<64x1xf32>
    %120 = arith.extui %119 : vector<64x1xi1> to vector<64x1xi32>
    %121 = arith.sitofp %120 : vector<64x1xi32> to vector<64x1xf32>
    %cst_34 = arith.constant 1.000000e+00 : f32
    %122 = vector.broadcast %cst_34 : f32 to vector<64x1xf32>
    %123 = arith.select %119, %117, %122 : vector<64x1xi1>, vector<64x1xf32>
    %cst_35 = arith.constant 1.000000e+00 : f32
    %124 = vector.broadcast %cst_35 : f32 to vector<64x1xf32>
    %125 = arith.addf %123, %124 : vector<64x1xf32>
    %126 = math.log %125 : vector<64x1xf32>
    %cst_36 = arith.constant 4.000000e+00 : f32
    %127 = vector.broadcast %cst_36 : f32 to vector<64x1xf32>
    %128 = arith.mulf %126, %127 : vector<64x1xf32>
    %129 = arith.fptosi %128 : vector<64x1xf32> to vector<64x1xi32>
    %c0_i32_37 = arith.constant 0 : i32
    %c63_i32_38 = arith.constant 63 : i32
    %130 = vector.broadcast %c0_i32_37 : i32 to vector<64x1xi32>
    %131 = arith.maxsi %130, %129 : vector<64x1xi32>
    %132 = vector.broadcast %c63_i32_38 : i32 to vector<64x1xi32>
    %133 = arith.minsi %132, %131 : vector<64x1xi32>
    %134 = vector.broadcast %133 : vector<64x1xi32> to vector<64x128xi32>
    %135 = arith.cmpi eq, %5, %134 : vector<64x128xi32>
    %136 = arith.extui %135 : vector<64x128xi1> to vector<64x128xi32>
    %137 = arith.sitofp %136 : vector<64x128xi32> to vector<64x128xf32>
    %138 = vector.broadcast %123 : vector<64x1xf32> to vector<64x128xf32>
    %139 = vector.broadcast %1 : vector<1x128xf32> to vector<64x128xf32>
    %140 = arith.mulf %138, %139 : vector<64x128xf32>
    %141 = vector.broadcast %2 : vector<1x128xf32> to vector<64x128xf32>
    %142 = arith.addf %140, %141 : vector<64x128xf32>
    %143 = math.sin %142 : vector<64x128xf32>
    %144 = arith.addf %137, %143 : vector<64x128xf32>
    %cst_39 = arith.constant dense<0.000000e+00> : vector<64x32xf32>
    %145 = tpu.matmul %144, %0, %cst_39 {dimension_numbers = #tpu.dot_dimension_numbers<[1], [0], [0], [1], [0, 0, 1, 1], [], []>} : vector<64x128xf32>, vector<128x32xf32>, vector<64x32xf32> -> vector<64x32xf32>
    %146 = vector.broadcast %121 : vector<64x1xf32> to vector<64x32xf32>
    %147 = arith.mulf %145, %146 : vector<64x32xf32>
    %cst_40 = arith.constant dense<0.000000e+00> : vector<64xf32>
    %148 = vector.multi_reduction <add>, %147, %cst_40 [1] : vector<64x32xf32> to vector<64xf32>
    %149 = vector.shape_cast %148 : vector<64xf32> to vector<64x1xf32>
    %cst_41 = arith.constant 3.200000e+01 : f32
    %150 = vector.broadcast %cst_41 : f32 to vector<64x1xf32>
    %151 = arith.divf %149, %150 : vector<64x1xf32>
    %152 = vector.broadcast %151 : vector<64x1xf32> to vector<64x32xf32>
    %153 = arith.subf %147, %152 : vector<64x32xf32>
    %154 = arith.mulf %153, %153 : vector<64x32xf32>
    %cst_42 = arith.constant dense<0.000000e+00> : vector<64xf32>
    %155 = vector.multi_reduction <add>, %154, %cst_42 [1] : vector<64x32xf32> to vector<64xf32>
    %156 = vector.shape_cast %155 : vector<64xf32> to vector<64x1xf32>
    %cst_43 = arith.constant 3.200000e+01 : f32
    %157 = vector.broadcast %cst_43 : f32 to vector<64x1xf32>
    %158 = arith.divf %156, %157 : vector<64x1xf32>
    %cst_44 = arith.constant 9.99999974E-6 : f32
    %159 = vector.broadcast %cst_44 : f32 to vector<64x1xf32>
    %160 = arith.addf %158, %159 : vector<64x1xf32>
    %161 = math.rsqrt %160 : vector<64x1xf32>
    %162 = vector.broadcast %161 : vector<64x1xf32> to vector<64x32xf32>
    %163 = arith.mulf %153, %162 : vector<64x32xf32>
    %164 = vector.broadcast %3 : vector<1x32xf32> to vector<64x32xf32>
    %165 = arith.mulf %163, %164 : vector<64x32xf32>
    %166 = vector.broadcast %4 : vector<1x32xf32> to vector<64x32xf32>
    %167 = arith.addf %165, %166 : vector<64x32xf32>
    %168 = arith.index_cast %7 : i32 to index
    %c64 = arith.constant 64 : index
    %169 = vector.load %arg5[%168, %c64] : memref<64x128xf32, #tpu.memory_space<vmem>>, vector<64x32xf32>
    tpu.vector_store %arg5[%168, %c64], %167 {strides = array<i32>} : memref<64x128xf32, #tpu.memory_space<vmem>>, vector<64x32xf32>,
    %170 = arith.index_cast %7 : i32 to index
    %c3 = arith.constant 3 : index
    %171 = vector.load %arg1[%170, %c3] : memref<64x4xf32, #tpu.memory_space<vmem>>, vector<64x1xf32>
    %cst_45 = arith.constant 0.000000e+00 : f32
    %172 = vector.broadcast %cst_45 : f32 to vector<64x1xf32>
    %173 = arith.cmpf ogt, %171, %172 : vector<64x1xf32>
    %174 = arith.extui %173 : vector<64x1xi1> to vector<64x1xi32>
    %175 = arith.sitofp %174 : vector<64x1xi32> to vector<64x1xf32>
    %cst_46 = arith.constant 1.000000e+00 : f32
    %176 = vector.broadcast %cst_46 : f32 to vector<64x1xf32>
    %177 = arith.select %173, %171, %176 : vector<64x1xi1>, vector<64x1xf32>
    %cst_47 = arith.constant 1.000000e+00 : f32
    %178 = vector.broadcast %cst_47 : f32 to vector<64x1xf32>
    %179 = arith.addf %177, %178 : vector<64x1xf32>
    %180 = math.log %179 : vector<64x1xf32>
    %cst_48 = arith.constant 4.000000e+00 : f32
    %181 = vector.broadcast %cst_48 : f32 to vector<64x1xf32>
    %182 = arith.mulf %180, %181 : vector<64x1xf32>
    %183 = arith.fptosi %182 : vector<64x1xf32> to vector<64x1xi32>
    %c0_i32_49 = arith.constant 0 : i32
    %c63_i32_50 = arith.constant 63 : i32
    %184 = vector.broadcast %c0_i32_49 : i32 to vector<64x1xi32>
    %185 = arith.maxsi %184, %183 : vector<64x1xi32>
    %186 = vector.broadcast %c63_i32_50 : i32 to vector<64x1xi32>
    %187 = arith.minsi %186, %185 : vector<64x1xi32>
    %188 = vector.broadcast %187 : vector<64x1xi32> to vector<64x128xi32>
    %189 = arith.cmpi eq, %5, %188 : vector<64x128xi32>
    %190 = arith.extui %189 : vector<64x128xi1> to vector<64x128xi32>
    %191 = arith.sitofp %190 : vector<64x128xi32> to vector<64x128xf32>
    %192 = vector.broadcast %177 : vector<64x1xf32> to vector<64x128xf32>
    %193 = vector.broadcast %1 : vector<1x128xf32> to vector<64x128xf32>
    %194 = arith.mulf %192, %193 : vector<64x128xf32>
    %195 = vector.broadcast %2 : vector<1x128xf32> to vector<64x128xf32>
    %196 = arith.addf %194, %195 : vector<64x128xf32>
    %197 = math.sin %196 : vector<64x128xf32>
    %198 = arith.addf %191, %197 : vector<64x128xf32>
    %cst_51 = arith.constant dense<0.000000e+00> : vector<64x32xf32>
    %199 = tpu.matmul %198, %0, %cst_51 {dimension_numbers = #tpu.dot_dimension_numbers<[1], [0], [0], [1], [0, 0, 1, 1], [], []>} : vector<64x128xf32>, vector<128x32xf32>, vector<64x32xf32> -> vector<64x32xf32>
    %200 = vector.broadcast %175 : vector<64x1xf32> to vector<64x32xf32>
    %201 = arith.mulf %199, %200 : vector<64x32xf32>
    %cst_52 = arith.constant dense<0.000000e+00> : vector<64xf32>
    %202 = vector.multi_reduction <add>, %201, %cst_52 [1] : vector<64x32xf32> to vector<64xf32>
    %203 = vector.shape_cast %202 : vector<64xf32> to vector<64x1xf32>
    %cst_53 = arith.constant 3.200000e+01 : f32
    %204 = vector.broadcast %cst_53 : f32 to vector<64x1xf32>
    %205 = arith.divf %203, %204 : vector<64x1xf32>
    %206 = vector.broadcast %205 : vector<64x1xf32> to vector<64x32xf32>
    %207 = arith.subf %201, %206 : vector<64x32xf32>
    %208 = arith.mulf %207, %207 : vector<64x32xf32>
    %cst_54 = arith.constant dense<0.000000e+00> : vector<64xf32>
    %209 = vector.multi_reduction <add>, %208, %cst_54 [1] : vector<64x32xf32> to vector<64xf32>
    %210 = vector.shape_cast %209 : vector<64xf32> to vector<64x1xf32>
    %cst_55 = arith.constant 3.200000e+01 : f32
    %211 = vector.broadcast %cst_55 : f32 to vector<64x1xf32>
    %212 = arith.divf %210, %211 : vector<64x1xf32>
    %cst_56 = arith.constant 9.99999974E-6 : f32
    %213 = vector.broadcast %cst_56 : f32 to vector<64x1xf32>
    %214 = arith.addf %212, %213 : vector<64x1xf32>
    %215 = math.rsqrt %214 : vector<64x1xf32>
    %216 = vector.broadcast %215 : vector<64x1xf32> to vector<64x32xf32>
    %217 = arith.mulf %207, %216 : vector<64x32xf32>
    %218 = vector.broadcast %3 : vector<1x32xf32> to vector<64x32xf32>
    %219 = arith.mulf %217, %218 : vector<64x32xf32>
    %220 = vector.broadcast %4 : vector<1x32xf32> to vector<64x32xf32>
    %221 = arith.addf %219, %220 : vector<64x32xf32>
    %222 = arith.index_cast %7 : i32 to index
    %c96 = arith.constant 96 : index
    %223 = vector.load %arg5[%222, %c96] : memref<64x128xf32, #tpu.memory_space<vmem>>, vector<64x32xf32>
    tpu.vector_store %arg5[%222, %c96], %221 {strides = array<i32>} : memref<64x128xf32, #tpu.memory_space<vmem>>, vector<64x32xf32>,
    %c1_i32 = arith.constant 1 : i32
    return
  }
  func.func @transform_0(%arg0: i32) -> (i32, i32) {
    %c0_i32 = arith.constant 0 : i32
    %c0_i32_0 = arith.constant 0 : i32
    return %arg0, %c0_i32 : i32, i32
  }
  func.func @transform_1(%arg0: i32) -> (i32, i32) {
    %c0_i32 = arith.constant 0 : i32
    %c0_i32_0 = arith.constant 0 : i32
    %c0_i32_1 = arith.constant 0 : i32
    return %c0_i32, %c0_i32_0 : i32, i32
  }
  func.func @transform_2(%arg0: i32) -> (i32, i32) {
    %c0_i32 = arith.constant 0 : i32
    %c0_i32_0 = arith.constant 0 : i32
    %c0_i32_1 = arith.constant 0 : i32
    return %c0_i32, %c0_i32_0 : i32, i32
  }
  func.func @transform_3(%arg0: i32) -> (i32, i32) {
    %c0_i32 = arith.constant 0 : i32
    %c0_i32_0 = arith.constant 0 : i32
    %c0_i32_1 = arith.constant 0 : i32
    return %c0_i32, %c0_i32_0 : i32, i32
  }
  func.func @transform_4(%arg0: i32) -> (i32, i32) {
    %c0_i32 = arith.constant 0 : i32
    %c0_i32_0 = arith.constant 0 : i32
    return %arg0, %c0_i32 : i32, i32
  }
}

</mosaic_0001>

<llo_original>
// kernel: time_interval_encoder.1
$region0: #{time_interval_encoder.1}
  #allocation0 [shape = 'u32[]', space=smem, size = 0x4, offset = 0x4, fixed_abs, tag = 'smem constant byte address 0x4 - core index']
  #allocation1 [shape = 'u32[144,128]{1,0:T(1,128)}', space=vmem, size = 0x12000, scoped, tag = 'internal scratch']
  %s0 = inlined_call_operand.vmem [shape: f32[64,4], index: 0, kind: input, shape index: {}]
  %s1 = inlined_call_operand.vmem [shape: f32[128,32], index: 1, kind: input, shape index: {}]
  %s2 = inlined_call_operand.vmem [shape: f32[2,128], index: 2, kind: input, shape index: {}]
  %s3 = inlined_call_operand.vmem [shape: f32[2,32], index: 3, kind: input, shape index: {}]
  %s4 = inlined_call_operand.vmem [shape: f32[64,128], index: 4, kind: output, shape index: {}]
  %s5 = sld [smem:[#allocation0]]
  $region26: #{time_interval_encoder.1} parent=0
    _
  %s7 = ssub.s32 1, %s5
  %s8 = scalar_select 0, %s7, %s5
  // Predicated region
  $region2: #{time_interval_encoder.1} parent=0 // pred_check
    _
  $region3: #{time_interval_encoder.1} parent=0 // pred_check_branch
    %10 = sbr.rel (0) target = $region5
  $region4: #{time_interval_encoder.1} parent=0 // pred_region
    _
  $region5: #{time_interval_encoder.1} parent=0 // pred_fallthru
    _
  // Predicated region
  $region6: #{time_interval_encoder.1} parent=0 // pred_check
    _
  $region7: #{time_interval_encoder.1} parent=0 // pred_check_branch
    %12 = sbr.rel (0) target = $region9
  $region8: #{time_interval_encoder.1} parent=0 // pred_region
    _
  $region9: #{time_interval_encoder.1} parent=0 // pred_fallthru
    _
  // Predicated region
  $region10: #{time_interval_encoder.1} parent=0 // pred_check
    _
  $region11: #{time_interval_encoder.1} parent=0 // pred_check_branch
    %14 = sbr.rel (0) target = $region13
  $region12: #{time_interval_encoder.1} parent=0 // pred_region
    _
  $region13: #{time_interval_encoder.1} parent=0 // pred_fallthru
    _
  // Predicated region
  $region14: #{time_interval_encoder.1} parent=0 // pred_check
    _
  $region15: #{time_interval_encoder.1} parent=0 // pred_check_branch
    %16 = sbr.rel (0) target = $region17
  $region16: #{time_interval_encoder.1} parent=0 // pred_region
    _
  $region17: #{time_interval_encoder.1} parent=0 // pred_fallthru
    _
  %v17 = vld [vmem:[%s1] sm:$0xff]
  %v18 = vld [vmem:[%s1 + $0x8] sm:$0xff]
  %v19 = vld [vmem:[%s1 + $0x10] sm:$0xff]
  %v20 = vld [vmem:[%s1 + $0x18] sm:$0xff]
  %v21 = vld [vmem:[%s1 + $0x20] sm:$0xff]
  %v22 = vld [vmem:[%s1 + $0x28] sm:$0xff]
  %v23 = vld [vmem:[%s1 + $0x30] sm:$0xff]
  %v24 = vld [vmem:[%s1 + $0x38] sm:$0xff]
  %v25 = vld [vmem:[%s1 + $0x40] sm:$0xff]
  %v26 = vld [vmem:[%s1 + $0x48] sm:$0xff]
  %v27 = vld [vmem:[%s1 + $0x50] sm:$0xff]
  %v28 = vld [vmem:[%s1 + $0x58] sm:$0xff]
  %v29 = vld [vmem:[%s1 + $0x60] sm:$0xff]
  %v30 = vld [vmem:[%s1 + $0x68] sm:$0xff]
  %v31 = vld [vmem:[%s1 + $0x70] sm:$0xff]
  %v32 = vld [vmem:[%s1 + $0x78] sm:$0xff]
  %v33 = vld [vmem:[%s2] sm:$0x1]
  %v34 = vld [vmem:[%s2 + $0x1] sm:$0x1]
  %v35 = vld [vmem:[%s3] sm:$0x1]
  %v36 = vld [vmem:[%s3 + $0x1] sm:$0x1]
  %v37 = vlaneseq
  %v38 = vand.u32 %v37, 127
  %v39 = vld [vmem:[%s0] sm:$0xff]
  %v40 = vld [vmem:[%s0 + $0x8] sm:$0xff]
  %v41 = vld [vmem:[%s0 + $0x10] sm:$0xff]
  %v42 = vld [vmem:[%s0 + $0x18] sm:$0xff]
  %v43 = vld [vmem:[%s0 + $0x20] sm:$0xff]
  %v44 = vld [vmem:[%s0 + $0x28] sm:$0xff]
  %v45 = vld [vmem:[%s0 + $0x30] sm:$0xff]
  %v46 = vld [vmem:[%s0 + $0x38] sm:$0xff]
  %vm47 = vcmp.gt.f32.partialorder %v39, 0.0
  %vm48 = vcmp.gt.f32.partialorder %v40, 0.0
  %vm49 = vcmp.gt.f32.partialorder %v41, 0.0
  %vm50 = vcmp.gt.f32.partialorder %v42, 0.0
  %vm51 = vcmp.gt.f32.partialorder %v43, 0.0
  %vm52 = vcmp.gt.f32.partialorder %v44, 0.0
  %vm53 = vcmp.gt.f32.partialorder %v45, 0.0
  %vm54 = vcmp.gt.f32.partialorder %v46, 0.0
  %v55 = vsel %vm47, 1, 0
  %v56 = vsel %vm48, 1, 0
  %v57 = vsel %vm49, 1, 0
  %v58 = vsel %vm50, 1, 0
  %v59 = vsel %vm51, 1, 0
  %v60 = vsel %vm52, 1, 0
  %v61 = vsel %vm53, 1, 0
  %v62 = vsel %vm54, 1, 0
  %v63 = vcvt.s32.f32 %v55
  %v64 = vcvt.s32.f32 %v56
  %v65 = vcvt.s32.f32 %v57
  %v66 = vcvt.s32.f32 %v58
  %v67 = vcvt.s32.f32 %v59
  %v68 = vcvt.s32.f32 %v60
  %v69 = vcvt.s32.f32 %v61
  %v70 = vcvt.s32.f32 %v62
  %v71 = vsel %vm47, %v39, 1.0
  %v72 = vsel %vm48, %v40, 1.0
  %v73 = vsel %vm49, %v41, 1.0
  %v74 = vsel %vm50, %v42, 1.0
  %v75 = vsel %vm51, %v43, 1.0
  %v76 = vsel %vm52, %v44, 1.0
  %v77 = vsel %vm53, %v45, 1.0
  %v78 = vsel %vm54, %v46, 1.0
  %v79 = vadd.f32 %v71, 1.0
  %v80 = vadd.f32 %v72, 1.0
  %v81 = vadd.f32 %v73, 1.0
  %v82 = vadd.f32 %v74, 1.0
  %v83 = vadd.f32 %v75, 1.0
  %v84 = vadd.f32 %v76, 1.0
  %v85 = vadd.f32 %v77, 1.0
  %v86 = vadd.f32 %v78, 1.0
  %v87 = vlog2.pop %v79
  %v88 = vmul.f32 %v87, 0.6931472
  %v89 = vlog2.pop %v80
  %v90 = vmul.f32 %v89, 0.6931472
  %v91 = vlog2.pop %v81
  %v92 = vmul.f32 %v91, 0.6931472
  %v93 = vlog2.pop %v82
  %v94 = vmul.f32 %v93, 0.6931472
  %v95 = vlog2.pop %v83
  %v96 = vmul.f32 %v95, 0.6931472
  %v97 = vlog2.pop %v84
  %v98 = vmul.f32 %v97, 0.6931472
  %v99 = vlog2.pop %v85
  %v100 = vmul.f32 %v99, 0.6931472
  %v101 = vlog2.pop %v86
  %v102 = vmul.f32 %v101, 0.6931472
  %v103 = vmul.f32 %v88, 4.0
  %v104 = vmul.f32 %v90, 4.0
  %v105 = vmul.f32 %v92, 4.0
  %v106 = vmul.f32 %v94, 4.0
  %v107 = vmul.f32 %v96, 4.0
  %v108 = vmul.f32 %v98, 4.0
  %v109 = vmul.f32 %v100, 4.0
  %v110 = vmul.f32 %v102, 4.0
  %v111 = vcvt.f32.s32.to.zero.pseudo %v103
  %v112 = vcvt.f32.s32.to.zero.pseudo %v104
  %v113 = vcvt.f32.s32.to.zero.pseudo %v105
  %v114 = vcvt.f32.s32.to.zero.pseudo %v106
  %v115 = vcvt.f32.s32.to.zero.pseudo %v107
  %v116 = vcvt.f32.s32.to.zero.pseudo %v108
  %v117 = vcvt.f32.s32.to.zero.pseudo %v109
  %v118 = vcvt.f32.s32.to.zero.pseudo %v110
  %vm119 = vcmp.gt.s32.totalorder %v111, 0
  %v120 = vsel %vm119, %v111, 0
  %vm121 = vcmp.gt.s32.totalorder %v112, 0
  %v122 = vsel %vm121, %v112, 0
  %vm123 = vcmp.gt.s32.totalorder %v113, 0
  %v124 = vsel %vm123, %v113, 0
  %vm125 = vcmp.gt.s32.totalorder %v114, 0
  %v126 = vsel %vm125, %v114, 0
  %vm127 = vcmp.gt.s32.totalorder %v115, 0
  %v128 = vsel %vm127, %v115, 0
  %vm129 = vcmp.gt.s32.totalorder %v116, 0
  %v130 = vsel %vm129, %v116, 0
  %vm131 = vcmp.gt.s32.totalorder %v117, 0
  %v132 = vsel %vm131, %v117, 0
  %vm133 = vcmp.gt.s32.totalorder %v118, 0
  %v134 = vsel %vm133, %v118, 0
  %vm135 = vcmp.lt.s32.totalorder %v120, 63
  %v136 = vsel %vm135, %v120, 63
  %vm137 = vcmp.lt.s32.totalorder %v122, 63
  %v138 = vsel %vm137, %v122, 63
  %vm139 = vcmp.lt.s32.totalorder %v124, 63
  %v140 = vsel %vm139, %v124, 63
  %vm141 = vcmp.lt.s32.totalorder %v126, 63
  %v142 = vsel %vm141, %v126, 63
  %vm143 = vcmp.lt.s32.totalorder %v128, 63
  %v144 = vsel %vm143, %v128, 63
  %vm145 = vcmp.lt.s32.totalorder %v130, 63
  %v146 = vsel %vm145, %v130, 63
  %vm147 = vcmp.lt.s32.totalorder %v132, 63
  %v148 = vsel %vm147, %v132, 63
  %vm149 = vcmp.lt.s32.totalorder %v134, 63
  %v150 = vsel %vm149, %v134, 63
  %151 = vset.pattern.permute.xlu0 0
  %152 = vperm.xlu0 %151, %v136
  %v153 = vpop.permute.xlu0 %152
  %154 = vset.pattern.permute.xlu0 0
  %155 = vperm.xlu0 %154, %v138
  %v156 = vpop.permute.xlu0 %155
  %157 = vset.pattern.permute.xlu0 0
  %158 = vperm.xlu0 %157, %v140
  %v159 = vpop.permute.xlu0 %158
  %160 = vset.pattern.permute.xlu0 0
  %161 = vperm.xlu0 %160, %v142
  %v162 = vpop.permute.xlu0 %161
  %163 = vset.pattern.permute.xlu0 0
  %164 = vperm.xlu0 %163, %v144
  %v165 = vpop.permute.xlu0 %164
  %166 = vset.pattern.permute.xlu0 0
  %167 = vperm.xlu0 %166, %v146
  %v168 = vpop.permute.xlu0 %167
  %169 = vset.pattern.permute.xlu0 0
  %170 = vperm.xlu0 %169, %v148
  %v171 = vpop.permute.xlu0 %170
  %172 = vset.pattern.permute.xlu0 0
  %173 = vperm.xlu0 %172, %v150
  %v174 = vpop.permute.xlu0 %173
  %vm175 = vcmp.eq.s32.totalorder %v38, %v153
  %vm176 = vcmp.eq.s32.totalorder %v38, %v156
  %vm177 = vcmp.eq.s32.totalorder %v38, %v159
  %vm178 = vcmp.eq.s32.totalorder %v38, %v162
  %vm179 = vcmp.eq.s32.totalorder %v38, %v165
  %vm180 = vcmp.eq.s32.totalorder %v38, %v168
  %vm181 = vcmp.eq.s32.totalorder %v38, %v171
  %vm182 = vcmp.eq.s32.totalorder %v38, %v174
  %v183 = vsel %vm175, 1, 0
  %v184 = vsel %vm176, 1, 0
  %v185 = vsel %vm177, 1, 0
  %v186 = vsel %vm178, 1, 0
  %v187 = vsel %vm179, 1, 0
  %v188 = vsel %vm180, 1, 0
  %v189 = vsel %vm181, 1, 0
  %v190 = vsel %vm182, 1, 0
  %v191 = vcvt.s32.f32 %v183
  %v192 = vcvt.s32.f32 %v184
  %v193 = vcvt.s32.f32 %v185
  %v194 = vcvt.s32.f32 %v186
  %v195 = vcvt.s32.f32 %v187
  %v196 = vcvt.s32.f32 %v188
  %v197 = vcvt.s32.f32 %v189
  %v198 = vcvt.s32.f32 %v190
  %200 = vset.pattern.permute.xlu0 0
  %201 = vperm.xlu0 %200, %v71
  %v202 = vpop.permute.xlu0 %201
  %205 = vset.pattern.permute.xlu0 0
  %206 = vperm.xlu0 %205, %v72
  %v207 = vpop.permute.xlu0 %206
  %210 = vset.pattern.permute.xlu0 0
  %211 = vperm.xlu0 %210, %v73
  %v212 = vpop.permute.xlu0 %211
  %215 = vset.pattern.permute.xlu0 0
  %216 = vperm.xlu0 %215, %v74
  %v217 = vpop.permute.xlu0 %216
  %220 = vset.pattern.permute.xlu0 0
  %221 = vperm.xlu0 %220, %v75
  %v222 = vpop.permute.xlu0 %221
  %225 = vset.pattern.permute.xlu0 0
  %226 = vperm.xlu0 %225, %v76
  %v227 = vpop.permute.xlu0 %226
  %230 = vset.pattern.permute.xlu0 0
  %231 = vperm.xlu0 %230, %v77
  %v232 = vpop.permute.xlu0 %231
  %235 = vset.pattern.permute.xlu0 0
  %236 = vperm.xlu0 %235, %v78
  %v237 = vpop.permute.xlu0 %236
  %v239 = vlaneseq
  %v240 = vshrl.u32 %v239, 7
  %v241 = vsub.s32 0, %v240
  %v242 = vrot.slane %v33, %v241
  %v243 = vmul.f32 %v202, %v242
  %v244 = vmul.f32 %v207, %v242
  %v245 = vmul.f32 %v212, %v242
  %v246 = vmul.f32 %v217, %v242
  %v247 = vmul.f32 %v222, %v242
  %v248 = vmul.f32 %v227, %v242
  %v249 = vmul.f32 %v232, %v242
  %v250 = vmul.f32 %v237, %v242
  %v251 = vlaneseq
  %v252 = vshrl.u32 %v251, 7
  %v253 = vsub.s32 0, %v252
  %v254 = vrot.slane %v34, %v253
  %v255 = vadd.f32 %v243, %v254
  %v256 = vadd.f32 %v244, %v254
  %v257 = vadd.f32 %v245, %v254
  %v258 = vadd.f32 %v246, %v254
  %v259 = vadd.f32 %v247, %v254
  %v260 = vadd.f32 %v248, %v254
  %v261 = vadd.f32 %v249, %v254
  %v262 = vadd.f32 %v250, %v254
  %v263 = vand.u32 2147483647, %v255
  %vm264 = vcmp.le.f32.partialorder %v263, 0.7853982
  %vm265 = vcmp.lt.s32.totalorder %v255, 0
  %v266 = vand.u32 %v255, 2139095040
  %v267 = vshrl.u32 %v266, 23
  %v268 = vsub.s32 %v267, 127
  %v269 = vand.u32 2147483647, %v255
  %v270 = vand.u32 %v269, 8388607
  %v271 = vor.u32 %v270, 8388608
  %v272 = vsub.s32 0, %v271
  %v273 = vadd.s32 %v268, 1
  %vm274 = vcmp.gt.s32.totalorder %v273, 0
  %v275 = vsel %vm274, %v273, 0
  %v276 = vshrl.u32 %v275, 5
  %v277 = vand.u32 %v275, 31
  %v278 = vsub.s32 32, %v277
  %v279 = vshrl.u32 683565275, %v278
  %v280 = vshll.u32 683565275, %v277
  %v281 = vshrl.u32 2475754826, %v278
  %v282 = vor.u32 %v280, %v281
  %v283 = vshll.u32 2475754826, %v277
  %v284 = vshrl.u32 2131351028, %v278
  %v285 = vor.u32 %v283, %v284
  %v286 = vshll.u32 2131351028, %v277
  %v287 = vshrl.u32 2102212464, %v278
  %v288 = vor.u32 %v286, %v287
  %v289 = vshll.u32 2102212464, %v277
  %v290 = vshrl.u32 920167782, %v278
  %v291 = vor.u32 %v289, %v290
  %v292 = vshll.u32 920167782, %v277
  %v293 = vshrl.u32 1326507024, %v278
  %v294 = vor.u32 %v292, %v293
  %vm295 = vcmp.lt.s32.totalorder %v276, 1
  %vm296 = vcmp.lt.s32.totalorder %v276, 2
  %vm297 = vcmp.lt.s32.totalorder %v276, 3
  %vm298 = vcmp.lt.s32.totalorder %v276, 4
  %v299 = vsel %vm295, %v279, %v282
  %v300 = vsel %vm298, %v288, 2102212464
  %v301 = vsel %vm297, %v285, %v300
  %v302 = vsel %vm296, %v299, %v301
  %v303 = vsel %vm295, %v282, %v285
  %v304 = vsel %vm298, %v291, 920167782
  %v305 = vsel %vm297, %v288, %v304
  %v306 = vsel %vm296, %v303, %v305
  %v307 = vsel %vm295, %v285, %v288
  %v308 = vsel %vm298, %v294, 1326507024
  %v309 = vsel %vm297, %v291, %v308
  %v310 = vsel %vm296, %v307, %v309
  %v311 = vshll.u32 %v271, 8
  %v312 = vmul.u32.u64.compose %v311, %v310
  %v313 = vextract.low.u32 %v312
  %v314 = vextract.high.u32 %v312
  %v315 = vmul.u32.u64.compose %v311, %v306
  %v316 = vextract.low.u32 %v315
  %v317 = vextract.high.u32 %v315
  %v318 = vmul.u32 %v311, %v302
  %v319 = vadd.s32 %v314, %v316
  %vm320 = vc.u32 %v314, %v316
  %v321 = vadd.s32 %v317, 1
  %v322 = vsel %vm320, %v321, %v317
  %v323 = vadd.s32 %v318, %v322
  %v324 = vadd.s32 %v323, 536870912
  %v325 = vshrl.u32 %v324, 30
  %v326 = vshll.u32 %v325, 30
  %v327 = vsub.s32 %v323, %v326
  %vm328 = vcmp.lt.s32.totalorder %v327, 0
  %v329 = vsub.s32 0, %v327
  %v330 = vsel %vm328, %v329, %v327
  %v331 = vclz %v330
  %v332 = vsub.s32 %v331, 2
  %vm333 = vcmp.gt.s32.totalorder 0, %v332
  %v334 = vsel %vm333, 0, %v332
  %v335 = vsub.s32 32, %v334
  %v336 = vshll.u32 %v327, %v334
  %v337 = vshrl.u32 %v319, %v335
  %v338 = vor.u32 %v336, %v337
  %v339 = vsub.s32 4294967266, %v334
  %v340 = vadd.s32 %v339, 127
  %v341 = vshll.u32 %v340, 23
  %v342 = vor.u32 4788187, %v341
  %v343 = vand.u32 2147483647, %v342
  %v345 = vcvt.s32.f32 %v338
  %v346 = vmul.f32 %v345, %v343
  %v347 = vxor.u32 %v346, 2147483648
  %v348 = vsel %vm265, %v347, %v346
  %v349 = vsub.s32 4, %v325
  %v350 = vsel %vm265, %v349, %v325
  %v351 = vsel %vm264, %v255, %v348
  %v352 = vsel %vm264, 0, %v350
  %v353 = vcosq.f32.pop %v351
  %v354 = vsinq.f32.pop %v351
  %vm355 = vweird.f32 %v255
  %v356 = vadd.s32 %v352, 3
  %v357 = vand.u32 %v356, 3
  %vm358 = vcmp.lt.s32.totalorder %v357, 2
  %vm359 = vcmp.eq.s32.totalorder %v357, 0
  %v360 = vxor.u32 %v354, 2147483648
  %v361 = vsel %vm359, %v353, %v360
  %vm362 = vcmp.eq.s32.totalorder %v357, 2
  %v363 = vxor.u32 %v353, 2147483648
  %v364 = vsel %vm362, %v363, %v354
  %v365 = vsel %vm358, %v361, %v364
  %v366 = vsel %vm355, nan, %v365
  %v367 = vand.u32 2147483647, %v256
  %vm368 = vcmp.le.f32.partialorder %v367, 0.7853982
  %vm369 = vcmp.lt.s32.totalorder %v256, 0
  %v370 = vand.u32 %v256, 2139095040
  %v371 = vshrl.u32 %v370, 23
  %v372 = vsub.s32 %v371, 127
  %v373 = vand.u32 2147483647, %v256
  %v374 = vand.u32 %v373, 8388607
  %v375 = vor.u32 %v374, 8388608
  %v376 = vsub.s32 0, %v375
  %v377 = vadd.s32 %v372, 1
  %vm378 = vcmp.gt.s32.totalorder %v377, 0
  %v379 = vsel %vm378, %v377, 0
  %v380 = vshrl.u32 %v379, 5
  %v381 = vand.u32 %v379, 31
  %v382 = vsub.s32 32, %v381
  %v383 = vshrl.u32 683565275, %v382
  %v384 = vshll.u32 683565275, %v381
  %v385 = vshrl.u32 2475754826, %v382
  %v386 = vor.u32 %v384, %v385
  %v387 = vshll.u32 2475754826, %v381
  %v388 = vshrl.u32 2131351028, %v382
  %v389 = vor.u32 %v387, %v388
  %v390 = vshll.u32 2131351028, %v381
  %v391 = vshrl.u32 2102212464, %v382
  %v392 = vor.u32 %v390, %v391
  %v393 = vshll.u32 2102212464, %v381
  %v394 = vshrl.u32 920167782, %v382
  %v395 = vor.u32 %v393, %v394
  %v396 = vshll.u32 920167782, %v381
  %v397 = vshrl.u32 1326507024, %v382
  %v398 = vor.u32 %v396, %v397
  %vm399 = vcmp.lt.s32.totalorder %v380, 1
  %vm400 = vcmp.lt.s32.totalorder %v380, 2
  %vm401 = vcmp.lt.s32.totalorder %v380, 3
  %vm402 = vcmp.lt.s32.totalorder %v380, 4
  %v403 = vsel %vm399, %v383, %v386
  %v404 = vsel %vm402, %v392, 2102212464
  %v405 = vsel %vm401, %v389, %v404
  %v406 = vsel %vm400, %v403, %v405
  %v407 = vsel %vm399, %v386, %v389
  %v408 = vsel %vm402, %v395, 920167782
  %v409 = vsel %vm401, %v392, %v408
  %v410 = vsel %vm400, %v407, %v409
  %v411 = vsel %vm399, %v389, %v392
  %v412 = vsel %vm402, %v398, 1326507024
  %v413 = vsel %vm401, %v395, %v412
  %v414 = vsel %vm400, %v411, %v413
  %v415 = vshll.u32 %v375, 8
  %v416 = vmul.u32.u64.compose %v415, %v414
  %v417 = vextract.low.u32 %v416
  %v418 = vextract.high.u32 %v416
  %v419 = vmul.u32.u64.compose %v415, %v410
  %v420 = vextract.low.u32 %v419
  %v421 = vextract.high.u32 %v419
  %v422 = vmul.u32 %v415, %v406
  %v423 = vadd.s32 %v418, %v420
  %vm424 = vc.u32 %v418, %v420
  %v425 = vadd.s32 %v421, 1
  %v426 = vsel %vm424, %v425, %v421
  %v427 = vadd.s32 %v422, %v426
  %v428 = vadd.s32 %v427, 536870912
  %v429 = vshrl.u32 %v428, 30
  %v430 = vshll.u32 %v429, 30
  %v431 = vsub.s32 %v427, %v430
  %vm432 = vcmp.lt.s32.totalorder %v431, 0
  %v433 = vsub.s32 0, %v431
  %v434 = vsel %vm432, %v433, %v431
  %v435 = vclz %v434
  %v436 = vsub.s32 %v435, 2
  %vm437 = vcmp.gt.s32.totalorder 0, %v436
  %v438 = vsel %vm437, 0, %v436
  %v439 = vsub.s32 32, %v438
  %v440 = vshll.u32 %v431, %v438
  %v441 = vshrl.u32 %v423, %v439
  %v442 = vor.u32 %v440, %v441
  %v443 = vsub.s32 4294967266, %v438
  %v444 = vadd.s32 %v443, 127
  %v445 = vshll.u32 %v444, 23
  %v446 = vor.u32 4788187, %v445
  %v447 = vand.u32 2147483647, %v446
  %v449 = vcvt.s32.f32 %v442
  %v450 = vmul.f32 %v449, %v447
  %v451 = vxor.u32 %v450, 2147483648
  %v452 = vsel %vm369, %v451, %v450
  %v453 = vsub.s32 4, %v429
  %v454 = vsel %vm369, %v453, %v429
  %v455 = vsel %vm368, %v256, %v452
  %v456 = vsel %vm368, 0, %v454
  %v457 = vcosq.f32.pop %v455
  %v458 = vsinq.f32.pop %v455
  %vm459 = vweird.f32 %v256
  %v460 = vadd.s32 %v456, 3
  %v461 = vand.u32 %v460, 3
  %vm462 = vcmp.lt.s32.totalorder %v461, 2
  %vm463 = vcmp.eq.s32.totalorder %v461, 0
  %v464 = vxor.u32 %v458, 2147483648
  %v465 = vsel %vm463, %v457, %v464
  %vm466 = vcmp.eq.s32.totalorder %v461, 2
  %v467 = vxor.u32 %v457, 2147483648
  %v468 = vsel %vm466, %v467, %v458
  %v469 = vsel %vm462, %v465, %v468
  %v470 = vsel %vm459, nan, %v469
  %v471 = vand.u32 2147483647, %v257
  %vm472 = vcmp.le.f32.partialorder %v471, 0.7853982
  %vm473 = vcmp.lt.s32.totalorder %v257, 0
  %v474 = vand.u32 %v257, 2139095040
  %v475 = vshrl.u32 %v474, 23
  %v476 = vsub.s32 %v475, 127
  %v477 = vand.u32 2147483647, %v257
  %v478 = vand.u32 %v477, 8388607
  %v479 = vor.u32 %v478, 8388608
  %v480 = vsub.s32 0, %v479
  %v481 = vadd.s32 %v476, 1
  %vm482 = vcmp.gt.s32.totalorder %v481, 0
  %v483 = vsel %vm482, %v481, 0
  %v484 = vshrl.u32 %v483, 5
  %v485 = vand.u32 %v483, 31
  %v486 = vsub.s32 32, %v485
  %v487 = vshrl.u32 683565275, %v486
  %v488 = vshll.u32 683565275, %v485
  %v489 = vshrl.u32 2475754826, %v486
  %v490 = vor.u32 %v488, %v489
  %v491 = vshll.u32 2475754826, %v485
  %v492 = vshrl.u32 2131351028, %v486
  %v493 = vor.u32 %v491, %v492
  %v494 = vshll.u32 2131351028, %v485
  %v495 = vshrl.u32 2102212464, %v486
  %v496 = vor.u32 %v494, %v495
  %v497 = vshll.u32 2102212464, %v485
  %v498 = vshrl.u32 920167782, %v486
  %v499 = vor.u32 %v497, %v498
  %v500 = vshll.u32 920167782, %v485
  %v501 = vshrl.u32 1326507024, %v486
  %v502 = vor.u32 %v500, %v501
  %vm503 = vcmp.lt.s32.totalorder %v484, 1
  %vm504 = vcmp.lt.s32.totalorder %v484, 2
  %vm505 = vcmp.lt.s32.totalorder %v484, 3
  %vm506 = vcmp.lt.s32.totalorder %v484, 4
  %v507 = vsel %vm503, %v487, %v490
  %v508 = vsel %vm506, %v496, 2102212464
  %v509 = vsel %vm505, %v493, %v508
  %v510 = vsel %vm504, %v507, %v509
  %v511 = vsel %vm503, %v490, %v493
  %v512 = vsel %vm506, %v499, 920167782
  %v513 = vsel %vm505, %v496, %v512
  %v514 = vsel %vm504, %v511, %v513
  %v515 = vsel %vm503, %v493, %v496
  %v516 = vsel %vm506, %v502, 1326507024
  %v517 = vsel %vm505, %v499, %v516
  %v518 = vsel %vm504, %v515, %v517
  %v519 = vshll.u32 %v479, 8
  %v520 = vmul.u32.u64.compose %v519, %v518
  %v521 = vextract.low.u32 %v520
  %v522 = vextract.high.u32 %v520
  %v523 = vmul.u32.u64.compose %v519, %v514
  %v524 = vextract.low.u32 %v523
  %v525 = vextract.high.u32 %v523
  %v526 = vmul.u32 %v519, %v510
  %v527 = vadd.s32 %v522, %v524
  %vm528 = vc.u32 %v522, %v524
  %v529 = vadd.s32 %v525, 1
  %v530 = vsel %vm528, %v529, %v525
  %v531 = vadd.s32 %v526, %v530
  %v532 = vadd.s32 %v531, 536870912
  %v533 = vshrl.u32 %v532, 30
  %v534 = vshll.u32 %v533, 30
  %v535 = vsub.s32 %v531, %v534
  %vm536 = vcmp.lt.s32.totalorder %v535, 0
  %v537 = vsub.s32 0, %v535
  %v538 = vsel %vm536, %v537, %v535
  %v539 = vclz %v538
  %v540 = vsub.s32 %v539, 2
  %vm541 = vcmp.gt.s32.totalorder 0, %v540
  %v542 = vsel %vm541, 0, %v540
  %v543 = vsub.s32 32, %v542
  %v544 = vshll.u32 %v535, %v542
  %v545 = vshrl.u32 %v527, %v543
  %v546 = vor.u32 %v544, %v545
  %v547 = vsub.s32 4294967266, %v542
  %v548 = vadd.s32 %v547, 127
  %v549 = vshll.u32 %v548, 23
  %v550 = vor.u32 4788187, %v549
  %v551 = vand.u32 2147483647, %v550
  %v553 = vcvt.s32.f32 %v546
  %v554 = vmul.f32 %v553, %v551
  %v555 = vxor.u32 %v554, 2147483648
  %v556 = vsel %vm473, %v555, %v554
  %v557 = vsub.s32 4, %v533
  %v558 = vsel %vm473, %v557, %v533
  %v559 = vsel %vm472, %v257, %v556
  %v560 = vsel %vm472, 0, %v558
  %v561 = vcosq.f32.pop %v559
  %v562 = vsinq.f32.pop %v559
  %vm563 = vweird.f32 %v257
  %v564 = vadd.s32 %v560, 3
  %v565 = vand.u32 %v564, 3
  %vm566 = vcmp.lt.s32.totalorder %v565, 2
  %vm567 = vcmp.eq.s32.totalorder %v565, 0
  %v568 = vxor.u32 %v562, 2147483648
  %v569 = vsel %vm567, %v561, %v568
  %vm570 = vcmp.eq.s32.totalorder %v565, 2
  %v571 = vxor.u32 %v561, 2147483648
  %v572 = vsel %vm570, %v571, %v562
  %v573 = vsel %vm566, %v569, %v572
  %v574 = vsel %vm563, nan, %v573
  %v575 = vand.u32 2147483647, %v258
  %vm576 = vcmp.le.f32.partialorder %v575, 0.7853982
  %vm577 = vcmp.lt.s32.totalorder %v258, 0
  %v578 = vand.u32 %v258, 2139095040
  %v579 = vshrl.u32 %v578, 23
  %v580 = vsub.s32 %v579, 127
  %v581 = vand.u32 2147483647, %v258
  %v582 = vand.u32 %v581, 8388607
  %v583 = vor.u32 %v582, 8388608
  %v584 = vsub.s32 0, %v583
  %v585 = vadd.s32 %v580, 1
  %vm586 = vcmp.gt.s32.totalorder %v585, 0
  %v587 = vsel %vm586, %v585, 0
  %v588 = vshrl.u32 %v587, 5
  %v589 = vand.u32 %v587, 31
  %v590 = vsub.s32 32, %v589
  %v591 = vshrl.u32 683565275, %v590
  %v592 = vshll.u32 683565275, %v589
  %v593 = vshrl.u32 2475754826, %v590
  %v594 = vor.u32 %v592, %v593
  %v595 = vshll.u32 2475754826, %v589
  %v596 = vshrl.u32 2131351028, %v590
  %v597 = vor.u32 %v595, %v596
  %v598 = vshll.u32 2131351028, %v589
  %v599 = vshrl.u32 2102212464, %v590
  %v600 = vor.u32 %v598, %v599
  %v601 = vshll.u32 2102212464, %v589
  %v602 = vshrl.u32 920167782, %v590
  %v603 = vor.u32 %v601, %v602
  %v604 = vshll.u32 920167782, %v589
  %v605 = vshrl.u32 1326507024, %v590
  %v606 = vor.u32 %v604, %v605
  %vm607 = vcmp.lt.s32.totalorder %v588, 1
  %vm608 = vcmp.lt.s32.totalorder %v588, 2
  %vm609 = vcmp.lt.s32.totalorder %v588, 3
  %vm610 = vcmp.lt.s32.totalorder %v588, 4
  %v611 = vsel %vm607, %v591, %v594
  %v612 = vsel %vm610, %v600, 2102212464
  %v613 = vsel %vm609, %v597, %v612
  %v614 = vsel %vm608, %v611, %v613
  %v615 = vsel %vm607, %v594, %v597
  %v616 = vsel %vm610, %v603, 920167782
  %v617 = vsel %vm609, %v600, %v616
  %v618 = vsel %vm608, %v615, %v617
  %v619 = vsel %vm607, %v597, %v600
  %v620 = vsel %vm610, %v606, 1326507024
  %v621 = vsel %vm609, %v603, %v620
  %v622 = vsel %vm608, %v619, %v621
  %v623 = vshll.u32 %v583, 8
  %v624 = vmul.u32.u64.compose %v623, %v622
  %v625 = vextract.low.u32 %v624
  %v626 = vextract.high.u32 %v624
  %v627 = vmul.u32.u64.compose %v623, %v618
  %v628 = vextract.low.u32 %v627
  %v629 = vextract.high.u32 %v627
  %v630 = vmul.u32 %v623, %v614
  %v631 = vadd.s32 %v626, %v628
  %vm632 = vc.u32 %v626, %v628
  %v633 = vadd.s32 %v629, 1
  %v634 = vsel %vm632, %v633, %v629
  %v635 = vadd.s32 %v630, %v634
  %v636 = vadd.s32 %v635, 536870912
  %v637 = vshrl.u32 %v636, 30
  %v638 = vshll.u32 %v637, 30
  %v639 = vsub.s32 %v635, %v638
  %vm640 = vcmp.lt.s32.totalorder %v639, 0
  %v641 = vsub.s32 0, %v639
  %v642 = vsel %vm640, %v641, %v639
  %v643 = vclz %v642
  %v644 = vsub.s32 %v643, 2
  %vm645 = vcmp.gt.s32.totalorder 0, %v644
  %v646 = vsel %vm645, 0, %v644
  %v647 = vsub.s32 32, %v646
  %v648 = vshll.u32 %v639, %v646
  %v649 = vshrl.u32 %v631, %v647
  %v650 = vor.u32 %v648, %v649
  %v651 = vsub.s32 4294967266, %v646
  %v652 = vadd.s32 %v651, 127
  %v653 = vshll.u32 %v652, 23
  %v654 = vor.u32 4788187, %v653
  %v655 = vand.u32 2147483647, %v654
  %v657 = vcvt.s32.f32 %v650
  %v658 = vmul.f32 %v657, %v655
  %v659 = vxor.u32 %v658, 2147483648
  %v660 = vsel %vm577, %v659, %v658
  %v661 = vsub.s32 4, %v637
  %v662 = vsel %vm577, %v661, %v637
  %v663 = vsel %vm576, %v258, %v660
  %v664 = vsel %vm576, 0, %v662
  %v665 = vcosq.f32.pop %v663
  %v666 = vsinq.f32.pop %v663
  %vm667 = vweird.f32 %v258
  %v668 = vadd.s32 %v664, 3
  %v669 = vand.u32 %v668, 3
  %vm670 = vcmp.lt.s32.totalorder %v669, 2
  %vm671 = vcmp.eq.s32.totalorder %v669, 0
  %v672 = vxor.u32 %v666, 2147483648
  %v673 = vsel %vm671, %v665, %v672
  %vm674 = vcmp.eq.s32.totalorder %v669, 2
  %v675 = vxor.u32 %v665, 2147483648
  %v676 = vsel %vm674, %v675, %v666
  %v677 = vsel %vm670, %v673, %v676
  %v678 = vsel %vm667, nan, %v677
  %v679 = vand.u32 2147483647, %v259
  %vm680 = vcmp.le.f32.partialorder %v679, 0.7853982
  %vm681 = vcmp.lt.s32.totalorder %v259, 0
  %v682 = vand.u32 %v259, 2139095040
  %v683 = vshrl.u32 %v682, 23
  %v684 = vsub.s32 %v683, 127
  %v685 = vand.u32 2147483647, %v259
  %v686 = vand.u32 %v685, 8388607
  %v687 = vor.u32 %v686, 8388608
  %v688 = vsub.s32 0, %v687
  %v689 = vadd.s32 %v684, 1
  %vm690 = vcmp.gt.s32.totalorder %v689, 0
  %v691 = vsel %vm690, %v689, 0
  %v692 = vshrl.u32 %v691, 5
  %v693 = vand.u32 %v691, 31
  %v694 = vsub.s32 32, %v693
  %v695 = vshrl.u32 683565275, %v694
  %v696 = vshll.u32 683565275, %v693
  %v697 = vshrl.u32 2475754826, %v694
  %v698 = vor.u32 %v696, %v697
  %v699 = vshll.u32 2475754826, %v693
  %v700 = vshrl.u32 2131351028, %v694
  %v701 = vor.u32 %v699, %v700
  %v702 = vshll.u32 2131351028, %v693
  %v703 = vshrl.u32 2102212464, %v694
  %v704 = vor.u32 %v702, %v703
  %v705 = vshll.u32 2102212464, %v693
  %v706 = vshrl.u32 920167782, %v694
  %v707 = vor.u32 %v705, %v706
  %v708 = vshll.u32 920167782, %v693
  %v709 = vshrl.u32 1326507024, %v694
  %v710 = vor.u32 %v708, %v709
  %vm711 = vcmp.lt.s32.totalorder %v692, 1
  %vm712 = vcmp.lt.s32.totalorder %v692, 2
  %vm713 = vcmp.lt.s32.totalorder %v692, 3
  %vm714 = vcmp.lt.s32.totalorder %v692, 4
  %v715 = vsel %vm711, %v695, %v698
  %v716 = vsel %vm714, %v704, 2102212464
  %v717 = vsel %vm713, %v701, %v716
  %v718 = vsel %vm712, %v715, %v717
  %v719 = vsel %vm711, %v698, %v701
  %v720 = vsel %vm714, %v707, 920167782
  %v721 = vsel %vm713, %v704, %v720
  %v722 = vsel %vm712, %v719, %v721
  %v723 = vsel %vm711, %v701, %v704
  %v724 = vsel %vm714, %v710, 1326507024
  %v725 = vsel %vm713, %v707, %v724
  %v726 = vsel %vm712, %v723, %v725
  %v727 = vshll.u32 %v687, 8
  %v728 = vmul.u32.u64.compose %v727, %v726
  %v729 = vextract.low.u32 %v728
  %v730 = vextract.high.u32 %v728
  %v731 = vmul.u32.u64.compose %v727, %v722
  %v732 = vextract.low.u32 %v731
  %v733 = vextract.high.u32 %v731
  %v734 = vmul.u32 %v727, %v718
  %v735 = vadd.s32 %v730, %v732
  %vm736 = vc.u32 %v730, %v732
  %v737 = vadd.s32 %v733, 1
  %v738 = vsel %vm736, %v737, %v733
  %v739 = vadd.s32 %v734, %v738
  %v740 = vadd.s32 %v739, 536870912
  %v741 = vshrl.u32 %v740, 30
  %v742 = vshll.u32 %v741, 30
  %v743 = vsub.s32 %v739, %v742
  %vm744 = vcmp.lt.s32.totalorder %v743, 0
  %v745 = vsub.s32 0, %v743
  %v746 = vsel %vm744, %v745, %v743
  %v747 = vclz %v746
  %v748 = vsub.s32 %v747, 2
  %vm749 = vcmp.gt.s32.totalorder 0, %v748
  %v750 = vsel %vm749, 0, %v748
  %v751 = vsub.s32 32, %v750
  %v752 = vshll.u32 %v743, %v750
  %v753 = vshrl.u32 %v735, %v751
  %v754 = vor.u32 %v752, %v753
  %v755 = vsub.s32 4294967266, %v750
  %v756 = vadd.s32 %v755, 127
  %v757 = vshll.u32 %v756, 23
  %v758 = vor.u32 4788187, %v757
  %v759 = vand.u32 2147483647, %v758
  %v761 = vcvt.s32.f32 %v754
  %v762 = vmul.f32 %v761, %v759
  %v763 = vxor.u32 %v762, 2147483648
  %v764 = vsel %vm681, %v763, %v762
  %v765 = vsub.s32 4, %v741
  %v766 = vsel %vm681, %v765, %v741
  %v767 = vsel %vm680, %v259, %v764
  %v768 = vsel %vm680, 0, %v766
  %v769 = vcosq.f32.pop %v767
  %v770 = vsinq.f32.pop %v767
  %vm771 = vweird.f32 %v259
  %v772 = vadd.s32 %v768, 3
  %v773 = vand.u32 %v772, 3
  %vm774 = vcmp.lt.s32.totalorder %v773, 2
  %vm775 = vcmp.eq.s32.totalorder %v773, 0
  %v776 = vxor.u32 %v770, 2147483648
  %v777 = vsel %vm775, %v769, %v776
  %vm778 = vcmp.eq.s32.totalorder %v773, 2
  %v779 = vxor.u32 %v769, 2147483648
  %v780 = vsel %vm778, %v779, %v770
  %v781 = vsel %vm774, %v777, %v780
  %v782 = vsel %vm771, nan, %v781
  %v783 = vand.u32 2147483647, %v260
  %vm784 = vcmp.le.f32.partialorder %v783, 0.7853982
  %vm785 = vcmp.lt.s32.totalorder %v260, 0
  %v786 = vand.u32 %v260, 2139095040
  %v787 = vshrl.u32 %v786, 23
  %v788 = vsub.s32 %v787, 127
  %v789 = vand.u32 2147483647, %v260
  %v790 = vand.u32 %v789, 8388607
  %v791 = vor.u32 %v790, 8388608
  %v792 = vsub.s32 0, %v791
  %v793 = vadd.s32 %v788, 1
  %vm794 = vcmp.gt.s32.totalorder %v793, 0
  %v795 = vsel %vm794, %v793, 0
  %v796 = vshrl.u32 %v795, 5
  %v797 = vand.u32 %v795, 31
  %v798 = vsub.s32 32, %v797
  %v799 = vshrl.u32 683565275, %v798
  %v800 = vshll.u32 683565275, %v797
  %v801 = vshrl.u32 2475754826, %v798
  %v802 = vor.u32 %v800, %v801
  %v803 = vshll.u32 2475754826, %v797
  %v804 = vshrl.u32 2131351028, %v798
  %v805 = vor.u32 %v803, %v804
  %v806 = vshll.u32 2131351028, %v797
  %v807 = vshrl.u32 2102212464, %v798
  %v808 = vor.u32 %v806, %v807
  %v809 = vshll.u32 2102212464, %v797
  %v810 = vshrl.u32 920167782, %v798
  %v811 = vor.u32 %v809, %v810
  %v812 = vshll.u32 920167782, %v797
  %v813 = vshrl.u32 1326507024, %v798
  %v814 = vor.u32 %v812, %v813
  %vm815 = vcmp.lt.s32.totalorder %v796, 1
  %vm816 = vcmp.lt.s32.totalorder %v796, 2
  %vm817 = vcmp.lt.s32.totalorder %v796, 3
  %vm818 = vcmp.lt.s32.totalorder %v796, 4
  %v819 = vsel %vm815, %v799, %v802
  %v820 = vsel %vm818, %v808, 2102212464
  %v821 = vsel %vm817, %v805, %v820
  %v822 = vsel %vm816, %v819, %v821
  %v823 = vsel %vm815, %v802, %v805
  %v824 = vsel %vm818, %v811, 920167782
  %v825 = vsel %vm817, %v808, %v824
  %v826 = vsel %vm816, %v823, %v825
  %v827 = vsel %vm815, %v805, %v808
  %v828 = vsel %vm818, %v814, 1326507024
  %v829 = vsel %vm817, %v811, %v828
  %v830 = vsel %vm816, %v827, %v829
  %v831 = vshll.u32 %v791, 8
  %v832 = vmul.u32.u64.compose %v831, %v830
  %v833 = vextract.low.u32 %v832
  %v834 = vextract.high.u32 %v832
  %v835 = vmul.u32.u64.compose %v831, %v826
  %v836 = vextract.low.u32 %v835
  %v837 = vextract.high.u32 %v835
  %v838 = vmul.u32 %v831, %v822
  %v839 = vadd.s32 %v834, %v836
  %vm840 = vc.u32 %v834, %v836
  %v841 = vadd.s32 %v837, 1
  %v842 = vsel %vm840, %v841, %v837
  %v843 = vadd.s32 %v838, %v842
  %v844 = vadd.s32 %v843, 536870912
  %v845 = vshrl.u32 %v844, 30
  %v846 = vshll.u32 %v845, 30
  %v847 = vsub.s32 %v843, %v846
  %vm848 = vcmp.lt.s32.totalorder %v847, 0
  %v849 = vsub.s32 0, %v847
  %v850 = vsel %vm848, %v849, %v847
  %v851 = vclz %v850
  %v852 = vsub.s32 %v851, 2
  %vm853 = vcmp.gt.s32.totalorder 0, %v852
  %v854 = vsel %vm853, 0, %v852
  %v855 = vsub.s32 32, %v854
  %v856 = vshll.u32 %v847, %v854
  %v857 = vshrl.u32 %v839, %v855
  %v858 = vor.u32 %v856, %v857
  %v859 = vsub.s32 4294967266, %v854
  %v860 = vadd.s32 %v859, 127
  %v861 = vshll.u32 %v860, 23
  %v862 = vor.u32 4788187, %v861
  %v863 = vand.u32 2147483647, %v862
  %v865 = vcvt.s32.f32 %v858
  %v866 = vmul.f32 %v865, %v863
  %v867 = vxor.u32 %v866, 2147483648
  %v868 = vsel %vm785, %v867, %v866
  %v869 = vsub.s32 4, %v845
  %v870 = vsel %vm785, %v869, %v845
  %v871 = vsel %vm784, %v260, %v868
  %v872 = vsel %vm784, 0, %v870
  %v873 = vcosq.f32.pop %v871
  %v874 = vsinq.f32.pop %v871
  %vm875 = vweird.f32 %v260
  %v876 = vadd.s32 %v872, 3
  %v877 = vand.u32 %v876, 3
  %vm878 = vcmp.lt.s32.totalorder %v877, 2
  %vm879 = vcmp.eq.s32.totalorder %v877, 0
  %v880 = vxor.u32 %v874, 2147483648
  %v881 = vsel %vm879, %v873, %v880
  %vm882 = vcmp.eq.s32.totalorder %v877, 2
  %v883 = vxor.u32 %v873, 2147483648
  %v884 = vsel %vm882, %v883, %v874
  %v885 = vsel %vm878, %v881, %v884
  %v886 = vsel %vm875, nan, %v885
  %v887 = vand.u32 2147483647, %v261
  %vm888 = vcmp.le.f32.partialorder %v887, 0.7853982
  %vm889 = vcmp.lt.s32.totalorder %v261, 0
  %v890 = vand.u32 %v261, 2139095040
  %v891 = vshrl.u32 %v890, 23
  %v892 = vsub.s32 %v891, 127
  %v893 = vand.u32 2147483647, %v261
  %v894 = vand.u32 %v893, 8388607
  %v895 = vor.u32 %v894, 8388608
  %v896 = vsub.s32 0, %v895
  %v897 = vadd.s32 %v892, 1
  %vm898 = vcmp.gt.s32.totalorder %v897, 0
  %v899 = vsel %vm898, %v897, 0
  %v900 = vshrl.u32 %v899, 5
  %v901 = vand.u32 %v899, 31
  %v902 = vsub.s32 32, %v901
  %v903 = vshrl.u32 683565275, %v902
  %v904 = vshll.u32 683565275, %v901
  %v905 = vshrl.u32 2475754826, %v902
  %v906 = vor.u32 %v904, %v905
  %v907 = vshll.u32 2475754826, %v901
  %v908 = vshrl.u32 2131351028, %v902
  %v909 = vor.u32 %v907, %v908
  %v910 = vshll.u32 2131351028, %v901
  %v911 = vshrl.u32 2102212464, %v902
  %v912 = vor.u32 %v910, %v911
  %v913 = vshll.u32 2102212464, %v901
  %v914 = vshrl.u32 920167782, %v902
  %v915 = vor.u32 %v913, %v914
  %v916 = vshll.u32 920167782, %v901
  %v917 = vshrl.u32 1326507024, %v902
  %v918 = vor.u32 %v916, %v917
  %vm919 = vcmp.lt.s32.totalorder %v900, 1
  %vm920 = vcmp.lt.s32.totalorder %v900, 2
  %vm921 = vcmp.lt.s32.totalorder %v900, 3
  %vm922 = vcmp.lt.s32.totalorder %v900, 4
  %v923 = vsel %vm919, %v903, %v906
  %v924 = vsel %vm922, %v912, 2102212464
  %v925 = vsel %vm921, %v909, %v924
  %v926 = vsel %vm920, %v923, %v925
  %v927 = vsel %vm919, %v906, %v909
  %v928 = vsel %vm922, %v915, 920167782
  %v929 = vsel %vm921, %v912, %v928
  %v930 = vsel %vm920, %v927, %v929
  %v931 = vsel %vm919, %v909, %v912
  %v932 = vsel %vm922, %v918, 1326507024
  %v933 = vsel %vm921, %v915, %v932
  %v934 = vsel %vm920, %v931, %v933
  %v935 = vshll.u32 %v895, 8
  %v936 = vmul.u32.u64.compose %v935, %v934
  %v937 = vextract.low.u32 %v936
  %v938 = vextract.high.u32 %v936
  %v939 = vmul.u32.u64.compose %v935, %v930
  %v940 = vextract.low.u32 %v939
  %v941 = vextract.high.u32 %v939
  %v942 = vmul.u32 %v935, %v926
  %v943 = vadd.s32 %v938, %v940
  %vm944 = vc.u32 %v938, %v940
  %v945 = vadd.s32 %v941, 1
  %v946 = vsel %vm944, %v945, %v941
  %v947 = vadd.s32 %v942, %v946
  %v948 = vadd.s32 %v947, 536870912
  %v949 = vshrl.u32 %v948, 30
  %v950 = vshll.u32 %v949, 30
  %v951 = vsub.s32 %v947, %v950
  %vm952 = vcmp.lt.s32.totalorder %v951, 0
  %v953 = vsub.s32 0, %v951
  %v954 = vsel %vm952, %v953, %v951
  %v955 = vclz %v954
  %v956 = vsub.s32 %v955, 2
  %vm957 = vcmp.gt.s32.totalorder 0, %v956
  %v958 = vsel %vm957, 0, %v956
  %v959 = vsub.s32 32, %v958
  %v960 = vshll.u32 %v951, %v958
  %v961 = vshrl.u32 %v943, %v959
  %v962 = vor.u32 %v960, %v961
  %v963 = vsub.s32 4294967266, %v958
  %v964 = vadd.s32 %v963, 127
  %v965 = vshll.u32 %v964, 23
  %v966 = vor.u32 4788187, %v965
  %v967 = vand.u32 2147483647, %v966
  %v969 = vcvt.s32.f32 %v962
  %v970 = vmul.f32 %v969, %v967
  %v971 = vxor.u32 %v970, 2147483648
  %v972 = vsel %vm889, %v971, %v970
  %v973 = vsub.s32 4, %v949
  %v974 = vsel %vm889, %v973, %v949
  %v975 = vsel %vm888, %v261, %v972
  %v976 = vsel %vm888, 0, %v974
  %v977 = vcosq.f32.pop %v975
  %v978 = vsinq.f32.pop %v975
  %vm979 = vweird.f32 %v261
  %v980 = vadd.s32 %v976, 3
  %v981 = vand.u32 %v980, 3
  %vm982 = vcmp.lt.s32.totalorder %v981, 2
  %vm983 = vcmp.eq.s32.totalorder %v981, 0
  %v984 = vxor.u32 %v978, 2147483648
  %v985 = vsel %vm983, %v977, %v984
  %vm986 = vcmp.eq.s32.totalorder %v981, 2
  %v987 = vxor.u32 %v977, 2147483648
  %v988 = vsel %vm986, %v987, %v978
  %v989 = vsel %vm982, %v985, %v988
  %v990 = vsel %vm979, nan, %v989
  %v991 = vand.u32 2147483647, %v262
  %vm992 = vcmp.le.f32.partialorder %v991, 0.7853982
  %vm993 = vcmp.lt.s32.totalorder %v262, 0
  %v994 = vand.u32 %v262, 2139095040
  %v995 = vshrl.u32 %v994, 23
  %v996 = vsub.s32 %v995, 127
  %v997 = vand.u32 2147483647, %v262
  %v998 = vand.u32 %v997, 8388607
  %v999 = vor.u32 %v998, 8388608
  %v1000 = vsub.s32 0, %v999
  %v1001 = vadd.s32 %v996, 1
  %vm1002 = vcmp.gt.s32.totalorder %v1001, 0
  %v1003 = vsel %vm1002, %v1001, 0
  %v1004 = vshrl.u32 %v1003, 5
  %v1005 = vand.u32 %v1003, 31
  %v1006 = vsub.s32 32, %v1005
  %v1007 = vshrl.u32 683565275, %v1006
  %v1008 = vshll.u32 683565275, %v1005
  %v1009 = vshrl.u32 2475754826, %v1006
  %v1010 = vor.u32 %v1008, %v1009
  %v1011 = vshll.u32 2475754826, %v1005
  %v1012 = vshrl.u32 2131351028, %v1006
  %v1013 = vor.u32 %v1011, %v1012
  %v1014 = vshll.u32 2131351028, %v1005
  %v1015 = vshrl.u32 2102212464, %v1006
  %v1016 = vor.u32 %v1014, %v1015
  %v1017 = vshll.u32 2102212464, %v1005
  %v1018 = vshrl.u32 920167782, %v1006
  %v1019 = vor.u32 %v1017, %v1018
  %v1020 = vshll.u32 920167782, %v1005
  %v1021 = vshrl.u32 1326507024, %v1006
  %v1022 = vor.u32 %v1020, %v1021
  %vm1023 = vcmp.lt.s32.totalorder %v1004, 1
  %vm1024 = vcmp.lt.s32.totalorder %v1004, 2
  %vm1025 = vcmp.lt.s32.totalorder %v1004, 3
  %vm1026 = vcmp.lt.s32.totalorder %v1004, 4
  %v1027 = vsel %vm1023, %v1007, %v1010
  %v1028 = vsel %vm1026, %v1016, 2102212464
  %v1029 = vsel %vm1025, %v1013, %v1028
  %v1030 = vsel %vm1024, %v1027, %v1029
  %v1031 = vsel %vm1023, %v1010, %v1013
  %v1032 = vsel %vm1026, %v1019, 920167782
  %v1033 = vsel %vm1025, %v1016, %v1032
  %v1034 = vsel %vm1024, %v1031, %v1033
  %v1035 = vsel %vm1023, %v1013, %v1016
  %v1036 = vsel %vm1026, %v1022, 1326507024
  %v1037 = vsel %vm1025, %v1019, %v1036
  %v1038 = vsel %vm1024, %v1035, %v1037
  %v1039 = vshll.u32 %v999, 8
  %v1040 = vmul.u32.u64.compose %v1039, %v1038
  %v1041 = vextract.low.u32 %v1040
  %v1042 = vextract.high.u32 %v1040
  %v1043 = vmul.u32.u64.compose %v1039, %v1034
  %v1044 = vextract.low.u32 %v1043
  %v1045 = vextract.high.u32 %v1043
  %v1046 = vmul.u32 %v1039, %v1030
  %v1047 = vadd.s32 %v1042, %v1044
  %vm1048 = vc.u32 %v1042, %v1044
  %v1049 = vadd.s32 %v1045, 1
  %v1050 = vsel %vm1048, %v1049, %v1045
  %v1051 = vadd.s32 %v1046, %v1050
  %v1052 = vadd.s32 %v1051, 536870912
  %v1053 = vshrl.u32 %v1052, 30
  %v1054 = vshll.u32 %v1053, 30
  %v1055 = vsub.s32 %v1051, %v1054
  %vm1056 = vcmp.lt.s32.totalorder %v1055, 0
  %v1057 = vsub.s32 0, %v1055
  %v1058 = vsel %vm1056, %v1057, %v1055
  %v1059 = vclz %v1058
  %v1060 = vsub.s32 %v1059, 2
  %vm1061 = vcmp.gt.s32.totalorder 0, %v1060
  %v1062 = vsel %vm1061, 0, %v1060
  %v1063 = vsub.s32 32, %v1062
  %v1064 = vshll.u32 %v1055, %v1062
  %v1065 = vshrl.u32 %v1047, %v1063
  %v1066 = vor.u32 %v1064, %v1065
  %v1067 = vsub.s32 4294967266, %v1062
  %v1068 = vadd.s32 %v1067, 127
  %v1069 = vshll.u32 %v1068, 23
  %v1070 = vor.u32 4788187, %v1069
  %v1071 = vand.u32 2147483647, %v1070
  %v1073 = vcvt.s32.f32 %v1066
  %v1074 = vmul.f32 %v1073, %v1071
  %v1075 = vxor.u32 %v1074, 2147483648
  %v1076 = vsel %vm993, %v1075, %v1074
  %v1077 = vsub.s32 4, %v1053
  %v1078 = vsel %vm993, %v1077, %v1053
  %v1079 = vsel %vm992, %v262, %v1076
  %v1080 = vsel %vm992, 0, %v1078
  %v1081 = vcosq.f32.pop %v1079
  %v1082 = vsinq.f32.pop %v1079
  %vm1083 = vweird.f32 %v262
  %v1084 = vadd.s32 %v1080, 3
  %v1085 = vand.u32 %v1084, 3
  %vm1086 = vcmp.lt.s32.totalorder %v1085, 2
  %vm1087 = vcmp.eq.s32.totalorder %v1085, 0
  %v1088 = vxor.u32 %v1082, 2147483648
  %v1089 = vsel %vm1087, %v1081, %v1088
  %vm1090 = vcmp.eq.s32.totalorder %v1085, 2
  %v1091 = vxor.u32 %v1081, 2147483648
  %v1092 = vsel %vm1090, %v1091, %v1082
  %v1093 = vsel %vm1086, %v1089, %v1092
  %v1094 = vsel %vm1083, nan, %v1093
  %v1095 = vadd.f32 %v191, %v366
  %v1096 = vadd.f32 %v192, %v470
  %v1097 = vadd.f32 %v193, %v574
  %v1098 = vadd.f32 %v194, %v678
  %v1099 = vadd.f32 %v195, %v782
  %v1100 = vadd.f32 %v196, %v886
  %v1101 = vadd.f32 %v197, %v990
  %v1102 = vadd.f32 %v198, %v1094
  %1103 = vmatprep.subr.mxu0 0.0
  %1104 = vmatpush1.msra.mxu0 %v17
  %1105 = vmatprep.subr.mxu0 0.0
  %1106 = vmatpush1.msra.mxu0 %v18
  %1107 = vmatprep.subr.mxu0 0.0
  %1108 = vmatpush1.msra.mxu0 %v19
  %1109 = vmatprep.subr.mxu0 0.0
  %1110 = vmatpush1.msra.mxu0 %v20
  %1111 = vmatprep.subr.mxu0 0.0
  %1112 = vmatpush1.msra.mxu0 %v21
  %1113 = vmatprep.subr.mxu0 0.0
  %1114 = vmatpush1.msra.mxu0 %v22
  %1115 = vmatprep.subr.mxu0 0.0
  %1116 = vmatpush1.msra.mxu0 %v23
  %1117 = vmatprep.subr.mxu0 0.0
  %1118 = vmatpush1.msra.mxu0 %v24
  %1119 = vmatprep.subr.mxu0 0.0
  %1120 = vmatpush1.msra.mxu0 %v25
  %1121 = vmatprep.subr.mxu0 0.0
  %1122 = vmatpush1.msra.mxu0 %v26
  %1123 = vmatprep.subr.mxu0 0.0
  %1124 = vmatpush1.msra.mxu0 %v27
  %1125 = vmatprep.subr.mxu0 0.0
  %1126 = vmatpush1.msra.mxu0 %v28
  %1127 = vmatprep.subr.mxu0 0.0
  %1128 = vmatpush1.msra.mxu0 %v29
  %1129 = vmatprep.subr.mxu0 0.0
  %1130 = vmatpush1.msra.mxu0 %v30
  %1131 = vmatprep.subr.mxu0 0.0
  %1132 = vmatpush1.msra.mxu0 %v31
  %1133 = vmatprep.subr.mxu0 0.0
  %1134 = vmatpush1.msra.mxu0 %v32
  %1135 = vmatprep.subr.mxu0 0.0
  %1136 = vmatpush1.msra.mxu0 0.0
  %1137 = vmatprep.subr.mxu0 0.0
  %1138 = vmatpush1.msra.mxu0 0.0
  %1139 = vmatprep.subr.mxu0 0.0
  %1140 = vmatpush1.msra.mxu0 0.0
  %1141 = vmatprep.subr.mxu0 0.0
  %1142 = vmatpush1.msra.mxu0 0.0
  %1143 = vmatprep.subr.mxu0 0.0
  %1144 = vmatpush1.msra.mxu0 0.0
  %1145 = vmatprep.subr.mxu0 0.0
  %1146 = vmatpush1.msra.mxu0 0.0
  %1147 = vmatprep.subr.mxu0 0.0
  %1148 = vmatpush1.msra.mxu0 0.0
  %1149 = vmatprep.subr.mxu0 0.0
  %1150 = vmatpush1.msra.mxu0 0.0
  %1151 = vmatprep.subr.mxu0 0.0
  %1152 = vmatpush1.msra.mxu0 0.0
  %1153 = vmatprep.subr.mxu0 0.0
  %1154 = vmatpush1.msra.mxu0 0.0
  %1155 = vmatprep.subr.mxu0 0.0
  %1156 = vmatpush1.msra.mxu0 0.0
  %1157 = vmatprep.subr.mxu0 0.0
  %1158 = vmatpush1.msra.mxu0 0.0
  %1159 = vmatprep.subr.mxu0 0.0
  %1160 = vmatpush1.msra.mxu0 0.0
  %1161 = vmatprep.subr.mxu0 0.0
  %1162 = vmatpush1.msra.mxu0 0.0
  %1163 = vmatprep.subr.mxu0 0.0
  %1164 = vmatpush1.msra.mxu0 0.0
  %1165 = vmatprep.subr.mxu0 0.0
  %1166 = vmatpush1.msra.mxu0 0.0
  %1167 = vmatprep.mubr.f32.mxu0 0.0
  %1168 = vmatmul.mubr.f32.gmra.mrb[0].mxu0 %v1095
  %v1169 = vpop.f32.mrb[0].mxu0
  %v1170 = vadd.f32 0.0, %v1169
  %v1171 = vpop.f32.mrb[0].mxu0
  %1172 = vmatprep.mubr.f32.mxu0 0.0
  %1173 = vmatmul.mubr.f32.gmra.mrb[0].mxu0 %v1096
  %v1174 = vpop.f32.mrb[0].mxu0
  %v1175 = vadd.f32 0.0, %v1174
  %v1176 = vpop.f32.mrb[0].mxu0
  %1177 = vmatprep.mubr.f32.mxu0 0.0
  %1178 = vmatmul.mubr.f32.gmra.mrb[0].mxu0 %v1097
  %v1179 = vpop.f32.mrb[0].mxu0
  %v1180 = vadd.f32 0.0, %v1179
  %v1181 = vpop.f32.mrb[0].mxu0
  %1182 = vmatprep.mubr.f32.mxu0 0.0
  %1183 = vmatmul.mubr.f32.gmra.mrb[0].mxu0 %v1098
  %v1184 = vpop.f32.mrb[0].mxu0
  %v1185 = vadd.f32 0.0, %v1184
  %v1186 = vpop.f32.mrb[0].mxu0
  %1187 = vmatprep.mubr.f32.mxu0 0.0
  %1188 = vmatmul.mubr.f32.gmra.mrb[0].mxu0 %v1099
  %v1189 = vpop.f32.mrb[0].mxu0
  %v1190 = vadd.f32 0.0, %v1189
  %v1191 = vpop.f32.mrb[0].mxu0
  %1192 = vmatprep.mubr.f32.mxu0 0.0
  %1193 = vmatmul.mubr.f32.gmra.mrb[0].mxu0 %v1100
  %v1194 = vpop.f32.mrb[0].mxu0
  %v1195 = vadd.f32 0.0, %v1194
  %v1196 = vpop.f32.mrb[0].mxu0
  %1197 = vmatprep.mubr.f32.mxu0 0.0
  %1198 = vmatmul.mubr.f32.gmra.mrb[0].mxu0 %v1101
  %v1199 = vpop.f32.mrb[0].mxu0
  %v1200 = vadd.f32 0.0, %v1199
  %v1201 = vpop.f32.mrb[0].mxu0
  %1202 = vmatprep.mubr.f32.mxu0 0.0
  %1203 = vmatmul.mubr.f32.gmra.mrb[0].mxu0 %v1102
  %v1204 = vpop.f32.mrb[0].mxu0
  %v1205 = vadd.f32 0.0, %v1204
  %v1206 = vpop.f32.mrb[0].mxu0
  %1207 = vdwg.mxu0
  %1209 = vset.pattern.permute.xlu0 0
  %1210 = vperm.xlu0 %1209, %v63
  %v1211 = vpop.permute.xlu0 %1210
  %1214 = vset.pattern.permute.xlu0 0
  %1215 = vperm.xlu0 %1214, %v64
  %v1216 = vpop.permute.xlu0 %1215
  %1219 = vset.pattern.permute.xlu0 0
  %1220 = vperm.xlu0 %1219, %v65
  %v1221 = vpop.permute.xlu0 %1220
  %1224 = vset.pattern.permute.xlu0 0
  %1225 = vperm.xlu0 %1224, %v66
  %v1226 = vpop.permute.xlu0 %1225
  %1229 = vset.pattern.permute.xlu0 0
  %1230 = vperm.xlu0 %1229, %v67
  %v1231 = vpop.permute.xlu0 %1230
  %1234 = vset.pattern.permute.xlu0 0
  %1235 = vperm.xlu0 %1234, %v68
  %v1236 = vpop.permute.xlu0 %1235
  %1239 = vset.pattern.permute.xlu0 0
  %1240 = vperm.xlu0 %1239, %v69
  %v1241 = vpop.permute.xlu0 %1240
  %1244 = vset.pattern.permute.xlu0 0
  %1245 = vperm.xlu0 %1244, %v70
  %v1246 = vpop.permute.xlu0 %1245
  %v1248 = vmul.f32 %v1170, %v1211
  %v1249 = vmul.f32 %v1175, %v1216
  %v1250 = vmul.f32 %v1180, %v1221
  %v1251 = vmul.f32 %v1185, %v1226
  %v1252 = vmul.f32 %v1190, %v1231
  %v1253 = vmul.f32 %v1195, %v1236
  %v1254 = vmul.f32 %v1200, %v1241
  %v1255 = vmul.f32 %v1205, %v1246
  %vm1256 = vcmask 261120
  %v1257 = vsel %vm1256, %v1248, 0.0
  %1258 = vadd.xlane.f32.xlu0 %v1257
  %v1259 = vpop.xlane.xlu0 %1258
  %v1260 = vsel %vm1256, %v1249, 0.0
  %1261 = vadd.xlane.f32.xlu0 %v1260
  %v1262 = vpop.xlane.xlu0 %1261
  %v1263 = vsel %vm1256, %v1250, 0.0
  %1264 = vadd.xlane.f32.xlu0 %v1263
  %v1265 = vpop.xlane.xlu0 %1264
  %v1266 = vsel %vm1256, %v1251, 0.0
  %1267 = vadd.xlane.f32.xlu0 %v1266
  %v1268 = vpop.xlane.xlu0 %1267
  %v1269 = vsel %vm1256, %v1252, 0.0
  %1270 = vadd.xlane.f32.xlu0 %v1269
  %v1271 = vpop.xlane.xlu0 %1270
  %v1272 = vsel %vm1256, %v1253, 0.0
  %1273 = vadd.xlane.f32.xlu0 %v1272
  %v1274 = vpop.xlane.xlu0 %1273
  %v1275 = vsel %vm1256, %v1254, 0.0
  %1276 = vadd.xlane.f32.xlu0 %v1275
  %v1277 = vpop.xlane.xlu0 %1276
  %v1278 = vsel %vm1256, %v1255, 0.0
  %1279 = vadd.xlane.f32.xlu0 %v1278
  %v1280 = vpop.xlane.xlu0 %1279
  %v1281 = vrcp.pop 32.0
  %v1282 = vmul.f32 %v1259, %v1281
  %v1283 = vmul.f32 %v1262, %v1281
  %v1284 = vmul.f32 %v1265, %v1281
  %v1285 = vmul.f32 %v1268, %v1281
  %v1286 = vmul.f32 %v1271, %v1281
  %v1287 = vmul.f32 %v1274, %v1281
  %v1288 = vmul.f32 %v1277, %v1281
  %v1289 = vmul.f32 %v1280, %v1281
  %v1290 = vsub.f32 %v1248, %v1282
  %v1291 = vsub.f32 %v1249, %v1283
  %v1292 = vsub.f32 %v1250, %v1284
  %v1293 = vsub.f32 %v1251, %v1285
  %v1294 = vsub.f32 %v1252, %v1286
  %v1295 = vsub.f32 %v1253, %v1287
  %v1296 = vsub.f32 %v1254, %v1288
  %v1297 = vsub.f32 %v1255, %v1289
  %v1298 = vmul.f32 %v1290, %v1290
  %v1299 = vmul.f32 %v1291, %v1291
  %v1300 = vmul.f32 %v1292, %v1292
  %v1301 = vmul.f32 %v1293, %v1293
  %v1302 = vmul.f32 %v1294, %v1294
  %v1303 = vmul.f32 %v1295, %v1295
  %v1304 = vmul.f32 %v1296, %v1296
  %v1305 = vmul.f32 %v1297, %v1297
  %v1306 = vsel %vm1256, %v1298, 0.0
  %1307 = vadd.xlane.f32.xlu0 %v1306
  %v1308 = vpop.xlane.xlu0 %1307
  %v1309 = vsel %vm1256, %v1299, 0.0
  %1310 = vadd.xlane.f32.xlu0 %v1309
  %v1311 = vpop.xlane.xlu0 %1310
  %v1312 = vsel %vm1256, %v1300, 0.0
  %1313 = vadd.xlane.f32.xlu0 %v1312
  %v1314 = vpop.xlane.xlu0 %1313
  %v1315 = vsel %vm1256, %v1301, 0.0
  %1316 = vadd.xlane.f32.xlu0 %v1315
  %v1317 = vpop.xlane.xlu0 %1316
  %v1318 = vsel %vm1256, %v1302, 0.0
  %1319 = vadd.xlane.f32.xlu0 %v1318
  %v1320 = vpop.xlane.xlu0 %1319
  %v1321 = vsel %vm1256, %v1303, 0.0
  %1322 = vadd.xlane.f32.xlu0 %v1321
  %v1323 = vpop.xlane.xlu0 %1322
  %v1324 = vsel %vm1256, %v1304, 0.0
  %1325 = vadd.xlane.f32.xlu0 %v1324
  %v1326 = vpop.xlane.xlu0 %1325
  %v1327 = vsel %vm1256, %v1305, 0.0
  %1328 = vadd.xlane.f32.xlu0 %v1327
  %v1329 = vpop.xlane.xlu0 %1328
  %v1330 = vmul.f32 %v1308, %v1281
  %v1331 = vmul.f32 %v1311, %v1281
  %v1332 = vmul.f32 %v1314, %v1281
  %v1333 = vmul.f32 %v1317, %v1281
  %v1334 = vmul.f32 %v1320, %v1281
  %v1335 = vmul.f32 %v1323, %v1281
  %v1336 = vmul.f32 %v1326, %v1281
  %v1337 = vmul.f32 %v1329, %v1281
  %v1338 = vadd.f32 %v1330, 1e-05
  %v1339 = vadd.f32 %v1331, 1e-05
  %v1340 = vadd.f32 %v1332, 1e-05
  %v1341 = vadd.f32 %v1333, 1e-05
  %v1342 = vadd.f32 %v1334, 1e-05
  %v1343 = vadd.f32 %v1335, 1e-05
  %v1344 = vadd.f32 %v1336, 1e-05
  %v1345 = vadd.f32 %v1337, 1e-05
  %v1346 = vrsqrt.pop %v1338
  %v1347 = vrsqrt.pop %v1339
  %v1348 = vrsqrt.pop %v1340
  %v1349 = vrsqrt.pop %v1341
  %v1350 = vrsqrt.pop %v1342
  %v1351 = vrsqrt.pop %v1343
  %v1352 = vrsqrt.pop %v1344
  %v1353 = vrsqrt.pop %v1345
  %v1354 = vmul.f32 %v1290, %v1346
  %v1355 = vmul.f32 %v1291, %v1347
  %v1356 = vmul.f32 %v1292, %v1348
  %v1357 = vmul.f32 %v1293, %v1349
  %v1358 = vmul.f32 %v1294, %v1350
  %v1359 = vmul.f32 %v1295, %v1351
  %v1360 = vmul.f32 %v1296, %v1352
  %v1361 = vmul.f32 %v1297, %v1353
  %v1362 = vlaneseq
  %v1363 = vshrl.u32 %v1362, 7
  %v1364 = vsub.s32 0, %v1363
  %v1365 = vrot.slane %v35, %v1364
  %v1366 = vmul.f32 %v1354, %v1365
  %v1367 = vmul.f32 %v1355, %v1365
  %v1368 = vmul.f32 %v1356, %v1365
  %v1369 = vmul.f32 %v1357, %v1365
  %v1370 = vmul.f32 %v1358, %v1365
  %v1371 = vmul.f32 %v1359, %v1365
  %v1372 = vmul.f32 %v1360, %v1365
  %v1373 = vmul.f32 %v1361, %v1365
  %v1374 = vlaneseq
  %v1375 = vshrl.u32 %v1374, 7
  %v1376 = vsub.s32 0, %v1375
  %v1377 = vrot.slane %v36, %v1376
  %v1378 = vadd.f32 %v1366, %v1377
  %v1379 = vadd.f32 %v1367, %v1377
  %v1380 = vadd.f32 %v1368, %v1377
  %v1381 = vadd.f32 %v1369, %v1377
  %v1382 = vadd.f32 %v1370, %v1377
  %v1383 = vadd.f32 %v1371, %v1377
  %v1384 = vadd.f32 %v1372, %v1377
  %v1385 = vadd.f32 %v1373, %v1377
  %1386 = vst.msk [vmem:[%s4] sm:$0xff] %vm1256, %v1378
  %1387 = vst.msk [vmem:[%s4 + $0x8] sm:$0xff] %vm1256, %v1379
  %1388 = vst.msk [vmem:[%s4 + $0x10] sm:$0xff] %vm1256, %v1380
  %1389 = vst.msk [vmem:[%s4 + $0x18] sm:$0xff] %vm1256, %v1381
  %1390 = vst.msk [vmem:[%s4 + $0x20] sm:$0xff] %vm1256, %v1382
  %1391 = vst.msk [vmem:[%s4 + $0x28] sm:$0xff] %vm1256, %v1383
  %1392 = vst.msk [vmem:[%s4 + $0x30] sm:$0xff] %vm1256, %v1384
  %1393 = vst.msk [vmem:[%s4 + $0x38] sm:$0xff] %vm1256, %v1385
  %v1394 = vld [vmem:[%s0] sm:$0xff]
  %v1395 = vld [vmem:[%s0 + $0x8] sm:$0xff]
  %v1396 = vld [vmem:[%s0 + $0x10] sm:$0xff]
  %v1397 = vld [vmem:[%s0 + $0x18] sm:$0xff]
  %v1398 = vld [vmem:[%s0 + $0x20] sm:$0xff]
  %v1399 = vld [vmem:[%s0 + $0x28] sm:$0xff]
  %v1400 = vld [vmem:[%s0 + $0x30] sm:$0xff]
  %v1401 = vld [vmem:[%s0 + $0x38] sm:$0xff]
  %vm1402 = vcmp.gt.f32.partialorder %v1394, 0.0
  %vm1403 = vcmp.gt.f32.partialorder %v1395, 0.0
  %vm1404 = vcmp.gt.f32.partialorder %v1396, 0.0
  %vm1405 = vcmp.gt.f32.partialorder %v1397, 0.0
  %vm1406 = vcmp.gt.f32.partialorder %v1398, 0.0
  %vm1407 = vcmp.gt.f32.partialorder %v1399, 0.0
  %vm1408 = vcmp.gt.f32.partialorder %v1400, 0.0
  %vm1409 = vcmp.gt.f32.partialorder %v1401, 0.0
  %v1410 = vsel %vm1402, 1, 0
  %v1411 = vsel %vm1403, 1, 0
  %v1412 = vsel %vm1404, 1, 0
  %v1413 = vsel %vm1405, 1, 0
  %v1414 = vsel %vm1406, 1, 0
  %v1415 = vsel %vm1407, 1, 0
  %v1416 = vsel %vm1408, 1, 0
  %v1417 = vsel %vm1409, 1, 0
  %v1418 = vcvt.s32.f32 %v1410
  %v1419 = vcvt.s32.f32 %v1411
  %v1420 = vcvt.s32.f32 %v1412
  %v1421 = vcvt.s32.f32 %v1413
  %v1422 = vcvt.s32.f32 %v1414
  %v1423 = vcvt.s32.f32 %v1415
  %v1424 = vcvt.s32.f32 %v1416
  %v1425 = vcvt.s32.f32 %v1417
  %v1426 = vsel %vm1402, %v1394, 1.0
  %v1427 = vsel %vm1403, %v1395, 1.0
  %v1428 = vsel %vm1404, %v1396, 1.0
  %v1429 = vsel %vm1405, %v1397, 1.0
  %v1430 = vsel %vm1406, %v1398, 1.0
  %v1431 = vsel %vm1407, %v1399, 1.0
  %v1432 = vsel %vm1408, %v1400, 1.0
  %v1433 = vsel %vm1409, %v1401, 1.0
  %v1434 = vadd.f32 %v1426, 1.0
  %v1435 = vadd.f32 %v1427, 1.0
  %v1436 = vadd.f32 %v1428, 1.0
  %v1437 = vadd.f32 %v1429, 1.0
  %v1438 = vadd.f32 %v1430, 1.0
  %v1439 = vadd.f32 %v1431, 1.0
  %v1440 = vadd.f32 %v1432, 1.0
  %v1441 = vadd.f32 %v1433, 1.0
  %v1442 = vlog2.pop %v1434
  %v1443 = vmul.f32 %v1442, 0.6931472
  %v1444 = vlog2.pop %v1435
  %v1445 = vmul.f32 %v1444, 0.6931472
  %v1446 = vlog2.pop %v1436
  %v1447 = vmul.f32 %v1446, 0.6931472
  %v1448 = vlog2.pop %v1437
  %v1449 = vmul.f32 %v1448, 0.6931472
  %v1450 = vlog2.pop %v1438
  %v1451 = vmul.f32 %v1450, 0.6931472
  %v1452 = vlog2.pop %v1439
  %v1453 = vmul.f32 %v1452, 0.6931472
  %v1454 = vlog2.pop %v1440
  %v1455 = vmul.f32 %v1454, 0.6931472
  %v1456 = vlog2.pop %v1441
  %v1457 = vmul.f32 %v1456, 0.6931472
  %v1458 = vmul.f32 %v1443, 4.0
  %v1459 = vmul.f32 %v1445, 4.0
  %v1460 = vmul.f32 %v1447, 4.0
  %v1461 = vmul.f32 %v1449, 4.0
  %v1462 = vmul.f32 %v1451, 4.0
  %v1463 = vmul.f32 %v1453, 4.0
  %v1464 = vmul.f32 %v1455, 4.0
  %v1465 = vmul.f32 %v1457, 4.0
  %v1466 = vcvt.f32.s32.to.zero.pseudo %v1458
  %v1467 = vcvt.f32.s32.to.zero.pseudo %v1459
  %v1468 = vcvt.f32.s32.to.zero.pseudo %v1460
  %v1469 = vcvt.f32.s32.to.zero.pseudo %v1461
  %v1470 = vcvt.f32.s32.to.zero.pseudo %v1462
  %v1471 = vcvt.f32.s32.to.zero.pseudo %v1463
  %v1472 = vcvt.f32.s32.to.zero.pseudo %v1464
  %v1473 = vcvt.f32.s32.to.zero.pseudo %v1465
  %vm1474 = vcmp.gt.s32.totalorder %v1466, 0
  %v1475 = vsel %vm1474, %v1466, 0
  %vm1476 = vcmp.gt.s32.totalorder %v1467, 0
  %v1477 = vsel %vm1476, %v1467, 0
  %vm1478 = vcmp.gt.s32.totalorder %v1468, 0
  %v1479 = vsel %vm1478, %v1468, 0
  %vm1480 = vcmp.gt.s32.totalorder %v1469, 0
  %v1481 = vsel %vm1480, %v1469, 0
  %vm1482 = vcmp.gt.s32.totalorder %v1470, 0
  %v1483 = vsel %vm1482, %v1470, 0
  %vm1484 = vcmp.gt.s32.totalorder %v1471, 0
  %v1485 = vsel %vm1484, %v1471, 0
  %vm1486 = vcmp.gt.s32.totalorder %v1472, 0
  %v1487 = vsel %vm1486, %v1472, 0
  %vm1488 = vcmp.gt.s32.totalorder %v1473, 0
  %v1489 = vsel %vm1488, %v1473, 0
  %vm1490 = vcmp.lt.s32.totalorder %v1475, 63
  %v1491 = vsel %vm1490, %v1475, 63
  %vm1492 = vcmp.lt.s32.totalorder %v1477, 63
  %v1493 = vsel %vm1492, %v1477, 63
  %vm1494 = vcmp.lt.s32.totalorder %v1479, 63
  %v1495 = vsel %vm1494, %v1479, 63
  %vm1496 = vcmp.lt.s32.totalorder %v1481, 63
  %v1497 = vsel %vm1496, %v1481, 63
  %vm1498 = vcmp.lt.s32.totalorder %v1483, 63
  %v1499 = vsel %vm1498, %v1483, 63
  %vm1500 = vcmp.lt.s32.totalorder %v1485, 63
  %v1501 = vsel %vm1500, %v1485, 63
  %vm1502 = vcmp.lt.s32.totalorder %v1487, 63
  %v1503 = vsel %vm1502, %v1487, 63
  %vm1504 = vcmp.lt.s32.totalorder %v1489, 63
  %v1505 = vsel %vm1504, %v1489, 63
  %1506 = vset.pattern.permute.xlu0 1
  %1507 = vperm.xlu0 %1506, %v1491
  %v1508 = vpop.permute.xlu0 %1507
  %1509 = vset.pattern.permute.xlu0 1
  %1510 = vperm.xlu0 %1509, %v1493
  %v1511 = vpop.permute.xlu0 %1510
  %1512 = vset.pattern.permute.xlu0 1
  %1513 = vperm.xlu0 %1512, %v1495
  %v1514 = vpop.permute.xlu0 %1513
  %1515 = vset.pattern.permute.xlu0 1
  %1516 = vperm.xlu0 %1515, %v1497
  %v1517 = vpop.permute.xlu0 %1516
  %1518 = vset.pattern.permute.xlu0 1
  %1519 = vperm.xlu0 %1518, %v1499
  %v1520 = vpop.permute.xlu0 %1519
  %1521 = vset.pattern.permute.xlu0 1
  %1522 = vperm.xlu0 %1521, %v1501
  %v1523 = vpop.permute.xlu0 %1522
  %1524 = vset.pattern.permute.xlu0 1
  %1525 = vperm.xlu0 %1524, %v1503
  %v1526 = vpop.permute.xlu0 %1525
  %1527 = vset.pattern.permute.xlu0 1
  %1528 = vperm.xlu0 %1527, %v1505
  %v1529 = vpop.permute.xlu0 %1528
  %vm1530 = vcmp.eq.s32.totalorder %v38, %v1508
  %vm1531 = vcmp.eq.s32.totalorder %v38, %v1511
  %vm1532 = vcmp.eq.s32.totalorder %v38, %v1514
  %vm1533 = vcmp.eq.s32.totalorder %v38, %v1517
  %vm1534 = vcmp.eq.s32.totalorder %v38, %v1520
  %vm1535 = vcmp.eq.s32.totalorder %v38, %v1523
  %vm1536 = vcmp.eq.s32.totalorder %v38, %v1526
  %vm1537 = vcmp.eq.s32.totalorder %v38, %v1529
  %v1538 = vsel %vm1530, 1, 0
  %v1539 = vsel %vm1531, 1, 0
  %v1540 = vsel %vm1532, 1, 0
  %v1541 = vsel %vm1533, 1, 0
  %v1542 = vsel %vm1534, 1, 0
  %v1543 = vsel %vm1535, 1, 0
  %v1544 = vsel %vm1536, 1, 0
  %v1545 = vsel %vm1537, 1, 0
  %v1546 = vcvt.s32.f32 %v1538
  %v1547 = vcvt.s32.f32 %v1539
  %v1548 = vcvt.s32.f32 %v1540
  %v1549 = vcvt.s32.f32 %v1541
  %v1550 = vcvt.s32.f32 %v1542
  %v1551 = vcvt.s32.f32 %v1543
  %v1552 = vcvt.s32.f32 %v1544
  %v1553 = vcvt.s32.f32 %v1545
  %1555 = vset.pattern.permute.xlu0 1
  %1556 = vperm.xlu0 %1555, %v1426
  %v1557 = vpop.permute.xlu0 %1556
  %1560 = vset.pattern.permute.xlu0 1
  %1561 = vperm.xlu0 %1560, %v1427
  %v1562 = vpop.permute.xlu0 %1561
  %1565 = vset.pattern.permute.xlu0 1
  %1566 = vperm.xlu0 %1565, %v1428
  %v1567 = vpop.permute.xlu0 %1566
  %1570 = vset.pattern.permute.xlu0 1
  %1571 = vperm.xlu0 %1570, %v1429
  %v1572 = vpop.permute.xlu0 %1571
  %1575 = vset.pattern.permute.xlu0 1
  %1576 = vperm.xlu0 %1575, %v1430
  %v1577 = vpop.permute.xlu0 %1576
  %1580 = vset.pattern.permute.xlu0 1
  %1581 = vperm.xlu0 %1580, %v1431
  %v1582 = vpop.permute.xlu0 %1581
  %1585 = vset.pattern.permute.xlu0 1
  %1586 = vperm.xlu0 %1585, %v1432
  %v1587 = vpop.permute.xlu0 %1586
  %1590 = vset.pattern.permute.xlu0 1
  %1591 = vperm.xlu0 %1590, %v1433
  %v1592 = vpop.permute.xlu0 %1591
  %v1594 = vmul.f32 %v1557, %v242
  %v1595 = vmul.f32 %v1562, %v242
  %v1596 = vmul.f32 %v1567, %v242
  %v1597 = vmul.f32 %v1572, %v242
  %v1598 = vmul.f32 %v1577, %v242
  %v1599 = vmul.f32 %v1582, %v242
  %v1600 = vmul.f32 %v1587, %v242
  %v1601 = vmul.f32 %v1592, %v242
  %v1602 = vadd.f32 %v1594, %v254
  %v1603 = vadd.f32 %v1595, %v254
  %v1604 = vadd.f32 %v1596, %v254
  %v1605 = vadd.f32 %v1597, %v254
  %v1606 = vadd.f32 %v1598, %v254
  %v1607 = vadd.f32 %v1599, %v254
  %v1608 = vadd.f32 %v1600, %v254
  %v1609 = vadd.f32 %v1601, %v254
  %v1610 = vand.u32 2147483647, %v1602
  %vm1611 = vcmp.le.f32.partialorder %v1610, 0.7853982
  %vm1612 = vcmp.lt.s32.totalorder %v1602, 0
  %v1613 = vand.u32 %v1602, 2139095040
  %v1614 = vshrl.u32 %v1613, 23
  %v1615 = vsub.s32 %v1614, 127
  %v1616 = vand.u32 2147483647, %v1602
  %v1617 = vand.u32 %v1616, 8388607
  %v1618 = vor.u32 %v1617, 8388608
  %v1619 = vsub.s32 0, %v1618
  %v1620 = vadd.s32 %v1615, 1
  %vm1621 = vcmp.gt.s32.totalorder %v1620, 0
  %v1622 = vsel %vm1621, %v1620, 0
  %v1623 = vshrl.u32 %v1622, 5
  %v1624 = vand.u32 %v1622, 31
  %v1625 = vsub.s32 32, %v1624
  %v1626 = vshrl.u32 683565275, %v1625
  %v1627 = vshll.u32 683565275, %v1624
  %v1628 = vshrl.u32 2475754826, %v1625
  %v1629 = vor.u32 %v1627, %v1628
  %v1630 = vshll.u32 2475754826, %v1624
  %v1631 = vshrl.u32 2131351028, %v1625
  %v1632 = vor.u32 %v1630, %v1631
  %v1633 = vshll.u32 2131351028, %v1624
  %v1634 = vshrl.u32 2102212464, %v1625
  %v1635 = vor.u32 %v1633, %v1634
  %v1636 = vshll.u32 2102212464, %v1624
  %v1637 = vshrl.u32 920167782, %v1625
  %v1638 = vor.u32 %v1636, %v1637
  %v1639 = vshll.u32 920167782, %v1624
  %v1640 = vshrl.u32 1326507024, %v1625
  %v1641 = vor.u32 %v1639, %v1640
  %vm1642 = vcmp.lt.s32.totalorder %v1623, 1
  %vm1643 = vcmp.lt.s32.totalorder %v1623, 2
  %vm1644 = vcmp.lt.s32.totalorder %v1623, 3
  %vm1645 = vcmp.lt.s32.totalorder %v1623, 4
  %v1646 = vsel %vm1642, %v1626, %v1629
  %v1647 = vsel %vm1645, %v1635, 2102212464
  %v1648 = vsel %vm1644, %v1632, %v1647
  %v1649 = vsel %vm1643, %v1646, %v1648
  %v1650 = vsel %vm1642, %v1629, %v1632
  %v1651 = vsel %vm1645, %v1638, 920167782
  %v1652 = vsel %vm1644, %v1635, %v1651
  %v1653 = vsel %vm1643, %v1650, %v1652
  %v1654 = vsel %vm1642, %v1632, %v1635
  %v1655 = vsel %vm1645, %v1641, 1326507024
  %v1656 = vsel %vm1644, %v1638, %v1655
  %v1657 = vsel %vm1643, %v1654, %v1656
  %v1658 = vshll.u32 %v1618, 8
  %v1659 = vmul.u32.u64.compose %v1658, %v1657
  %v1660 = vextract.low.u32 %v1659
  %v1661 = vextract.high.u32 %v1659
  %v1662 = vmul.u32.u64.compose %v1658, %v1653
  %v1663 = vextract.low.u32 %v1662
  %v1664 = vextract.high.u32 %v1662
  %v1665 = vmul.u32 %v1658, %v1649
  %v1666 = vadd.s32 %v1661, %v1663
  %vm1667 = vc.u32 %v1661, %v1663
  %v1668 = vadd.s32 %v1664, 1
  %v1669 = vsel %vm1667, %v1668, %v1664
  %v1670 = vadd.s32 %v1665, %v1669
  %v1671 = vadd.s32 %v1670, 536870912
  %v1672 = vshrl.u32 %v1671, 30
  %v1673 = vshll.u32 %v1672, 30
  %v1674 = vsub.s32 %v1670, %v1673
  %vm1675 = vcmp.lt.s32.totalorder %v1674, 0
  %v1676 = vsub.s32 0, %v1674
  %v1677 = vsel %vm1675, %v1676, %v1674
  %v1678 = vclz %v1677
  %v1679 = vsub.s32 %v1678, 2
  %vm1680 = vcmp.gt.s32.totalorder 0, %v1679
  %v1681 = vsel %vm1680, 0, %v1679
  %v1682 = vsub.s32 32, %v1681
  %v1683 = vshll.u32 %v1674, %v1681
  %v1684 = vshrl.u32 %v1666, %v1682
  %v1685 = vor.u32 %v1683, %v1684
  %v1686 = vsub.s32 4294967266, %v1681
  %v1687 = vadd.s32 %v1686, 127
  %v1688 = vshll.u32 %v1687, 23
  %v1689 = vor.u32 4788187, %v1688
  %v1690 = vand.u32 2147483647, %v1689
  %v1692 = vcvt.s32.f32 %v1685
  %v1693 = vmul.f32 %v1692, %v1690
  %v1694 = vxor.u32 %v1693, 2147483648
  %v1695 = vsel %vm1612, %v1694, %v1693
  %v1696 = vsub.s32 4, %v1672
  %v1697 = vsel %vm1612, %v1696, %v1672
  %v1698 = vsel %vm1611, %v1602, %v1695
  %v1699 = vsel %vm1611, 0, %v1697
  %v1700 = vcosq.f32.pop %v1698
  %v1701 = vsinq.f32.pop %v1698
  %vm1702 = vweird.f32 %v1602
  %v1703 = vadd.s32 %v1699, 3
  %v1704 = vand.u32 %v1703, 3
  %vm1705 = vcmp.lt.s32.totalorder %v1704, 2
  %vm1706 = vcmp.eq.s32.totalorder %v1704, 0
  %v1707 = vxor.u32 %v1701, 2147483648
  %v1708 = vsel %vm1706, %v1700, %v1707
  %vm1709 = vcmp.eq.s32.totalorder %v1704, 2
  %v1710 = vxor.u32 %v1700, 2147483648
  %v1711 = vsel %vm1709, %v1710, %v1701
  %v1712 = vsel %vm1705, %v1708, %v1711
  %v1713 = vsel %vm1702, nan, %v1712
  %v1714 = vand.u32 2147483647, %v1603
  %vm1715 = vcmp.le.f32.partialorder %v1714, 0.7853982
  %vm1716 = vcmp.lt.s32.totalorder %v1603, 0
  %v1717 = vand.u32 %v1603, 2139095040
  %v1718 = vshrl.u32 %v1717, 23
  %v1719 = vsub.s32 %v1718, 127
  %v1720 = vand.u32 2147483647, %v1603
  %v1721 = vand.u32 %v1720, 8388607
  %v1722 = vor.u32 %v1721, 8388608
  %v1723 = vsub.s32 0, %v1722
  %v1724 = vadd.s32 %v1719, 1
  %vm1725 = vcmp.gt.s32.totalorder %v1724, 0
  %v1726 = vsel %vm1725, %v1724, 0
  %v1727 = vshrl.u32 %v1726, 5
  %v1728 = vand.u32 %v1726, 31
  %v1729 = vsub.s32 32, %v1728
  %v1730 = vshrl.u32 683565275, %v1729
  %v1731 = vshll.u32 683565275, %v1728
  %v1732 = vshrl.u32 2475754826, %v1729
  %v1733 = vor.u32 %v1731, %v1732
  %v1734 = vshll.u32 2475754826, %v1728
  %v1735 = vshrl.u32 2131351028, %v1729
  %v1736 = vor.u32 %v1734, %v1735
  %v1737 = vshll.u32 2131351028, %v1728
  %v1738 = vshrl.u32 2102212464, %v1729
  %v1739 = vor.u32 %v1737, %v1738
  %v1740 = vshll.u32 2102212464, %v1728
  %v1741 = vshrl.u32 920167782, %v1729
  %v1742 = vor.u32 %v1740, %v1741
  %v1743 = vshll.u32 920167782, %v1728
  %v1744 = vshrl.u32 1326507024, %v1729
  %v1745 = vor.u32 %v1743, %v1744
  %vm1746 = vcmp.lt.s32.totalorder %v1727, 1
  %vm1747 = vcmp.lt.s32.totalorder %v1727, 2
  %vm1748 = vcmp.lt.s32.totalorder %v1727, 3
  %vm1749 = vcmp.lt.s32.totalorder %v1727, 4
  %v1750 = vsel %vm1746, %v1730, %v1733
  %v1751 = vsel %vm1749, %v1739, 2102212464
  %v1752 = vsel %vm1748, %v1736, %v1751
  %v1753 = vsel %vm1747, %v1750, %v1752
  %v1754 = vsel %vm1746, %v1733, %v1736
  %v1755 = vsel %vm1749, %v1742, 920167782
  %v1756 = vsel %vm1748, %v1739, %v1755
  %v1757 = vsel %vm1747, %v1754, %v1756
  %v1758 = vsel %vm1746, %v1736, %v1739
  %v1759 = vsel %vm1749, %v1745, 1326507024
  %v1760 = vsel %vm1748, %v1742, %v1759
  %v1761 = vsel %vm1747, %v1758, %v1760
  %v1762 = vshll.u32 %v1722, 8
  %v1763 = vmul.u32.u64.compose %v1762, %v1761
  %v1764 = vextract.low.u32 %v1763
  %v1765 = vextract.high.u32 %v1763
  %v1766 = vmul.u32.u64.compose %v1762, %v1757
  %v1767 = vextract.low.u32 %v1766
  %v1768 = vextract.high.u32 %v1766
  %v1769 = vmul.u32 %v1762, %v1753
  %v1770 = vadd.s32 %v1765, %v1767
  %vm1771 = vc.u32 %v1765, %v1767
  %v1772 = vadd.s32 %v1768, 1
  %v1773 = vsel %vm1771, %v1772, %v1768
  %v1774 = vadd.s32 %v1769, %v1773
  %v1775 = vadd.s32 %v1774, 536870912
  %v1776 = vshrl.u32 %v1775, 30
  %v1777 = vshll.u32 %v1776, 30
  %v1778 = vsub.s32 %v1774, %v1777
  %vm1779 = vcmp.lt.s32.totalorder %v1778, 0
  %v1780 = vsub.s32 0, %v1778
  %v1781 = vsel %vm1779, %v1780, %v1778
  %v1782 = vclz %v1781
  %v1783 = vsub.s32 %v1782, 2
  %vm1784 = vcmp.gt.s32.totalorder 0, %v1783
  %v1785 = vsel %vm1784, 0, %v1783
  %v1786 = vsub.s32 32, %v1785
  %v1787 = vshll.u32 %v1778, %v1785
  %v1788 = vshrl.u32 %v1770, %v1786
  %v1789 = vor.u32 %v1787, %v1788
  %v1790 = vsub.s32 4294967266, %v1785
  %v1791 = vadd.s32 %v1790, 127
  %v1792 = vshll.u32 %v1791, 23
  %v1793 = vor.u32 4788187, %v1792
  %v1794 = vand.u32 2147483647, %v1793
  %v1796 = vcvt.s32.f32 %v1789
  %v1797 = vmul.f32 %v1796, %v1794
  %v1798 = vxor.u32 %v1797, 2147483648
  %v1799 = vsel %vm1716, %v1798, %v1797
  %v1800 = vsub.s32 4, %v1776
  %v1801 = vsel %vm1716, %v1800, %v1776
  %v1802 = vsel %vm1715, %v1603, %v1799
  %v1803 = vsel %vm1715, 0, %v1801
  %v1804 = vcosq.f32.pop %v1802
  %v1805 = vsinq.f32.pop %v1802
  %vm1806 = vweird.f32 %v1603
  %v1807 = vadd.s32 %v1803, 3
  %v1808 = vand.u32 %v1807, 3
  %vm1809 = vcmp.lt.s32.totalorder %v1808, 2
  %vm1810 = vcmp.eq.s32.totalorder %v1808, 0
  %v1811 = vxor.u32 %v1805, 2147483648
  %v1812 = vsel %vm1810, %v1804, %v1811
  %vm1813 = vcmp.eq.s32.totalorder %v1808, 2
  %v1814 = vxor.u32 %v1804, 2147483648
  %v1815 = vsel %vm1813, %v1814, %v1805
  %v1816 = vsel %vm1809, %v1812, %v1815
  %v1817 = vsel %vm1806, nan, %v1816
  %v1818 = vand.u32 2147483647, %v1604
  %vm1819 = vcmp.le.f32.partialorder %v1818, 0.7853982
  %vm1820 = vcmp.lt.s32.totalorder %v1604, 0
  %v1821 = vand.u32 %v1604, 2139095040
  %v1822 = vshrl.u32 %v1821, 23
  %v1823 = vsub.s32 %v1822, 127
  %v1824 = vand.u32 2147483647, %v1604
  %v1825 = vand.u32 %v1824, 8388607
  %v1826 = vor.u32 %v1825, 8388608
  %v1827 = vsub.s32 0, %v1826
  %v1828 = vadd.s32 %v1823, 1
  %vm1829 = vcmp.gt.s32.totalorder %v1828, 0
  %v1830 = vsel %vm1829, %v1828, 0
  %v1831 = vshrl.u32 %v1830, 5
  %v1832 = vand.u32 %v1830, 31
  %v1833 = vsub.s32 32, %v1832
  %v1834 = vshrl.u32 683565275, %v1833
  %v1835 = vshll.u32 683565275, %v1832
  %v1836 = vshrl.u32 2475754826, %v1833
  %v1837 = vor.u32 %v1835, %v1836
  %v1838 = vshll.u32 2475754826, %v1832
  %v1839 = vshrl.u32 2131351028, %v1833
  %v1840 = vor.u32 %v1838, %v1839
  %v1841 = vshll.u32 2131351028, %v1832
  %v1842 = vshrl.u32 2102212464, %v1833
  %v1843 = vor.u32 %v1841, %v1842
  %v1844 = vshll.u32 2102212464, %v1832
  %v1845 = vshrl.u32 920167782, %v1833
  %v1846 = vor.u32 %v1844, %v1845
  %v1847 = vshll.u32 920167782, %v1832
  %v1848 = vshrl.u32 1326507024, %v1833
  %v1849 = vor.u32 %v1847, %v1848
  %vm1850 = vcmp.lt.s32.totalorder %v1831, 1
  %vm1851 = vcmp.lt.s32.totalorder %v1831, 2
  %vm1852 = vcmp.lt.s32.totalorder %v1831, 3
  %vm1853 = vcmp.lt.s32.totalorder %v1831, 4
  %v1854 = vsel %vm1850, %v1834, %v1837
  %v1855 = vsel %vm1853, %v1843, 2102212464
  %v1856 = vsel %vm1852, %v1840, %v1855
  %v1857 = vsel %vm1851, %v1854, %v1856
  %v1858 = vsel %vm1850, %v1837, %v1840
  %v1859 = vsel %vm1853, %v1846, 920167782
  %v1860 = vsel %vm1852, %v1843, %v1859
  %v1861 = vsel %vm1851, %v1858, %v1860
  %v1862 = vsel %vm1850, %v1840, %v1843
  %v1863 = vsel %vm1853, %v1849, 1326507024
  %v1864 = vsel %vm1852, %v1846, %v1863
  %v1865 = vsel %vm1851, %v1862, %v1864
  %v1866 = vshll.u32 %v1826, 8
  %v1867 = vmul.u32.u64.compose %v1866, %v1865
  %v1868 = vextract.low.u32 %v1867
  %v1869 = vextract.high.u32 %v1867
  %v1870 = vmul.u32.u64.compose %v1866, %v1861
  %v1871 = vextract.low.u32 %v1870
  %v1872 = vextract.high.u32 %v1870
  %v1873 = vmul.u32 %v1866, %v1857
  %v1874 = vadd.s32 %v1869, %v1871
  %vm1875 = vc.u32 %v1869, %v1871
  %v1876 = vadd.s32 %v1872, 1
  %v1877 = vsel %vm1875, %v1876, %v1872
  %v1878 = vadd.s32 %v1873, %v1877
  %v1879 = vadd.s32 %v1878, 536870912
  %v1880 = vshrl.u32 %v1879, 30
  %v1881 = vshll.u32 %v1880, 30
  %v1882 = vsub.s32 %v1878, %v1881
  %vm1883 = vcmp.lt.s32.totalorder %v1882, 0
  %v1884 = vsub.s32 0, %v1882
  %v1885 = vsel %vm1883, %v1884, %v1882
  %v1886 = vclz %v1885
  %v1887 = vsub.s32 %v1886, 2
  %vm1888 = vcmp.gt.s32.totalorder 0, %v1887
  %v1889 = vsel %vm1888, 0, %v1887
  %v1890 = vsub.s32 32, %v1889
  %v1891 = vshll.u32 %v1882, %v1889
  %v1892 = vshrl.u32 %v1874, %v1890
  %v1893 = vor.u32 %v1891, %v1892
  %v1894 = vsub.s32 4294967266, %v1889
  %v1895 = vadd.s32 %v1894, 127
  %v1896 = vshll.u32 %v1895, 23
  %v1897 = vor.u32 4788187, %v1896
  %v1898 = vand.u32 2147483647, %v1897
  %v1900 = vcvt.s32.f32 %v1893
  %v1901 = vmul.f32 %v1900, %v1898
  %v1902 = vxor.u32 %v1901, 2147483648
  %v1903 = vsel %vm1820, %v1902, %v1901
  %v1904 = vsub.s32 4, %v1880
  %v1905 = vsel %vm1820, %v1904, %v1880
  %v1906 = vsel %vm1819, %v1604, %v1903
  %v1907 = vsel %vm1819, 0, %v1905
  %v1908 = vcosq.f32.pop %v1906
  %v1909 = vsinq.f32.pop %v1906
  %vm1910 = vweird.f32 %v1604
  %v1911 = vadd.s32 %v1907, 3
  %v1912 = vand.u32 %v1911, 3
  %vm1913 = vcmp.lt.s32.totalorder %v1912, 2
  %vm1914 = vcmp.eq.s32.totalorder %v1912, 0
  %v1915 = vxor.u32 %v1909, 2147483648
  %v1916 = vsel %vm1914, %v1908, %v1915
  %vm1917 = vcmp.eq.s32.totalorder %v1912, 2
  %v1918 = vxor.u32 %v1908, 2147483648
  %v1919 = vsel %vm1917, %v1918, %v1909
  %v1920 = vsel %vm1913, %v1916, %v1919
  %v1921 = vsel %vm1910, nan, %v1920
  %v1922 = vand.u32 2147483647, %v1605
  %vm1923 = vcmp.le.f32.partialorder %v1922, 0.7853982
  %vm1924 = vcmp.lt.s32.totalorder %v1605, 0
  %v1925 = vand.u32 %v1605, 2139095040
  %v1926 = vshrl.u32 %v1925, 23
  %v1927 = vsub.s32 %v1926, 127
  %v1928 = vand.u32 2147483647, %v1605
  %v1929 = vand.u32 %v1928, 8388607
  %v1930 = vor.u32 %v1929, 8388608
  %v1931 = vsub.s32 0, %v1930
  %v1932 = vadd.s32 %v1927, 1
  %vm1933 = vcmp.gt.s32.totalorder %v1932, 0
  %v1934 = vsel %vm1933, %v1932, 0
  %v1935 = vshrl.u32 %v1934, 5
  %v1936 = vand.u32 %v1934, 31
  %v1937 = vsub.s32 32, %v1936
  %v1938 = vshrl.u32 683565275, %v1937
  %v1939 = vshll.u32 683565275, %v1936
  %v1940 = vshrl.u32 2475754826, %v1937
  %v1941 = vor.u32 %v1939, %v1940
  %v1942 = vshll.u32 2475754826, %v1936
  %v1943 = vshrl.u32 2131351028, %v1937
  %v1944 = vor.u32 %v1942, %v1943
  %v1945 = vshll.u32 2131351028, %v1936
  %v1946 = vshrl.u32 2102212464, %v1937
  %v1947 = vor.u32 %v1945, %v1946
  %v1948 = vshll.u32 2102212464, %v1936
  %v1949 = vshrl.u32 920167782, %v1937
  %v1950 = vor.u32 %v1948, %v1949
  %v1951 = vshll.u32 920167782, %v1936
  %v1952 = vshrl.u32 1326507024, %v1937
  %v1953 = vor.u32 %v1951, %v1952
  %vm1954 = vcmp.lt.s32.totalorder %v1935, 1
  %vm1955 = vcmp.lt.s32.totalorder %v1935, 2
  %vm1956 = vcmp.lt.s32.totalorder %v1935, 3
  %vm1957 = vcmp.lt.s32.totalorder %v1935, 4
  %v1958 = vsel %vm1954, %v1938, %v1941
  %v1959 = vsel %vm1957, %v1947, 2102212464
  %v1960 = vsel %vm1956, %v1944, %v1959
  %v1961 = vsel %vm1955, %v1958, %v1960
  %v1962 = vsel %vm1954, %v1941, %v1944
  %v1963 = vsel %vm1957, %v1950, 920167782
  %v1964 = vsel %vm1956, %v1947, %v1963
  %v1965 = vsel %vm1955, %v1962, %v1964
  %v1966 = vsel %vm1954, %v1944, %v1947
  %v1967 = vsel %vm1957, %v1953, 1326507024
  %v1968 = vsel %vm1956, %v1950, %v1967
  %v1969 = vsel %vm1955, %v1966, %v1968
  %v1970 = vshll.u32 %v1930, 8
  %v1971 = vmul.u32.u64.compose %v1970, %v1969
  %v1972 = vextract.low.u32 %v1971
  %v1973 = vextract.high.u32 %v1971
  %v1974 = vmul.u32.u64.compose %v1970, %v1965
  %v1975 = vextract.low.u32 %v1974
  %v1976 = vextract.high.u32 %v1974
  %v1977 = vmul.u32 %v1970, %v1961
  %v1978 = vadd.s32 %v1973, %v1975
  %vm1979 = vc.u32 %v1973, %v1975
  %v1980 = vadd.s32 %v1976, 1
  %v1981 = vsel %vm1979, %v1980, %v1976
  %v1982 = vadd.s32 %v1977, %v1981
  %v1983 = vadd.s32 %v1982, 536870912
  %v1984 = vshrl.u32 %v1983, 30
  %v1985 = vshll.u32 %v1984, 30
  %v1986 = vsub.s32 %v1982, %v1985
  %vm1987 = vcmp.lt.s32.totalorder %v1986, 0
  %v1988 = vsub.s32 0, %v1986
  %v1989 = vsel %vm1987, %v1988, %v1986
  %v1990 = vclz %v1989
  %v1991 = vsub.s32 %v1990, 2
  %vm1992 = vcmp.gt.s32.totalorder 0, %v1991
  %v1993 = vsel %vm1992, 0, %v1991
  %v1994 = vsub.s32 32, %v1993
  %v1995 = vshll.u32 %v1986, %v1993
  %v1996 = vshrl.u32 %v1978, %v1994
  %v1997 = vor.u32 %v1995, %v1996
  %v1998 = vsub.s32 4294967266, %v1993
  %v1999 = vadd.s32 %v1998, 127
  %v2000 = vshll.u32 %v1999, 23
  %v2001 = vor.u32 4788187, %v2000
  %v2002 = vand.u32 2147483647, %v2001
  %v2004 = vcvt.s32.f32 %v1997
  %v2005 = vmul.f32 %v2004, %v2002
  %v2006 = vxor.u32 %v2005, 2147483648
  %v2007 = vsel %vm1924, %v2006, %v2005
  %v2008 = vsub.s32 4, %v1984
  %v2009 = vsel %vm1924, %v2008, %v1984
  %v2010 = vsel %vm1923, %v1605, %v2007
  %v2011 = vsel %vm1923, 0, %v2009
  %v2012 = vcosq.f32.pop %v2010
  %v2013 = vsinq.f32.pop %v2010
  %vm2014 = vweird.f32 %v1605
  %v2015 = vadd.s32 %v2011, 3
  %v2016 = vand.u32 %v2015, 3
  %vm2017 = vcmp.lt.s32.totalorder %v2016, 2
  %vm2018 = vcmp.eq.s32.totalorder %v2016, 0
  %v2019 = vxor.u32 %v2013, 2147483648
  %v2020 = vsel %vm2018, %v2012, %v2019
  %vm2021 = vcmp.eq.s32.totalorder %v2016, 2
  %v2022 = vxor.u32 %v2012, 2147483648
  %v2023 = vsel %vm2021, %v2022, %v2013
  %v2024 = vsel %vm2017, %v2020, %v2023
  %v2025 = vsel %vm2014, nan, %v2024
  %v2026 = vand.u32 2147483647, %v1606
  %vm2027 = vcmp.le.f32.partialorder %v2026, 0.7853982
  %vm2028 = vcmp.lt.s32.totalorder %v1606, 0
  %v2029 = vand.u32 %v1606, 2139095040
  %v2030 = vshrl.u32 %v2029, 23
  %v2031 = vsub.s32 %v2030, 127
  %v2032 = vand.u32 2147483647, %v1606
  %v2033 = vand.u32 %v2032, 8388607
  %v2034 = vor.u32 %v2033, 8388608
  %v2035 = vsub.s32 0, %v2034
  %v2036 = vadd.s32 %v2031, 1
  %vm2037 = vcmp.gt.s32.totalorder %v2036, 0
  %v2038 = vsel %vm2037, %v2036, 0
  %v2039 = vshrl.u32 %v2038, 5
  %v2040 = vand.u32 %v2038, 31
  %v2041 = vsub.s32 32, %v2040
  %v2042 = vshrl.u32 683565275, %v2041
  %v2043 = vshll.u32 683565275, %v2040
  %v2044 = vshrl.u32 2475754826, %v2041
  %v2045 = vor.u32 %v2043, %v2044
  %v2046 = vshll.u32 2475754826, %v2040
  %v2047 = vshrl.u32 2131351028, %v2041
  %v2048 = vor.u32 %v2046, %v2047
  %v2049 = vshll.u32 2131351028, %v2040
  %v2050 = vshrl.u32 2102212464, %v2041
  %v2051 = vor.u32 %v2049, %v2050
  %v2052 = vshll.u32 2102212464, %v2040
  %v2053 = vshrl.u32 920167782, %v2041
  %v2054 = vor.u32 %v2052, %v2053
  %v2055 = vshll.u32 920167782, %v2040
  %v2056 = vshrl.u32 1326507024, %v2041
  %v2057 = vor.u32 %v2055, %v2056
  %vm2058 = vcmp.lt.s32.totalorder %v2039, 1
  %vm2059 = vcmp.lt.s32.totalorder %v2039, 2
  %vm2060 = vcmp.lt.s32.totalorder %v2039, 3
  %vm2061 = vcmp.lt.s32.totalorder %v2039, 4
  %v2062 = vsel %vm2058, %v2042, %v2045
  %v2063 = vsel %vm2061, %v2051, 2102212464
  %v2064 = vsel %vm2060, %v2048, %v2063
  %v2065 = vsel %vm2059, %v2062, %v2064
  %v2066 = vsel %vm2058, %v2045, %v2048
  %v2067 = vsel %vm2061, %v2054, 920167782
  %v2068 = vsel %vm2060, %v2051, %v2067
  %v2069 = vsel %vm2059, %v2066, %v2068
  %v2070 = vsel %vm2058, %v2048, %v2051
  %v2071 = vsel %vm2061, %v2057, 1326507024
  %v2072 = vsel %vm2060, %v2054, %v2071
  %v2073 = vsel %vm2059, %v2070, %v2072
  %v2074 = vshll.u32 %v2034, 8
  %v2075 = vmul.u32.u64.compose %v2074, %v2073
  %v2076 = vextract.low.u32 %v2075
  %v2077 = vextract.high.u32 %v2075
  %v2078 = vmul.u32.u64.compose %v2074, %v2069
  %v2079 = vextract.low.u32 %v2078
  %v2080 = vextract.high.u32 %v2078
  %v2081 = vmul.u32 %v2074, %v2065
  %v2082 = vadd.s32 %v2077, %v2079
  %vm2083 = vc.u32 %v2077, %v2079
  %v2084 = vadd.s32 %v2080, 1
  %v2085 = vsel %vm2083, %v2084, %v2080
  %v2086 = vadd.s32 %v2081, %v2085
  %v2087 = vadd.s32 %v2086, 536870912
  %v2088 = vshrl.u32 %v2087, 30
  %v2089 = vshll.u32 %v2088, 30
  %v2090 = vsub.s32 %v2086, %v2089
  %vm2091 = vcmp.lt.s32.totalorder %v2090, 0
  %v2092 = vsub.s32 0, %v2090
  %v2093 = vsel %vm2091, %v2092, %v2090
  %v2094 = vclz %v2093
  %v2095 = vsub.s32 %v2094, 2
  %vm2096 = vcmp.gt.s32.totalorder 0, %v2095
  %v2097 = vsel %vm2096, 0, %v2095
  %v2098 = vsub.s32 32, %v2097
  %v2099 = vshll.u32 %v2090, %v2097
  %v2100 = vshrl.u32 %v2082, %v2098
  %v2101 = vor.u32 %v2099, %v2100
  %v2102 = vsub.s32 4294967266, %v2097
  %v2103 = vadd.s32 %v2102, 127
  %v2104 = vshll.u32 %v2103, 23
  %v2105 = vor.u32 4788187, %v2104
  %v2106 = vand.u32 2147483647, %v2105
  %v2108 = vcvt.s32.f32 %v2101
  %v2109 = vmul.f32 %v2108, %v2106
  %v2110 = vxor.u32 %v2109, 2147483648
  %v2111 = vsel %vm2028, %v2110, %v2109
  %v2112 = vsub.s32 4, %v2088
  %v2113 = vsel %vm2028, %v2112, %v2088
  %v2114 = vsel %vm2027, %v1606, %v2111
  %v2115 = vsel %vm2027, 0, %v2113
  %v2116 = vcosq.f32.pop %v2114
  %v2117 = vsinq.f32.pop %v2114
  %vm2118 = vweird.f32 %v1606
  %v2119 = vadd.s32 %v2115, 3
  %v2120 = vand.u32 %v2119, 3
  %vm2121 = vcmp.lt.s32.totalorder %v2120, 2
  %vm2122 = vcmp.eq.s32.totalorder %v2120, 0
  %v2123 = vxor.u32 %v2117, 2147483648
  %v2124 = vsel %vm2122, %v2116, %v2123
  %vm2125 = vcmp.eq.s32.totalorder %v2120, 2
  %v2126 = vxor.u32 %v2116, 2147483648
  %v2127 = vsel %vm2125, %v2126, %v2117
  %v2128 = vsel %vm2121, %v2124, %v2127
  %v2129 = vsel %vm2118, nan, %v2128
  %v2130 = vand.u32 2147483647, %v1607
  %vm2131 = vcmp.le.f32.partialorder %v2130, 0.7853982
  %vm2132 = vcmp.lt.s32.totalorder %v1607, 0
  %v2133 = vand.u32 %v1607, 2139095040
  %v2134 = vshrl.u32 %v2133, 23
  %v2135 = vsub.s32 %v2134, 127
  %v2136 = vand.u32 2147483647, %v1607
  %v2137 = vand.u32 %v2136, 8388607
  %v2138 = vor.u32 %v2137, 8388608
  %v2139 = vsub.s32 0, %v2138
  %v2140 = vadd.s32 %v2135, 1
  %vm2141 = vcmp.gt.s32.totalorder %v2140, 0
  %v2142 = vsel %vm2141, %v2140, 0
  %v2143 = vshrl.u32 %v2142, 5
  %v2144 = vand.u32 %v2142, 31
  %v2145 = vsub.s32 32, %v2144
  %v2146 = vshrl.u32 683565275, %v2145
  %v2147 = vshll.u32 683565275, %v2144
  %v2148 = vshrl.u32 2475754826, %v2145
  %v2149 = vor.u32 %v2147, %v2148
  %v2150 = vshll.u32 2475754826, %v2144
  %v2151 = vshrl.u32 2131351028, %v2145
  %v2152 = vor.u32 %v2150, %v2151
  %v2153 = vshll.u32 2131351028, %v2144
  %v2154 = vshrl.u32 2102212464, %v2145
  %v2155 = vor.u32 %v2153, %v2154
  %v2156 = vshll.u32 2102212464, %v2144
  %v2157 = vshrl.u32 920167782, %v2145
  %v2158 = vor.u32 %v2156, %v2157
  %v2159 = vshll.u32 920167782, %v2144
  %v2160 = vshrl.u32 1326507024, %v2145
  %v2161 = vor.u32 %v2159, %v2160
  %vm2162 = vcmp.lt.s32.totalorder %v2143, 1
  %vm2163 = vcmp.lt.s32.totalorder %v2143, 2
  %vm2164 = vcmp.lt.s32.totalorder %v2143, 3
  %vm2165 = vcmp.lt.s32.totalorder %v2143, 4
  %v2166 = vsel %vm2162, %v2146, %v2149
  %v2167 = vsel %vm2165, %v2155, 2102212464
  %v2168 = vsel %vm2164, %v2152, %v2167
  %v2169 = vsel %vm2163, %v2166, %v2168
  %v2170 = vsel %vm2162, %v2149, %v2152
  %v2171 = vsel %vm2165, %v2158, 920167782
  %v2172 = vsel %vm2164, %v2155, %v2171
  %v2173 = vsel %vm2163, %v2170, %v2172
  %v2174 = vsel %vm2162, %v2152, %v2155
  %v2175 = vsel %vm2165, %v2161, 1326507024
  %v2176 = vsel %vm2164, %v2158, %v2175
  %v2177 = vsel %vm2163, %v2174, %v2176
  %v2178 = vshll.u32 %v2138, 8
  %v2179 = vmul.u32.u64.compose %v2178, %v2177
  %v2180 = vextract.low.u32 %v2179
  %v2181 = vextract.high.u32 %v2179
  %v2182 = vmul.u32.u64.compose %v2178, %v2173
  %v2183 = vextract.low.u32 %v2182
  %v2184 = vextract.high.u32 %v2182
  %v2185 = vmul.u32 %v2178, %v2169
  %v2186 = vadd.s32 %v2181, %v2183
  %vm2187 = vc.u32 %v2181, %v2183
  %v2188 = vadd.s32 %v2184, 1
  %v2189 = vsel %vm2187, %v2188, %v2184
  %v2190 = vadd.s32 %v2185, %v2189
  %v2191 = vadd.s32 %v2190, 536870912
  %v2192 = vshrl.u32 %v2191, 30
  %v2193 = vshll.u32 %v2192, 30
  %v2194 = vsub.s32 %v2190, %v2193
  %vm2195 = vcmp.lt.s32.totalorder %v2194, 0
  %v2196 = vsub.s32 0, %v2194
  %v2197 = vsel %vm2195, %v2196, %v2194
  %v2198 = vclz %v2197
  %v2199 = vsub.s32 %v2198, 2
  %vm2200 = vcmp.gt.s32.totalorder 0, %v2199
  %v2201 = vsel %vm2200, 0, %v2199
  %v2202 = vsub.s32 32, %v2201
  %v2203 = vshll.u32 %v2194, %v2201
  %v2204 = vshrl.u32 %v2186, %v2202
  %v2205 = vor.u32 %v2203, %v2204
  %v2206 = vsub.s32 4294967266, %v2201
  %v2207 = vadd.s32 %v2206, 127
  %v2208 = vshll.u32 %v2207, 23
  %v2209 = vor.u32 4788187, %v2208
  %v2210 = vand.u32 2147483647, %v2209
  %v2212 = vcvt.s32.f32 %v2205
  %v2213 = vmul.f32 %v2212, %v2210
  %v2214 = vxor.u32 %v2213, 2147483648
  %v2215 = vsel %vm2132, %v2214, %v2213
  %v2216 = vsub.s32 4, %v2192
  %v2217 = vsel %vm2132, %v2216, %v2192
  %v2218 = vsel %vm2131, %v1607, %v2215
  %v2219 = vsel %vm2131, 0, %v2217
  %v2220 = vcosq.f32.pop %v2218
  %v2221 = vsinq.f32.pop %v2218
  %vm2222 = vweird.f32 %v1607
  %v2223 = vadd.s32 %v2219, 3
  %v2224 = vand.u32 %v2223, 3
  %vm2225 = vcmp.lt.s32.totalorder %v2224, 2
  %vm2226 = vcmp.eq.s32.totalorder %v2224, 0
  %v2227 = vxor.u32 %v2221, 2147483648
  %v2228 = vsel %vm2226, %v2220, %v2227
  %vm2229 = vcmp.eq.s32.totalorder %v2224, 2
  %v2230 = vxor.u32 %v2220, 2147483648
  %v2231 = vsel %vm2229, %v2230, %v2221
  %v2232 = vsel %vm2225, %v2228, %v2231
  %v2233 = vsel %vm2222, nan, %v2232
  %v2234 = vand.u32 2147483647, %v1608
  %vm2235 = vcmp.le.f32.partialorder %v2234, 0.7853982
  %vm2236 = vcmp.lt.s32.totalorder %v1608, 0
  %v2237 = vand.u32 %v1608, 2139095040
  %v2238 = vshrl.u32 %v2237, 23
  %v2239 = vsub.s32 %v2238, 127
  %v2240 = vand.u32 2147483647, %v1608
  %v2241 = vand.u32 %v2240, 8388607
  %v2242 = vor.u32 %v2241, 8388608
  %v2243 = vsub.s32 0, %v2242
  %v2244 = vadd.s32 %v2239, 1
  %vm2245 = vcmp.gt.s32.totalorder %v2244, 0
  %v2246 = vsel %vm2245, %v2244, 0
  %v2247 = vshrl.u32 %v2246, 5
  %v2248 = vand.u32 %v2246, 31
  %v2249 = vsub.s32 32, %v2248
  %v2250 = vshrl.u32 683565275, %v2249
  %v2251 = vshll.u32 683565275, %v2248
  %v2252 = vshrl.u32 2475754826, %v2249
  %v2253 = vor.u32 %v2251, %v2252
  %v2254 = vshll.u32 2475754826, %v2248
  %v2255 = vshrl.u32 2131351028, %v2249
  %v2256 = vor.u32 %v2254, %v2255
  %v2257 = vshll.u32 2131351028, %v2248
  %v2258 = vshrl.u32 2102212464, %v2249
  %v2259 = vor.u32 %v2257, %v2258
  %v2260 = vshll.u32 2102212464, %v2248
  %v2261 = vshrl.u32 920167782, %v2249
  %v2262 = vor.u32 %v2260, %v2261
  %v2263 = vshll.u32 920167782, %v2248
  %v2264 = vshrl.u32 1326507024, %v2249
  %v2265 = vor.u32 %v2263, %v2264
  %vm2266 = vcmp.lt.s32.totalorder %v2247, 1
  %vm2267 = vcmp.lt.s32.totalorder %v2247, 2
  %vm2268 = vcmp.lt.s32.totalorder %v2247, 3
  %vm2269 = vcmp.lt.s32.totalorder %v2247, 4
  %v2270 = vsel %vm2266, %v2250, %v2253
  %v2271 = vsel %vm2269, %v2259, 2102212464
  %v2272 = vsel %vm2268, %v2256, %v2271
  %v2273 = vsel %vm2267, %v2270, %v2272
  %v2274 = vsel %vm2266, %v2253, %v2256
  %v2275 = vsel %vm2269, %v2262, 920167782
  %v2276 = vsel %vm2268, %v2259, %v2275
  %v2277 = vsel %vm2267, %v2274, %v2276
  %v2278 = vsel %vm2266, %v2256, %v2259
  %v2279 = vsel %vm2269, %v2265, 1326507024
  %v2280 = vsel %vm2268, %v2262, %v2279
  %v2281 = vsel %vm2267, %v2278, %v2280
  %v2282 = vshll.u32 %v2242, 8
  %v2283 = vmul.u32.u64.compose %v2282, %v2281
  %v2284 = vextract.low.u32 %v2283
  %v2285 = vextract.high.u32 %v2283
  %v2286 = vmul.u32.u64.compose %v2282, %v2277
  %v2287 = vextract.low.u32 %v2286
  %v2288 = vextract.high.u32 %v2286
  %v2289 = vmul.u32 %v2282, %v2273
  %v2290 = vadd.s32 %v2285, %v2287
  %vm2291 = vc.u32 %v2285, %v2287
  %v2292 = vadd.s32 %v2288, 1
  %v2293 = vsel %vm2291, %v2292, %v2288
  %v2294 = vadd.s32 %v2289, %v2293
  %v2295 = vadd.s32 %v2294, 536870912
  %v2296 = vshrl.u32 %v2295, 30
  %v2297 = vshll.u32 %v2296, 30
  %v2298 = vsub.s32 %v2294, %v2297
  %vm2299 = vcmp.lt.s32.totalorder %v2298, 0
  %v2300 = vsub.s32 0, %v2298
  %v2301 = vsel %vm2299, %v2300, %v2298
  %v2302 = vclz %v2301
  %v2303 = vsub.s32 %v2302, 2
  %vm2304 = vcmp.gt.s32.totalorder 0, %v2303
  %v2305 = vsel %vm2304, 0, %v2303
  %v2306 = vsub.s32 32, %v2305
  %v2307 = vshll.u32 %v2298, %v2305
  %v2308 = vshrl.u32 %v2290, %v2306
  %v2309 = vor.u32 %v2307, %v2308
  %v2310 = vsub.s32 4294967266, %v2305
  %v2311 = vadd.s32 %v2310, 127
  %v2312 = vshll.u32 %v2311, 23
  %v2313 = vor.u32 4788187, %v2312
  %v2314 = vand.u32 2147483647, %v2313
  %v2316 = vcvt.s32.f32 %v2309
  %v2317 = vmul.f32 %v2316, %v2314
  %v2318 = vxor.u32 %v2317, 2147483648
  %v2319 = vsel %vm2236, %v2318, %v2317
  %v2320 = vsub.s32 4, %v2296
  %v2321 = vsel %vm2236, %v2320, %v2296
  %v2322 = vsel %vm2235, %v1608, %v2319
  %v2323 = vsel %vm2235, 0, %v2321
  %v2324 = vcosq.f32.pop %v2322
  %v2325 = vsinq.f32.pop %v2322
  %vm2326 = vweird.f32 %v1608
  %v2327 = vadd.s32 %v2323, 3
  %v2328 = vand.u32 %v2327, 3
  %vm2329 = vcmp.lt.s32.totalorder %v2328, 2
  %vm2330 = vcmp.eq.s32.totalorder %v2328, 0
  %v2331 = vxor.u32 %v2325, 2147483648
  %v2332 = vsel %vm2330, %v2324, %v2331
  %vm2333 = vcmp.eq.s32.totalorder %v2328, 2
  %v2334 = vxor.u32 %v2324, 2147483648
  %v2335 = vsel %vm2333, %v2334, %v2325
  %v2336 = vsel %vm2329, %v2332, %v2335
  %v2337 = vsel %vm2326, nan, %v2336
  %v2338 = vand.u32 2147483647, %v1609
  %vm2339 = vcmp.le.f32.partialorder %v2338, 0.7853982
  %vm2340 = vcmp.lt.s32.totalorder %v1609, 0
  %v2341 = vand.u32 %v1609, 2139095040
  %v2342 = vshrl.u32 %v2341, 23
  %v2343 = vsub.s32 %v2342, 127
  %v2344 = vand.u32 2147483647, %v1609
  %v2345 = vand.u32 %v2344, 8388607
  %v2346 = vor.u32 %v2345, 8388608
  %v2347 = vsub.s32 0, %v2346
  %v2348 = vadd.s32 %v2343, 1
  %vm2349 = vcmp.gt.s32.totalorder %v2348, 0
  %v2350 = vsel %vm2349, %v2348, 0
  %v2351 = vshrl.u32 %v2350, 5
  %v2352 = vand.u32 %v2350, 31
  %v2353 = vsub.s32 32, %v2352
  %v2354 = vshrl.u32 683565275, %v2353
  %v2355 = vshll.u32 683565275, %v2352
  %v2356 = vshrl.u32 2475754826, %v2353
  %v2357 = vor.u32 %v2355, %v2356
  %v2358 = vshll.u32 2475754826, %v2352
  %v2359 = vshrl.u32 2131351028, %v2353
  %v2360 = vor.u32 %v2358, %v2359
  %v2361 = vshll.u32 2131351028, %v2352
  %v2362 = vshrl.u32 2102212464, %v2353
  %v2363 = vor.u32 %v2361, %v2362
  %v2364 = vshll.u32 2102212464, %v2352
  %v2365 = vshrl.u32 920167782, %v2353
  %v2366 = vor.u32 %v2364, %v2365
  %v2367 = vshll.u32 920167782, %v2352
  %v2368 = vshrl.u32 1326507024, %v2353
  %v2369 = vor.u32 %v2367, %v2368
  %vm2370 = vcmp.lt.s32.totalorder %v2351, 1
  %vm2371 = vcmp.lt.s32.totalorder %v2351, 2
  %vm2372 = vcmp.lt.s32.totalorder %v2351, 3
  %vm2373 = vcmp.lt.s32.totalorder %v2351, 4
  %v2374 = vsel %vm2370, %v2354, %v2357
  %v2375 = vsel %vm2373, %v2363, 2102212464
  %v2376 = vsel %vm2372, %v2360, %v2375
  %v2377 = vsel %vm2371, %v2374, %v2376
  %v2378 = vsel %vm2370, %v2357, %v2360
  %v2379 = vsel %vm2373, %v2366, 920167782
  %v2380 = vsel %vm2372, %v2363, %v2379
  %v2381 = vsel %vm2371, %v2378, %v2380
  %v2382 = vsel %vm2370, %v2360, %v2363
  %v2383 = vsel %vm2373, %v2369, 1326507024
  %v2384 = vsel %vm2372, %v2366, %v2383
  %v2385 = vsel %vm2371, %v2382, %v2384
  %v2386 = vshll.u32 %v2346, 8
  %v2387 = vmul.u32.u64.compose %v2386, %v2385
  %v2388 = vextract.low.u32 %v2387
  %v2389 = vextract.high.u32 %v2387
  %v2390 = vmul.u32.u64.compose %v2386, %v2381
  %v2391 = vextract.low.u32 %v2390
  %v2392 = vextract.high.u32 %v2390
  %v2393 = vmul.u32 %v2386, %v2377
  %v2394 = vadd.s32 %v2389, %v2391
  %vm2395 = vc.u32 %v2389, %v2391
  %v2396 = vadd.s32 %v2392, 1
  %v2397 = vsel %vm2395, %v2396, %v2392
  %v2398 = vadd.s32 %v2393, %v2397
  %v2399 = vadd.s32 %v2398, 536870912
  %v2400 = vshrl.u32 %v2399, 30
  %v2401 = vshll.u32 %v2400, 30
  %v2402 = vsub.s32 %v2398, %v2401
  %vm2403 = vcmp.lt.s32.totalorder %v2402, 0
  %v2404 = vsub.s32 0, %v2402
  %v2405 = vsel %vm2403, %v2404, %v2402
  %v2406 = vclz %v2405
  %v2407 = vsub.s32 %v2406, 2
  %vm2408 = vcmp.gt.s32.totalorder 0, %v2407
  %v2409 = vsel %vm2408, 0, %v2407
  %v2410 = vsub.s32 32, %v2409
  %v2411 = vshll.u32 %v2402, %v2409
  %v2412 = vshrl.u32 %v2394, %v2410
  %v2413 = vor.u32 %v2411, %v2412
  %v2414 = vsub.s32 4294967266, %v2409
  %v2415 = vadd.s32 %v2414, 127
  %v2416 = vshll.u32 %v2415, 23
  %v2417 = vor.u32 4788187, %v2416
  %v2418 = vand.u32 2147483647, %v2417
  %v2420 = vcvt.s32.f32 %v2413
  %v2421 = vmul.f32 %v2420, %v2418
  %v2422 = vxor.u32 %v2421, 2147483648
  %v2423 = vsel %vm2340, %v2422, %v2421
  %v2424 = vsub.s32 4, %v2400
  %v2425 = vsel %vm2340, %v2424, %v2400
  %v2426 = vsel %vm2339, %v1609, %v2423
  %v2427 = vsel %vm2339, 0, %v2425
  %v2428 = vcosq.f32.pop %v2426
  %v2429 = vsinq.f32.pop %v2426
  %vm2430 = vweird.f32 %v1609
  %v2431 = vadd.s32 %v2427, 3
  %v2432 = vand.u32 %v2431, 3
  %vm2433 = vcmp.lt.s32.totalorder %v2432, 2
  %vm2434 = vcmp.eq.s32.totalorder %v2432, 0
  %v2435 = vxor.u32 %v2429, 2147483648
  %v2436 = vsel %vm2434, %v2428, %v2435
  %vm2437 = vcmp.eq.s32.totalorder %v2432, 2
  %v2438 = vxor.u32 %v2428, 2147483648
  %v2439 = vsel %vm2437, %v2438, %v2429
  %v2440 = vsel %vm2433, %v2436, %v2439
  %v2441 = vsel %vm2430, nan, %v2440
  %v2442 = vadd.f32 %v1546, %v1713
  %v2443 = vadd.f32 %v1547, %v1817
  %v2444 = vadd.f32 %v1548, %v1921
  %v2445 = vadd.f32 %v1549, %v2025
  %v2446 = vadd.f32 %v1550, %v2129
  %v2447 = vadd.f32 %v1551, %v2233
  %v2448 = vadd.f32 %v1552, %v2337
  %v2449 = vadd.f32 %v1553, %v2441
  %2450 = vmatprep.subr.mxu0 0.0
  %2451 = vmatpush1.msra.mxu0 %v17
  %2452 = vmatprep.subr.mxu0 0.0
  %2453 = vmatpush1.msra.mxu0 %v18
  %2454 = vmatprep.subr.mxu0 0.0
  %2455 = vmatpush1.msra.mxu0 %v19
  %2456 = vmatprep.subr.mxu0 0.0
  %2457 = vmatpush1.msra.mxu0 %v20
  %2458 = vmatprep.subr.mxu0 0.0
  %2459 = vmatpush1.msra.mxu0 %v21
  %2460 = vmatprep.subr.mxu0 0.0
  %2461 = vmatpush1.msra.mxu0 %v22
  %2462 = vmatprep.subr.mxu0 0.0
  %2463 = vmatpush1.msra.mxu0 %v23
  %2464 = vmatprep.subr.mxu0 0.0
  %2465 = vmatpush1.msra.mxu0 %v24
  %2466 = vmatprep.subr.mxu0 0.0
  %2467 = vmatpush1.msra.mxu0 %v25
  %2468 = vmatprep.subr.mxu0 0.0
  %2469 = vmatpush1.msra.mxu0 %v26
  %2470 = vmatprep.subr.mxu0 0.0
  %2471 = vmatpush1.msra.mxu0 %v27
  %2472 = vmatprep.subr.mxu0 0.0
  %2473 = vmatpush1.msra.mxu0 %v28
  %2474 = vmatprep.subr.mxu0 0.0
  %2475 = vmatpush1.msra.mxu0 %v29
  %2476 = vmatprep.subr.mxu0 0.0
  %2477 = vmatpush1.msra.mxu0 %v30
  %2478 = vmatprep.subr.mxu0 0.0
  %2479 = vmatpush1.msra.mxu0 %v31
  %2480 = vmatprep.subr.mxu0 0.0
  %2481 = vmatpush1.msra.mxu0 %v32
  %2482 = vmatprep.subr.mxu0 0.0
  %2483 = vmatpush1.msra.mxu0 0.0
  %2484 = vmatprep.subr.mxu0 0.0
  %2485 = vmatpush1.msra.mxu0 0.0
  %2486 = vmatprep.subr.mxu0 0.0
  %2487 = vmatpush1.msra.mxu0 0.0
  %2488 = vmatprep.subr.mxu0 0.0
  %2489 = vmatpush1.msra.mxu0 0.0
  %2490 = vmatprep.subr.mxu0 0.0
  %2491 = vmatpush1.msra.mxu0 0.0
  %2492 = vmatprep.subr.mxu0 0.0
  %2493 = vmatpush1.msra.mxu0 0.0
  %2494 = vmatprep.subr.mxu0 0.0
  %2495 = vmatpush1.msra.mxu0 0.0
  %2496 = vmatprep.subr.mxu0 0.0
  %2497 = vmatpush1.msra.mxu0 0.0
  %2498 = vmatprep.subr.mxu0 0.0
  %2499 = vmatpush1.msra.mxu0 0.0
  %2500 = vmatprep.subr.mxu0 0.0
  %2501 = vmatpush1.msra.mxu0 0.0
  %2502 = vmatprep.subr.mxu0 0.0
  %2503 = vmatpush1.msra.mxu0 0.0
  %2504 = vmatprep.subr.mxu0 0.0
  %2505 = vmatpush1.msra.mxu0 0.0
  %2506 = vmatprep.subr.mxu0 0.0
  %2507 = vmatpush1.msra.mxu0 0.0
  %2508 = vmatprep.subr.mxu0 0.0
  %2509 = vmatpush1.msra.mxu0 0.0
  %2510 = vmatprep.subr.mxu0 0.0
  %2511 = vmatpush1.msra.mxu0 0.0
  %2512 = vmatprep.subr.mxu0 0.0
  %2513 = vmatpush1.msra.mxu0 0.0
  %2514 = vmatprep.mubr.f32.mxu0 0.0
  %2515 = vmatmul.mubr.f32.gmra.mrb[0].mxu0 %v2442
  %v2516 = vpop.f32.mrb[0].mxu0
  %v2517 = vadd.f32 0.0, %v2516
  %v2518 = vpop.f32.mrb[0].mxu0
  %2519 = vmatprep.mubr.f32.mxu0 0.0
  %2520 = vmatmul.mubr.f32.gmra.mrb[0].mxu0 %v2443
  %v2521 = vpop.f32.mrb[0].mxu0
  %v2522 = vadd.f32 0.0, %v2521
  %v2523 = vpop.f32.mrb[0].mxu0
  %2524 = vmatprep.mubr.f32.mxu0 0.0
  %2525 = vmatmul.mubr.f32.gmra.mrb[0].mxu0 %v2444
  %v2526 = vpop.f32.mrb[0].mxu0
  %v2527 = vadd.f32 0.0, %v2526
  %v2528 = vpop.f32.mrb[0].mxu0
  %2529 = vmatprep.mubr.f32.mxu0 0.0
  %2530 = vmatmul.mubr.f32.gmra.mrb[0].mxu0 %v2445
  %v2531 = vpop.f32.mrb[0].mxu0
  %v2532 = vadd.f32 0.0, %v2531
  %v2533 = vpop.f32.mrb[0].mxu0
  %2534 = vmatprep.mubr.f32.mxu0 0.0
  %2535 = vmatmul.mubr.f32.gmra.mrb[0].mxu0 %v2446
  %v2536 = vpop.f32.mrb[0].mxu0
  %v2537 = vadd.f32 0.0, %v2536
  %v2538 = vpop.f32.mrb[0].mxu0
  %2539 = vmatprep.mubr.f32.mxu0 0.0
  %2540 = vmatmul.mubr.f32.gmra.mrb[0].mxu0 %v2447
  %v2541 = vpop.f32.mrb[0].mxu0
  %v2542 = vadd.f32 0.0, %v2541
  %v2543 = vpop.f32.mrb[0].mxu0
  %2544 = vmatprep.mubr.f32.mxu0 0.0
  %2545 = vmatmul.mubr.f32.gmra.mrb[0].mxu0 %v2448
  %v2546 = vpop.f32.mrb[0].mxu0
  %v2547 = vadd.f32 0.0, %v2546
  %v2548 = vpop.f32.mrb[0].mxu0
  %2549 = vmatprep.mubr.f32.mxu0 0.0
  %2550 = vmatmul.mubr.f32.gmra.mrb[0].mxu0 %v2449
  %v2551 = vpop.f32.mrb[0].mxu0
  %v2552 = vadd.f32 0.0, %v2551
  %v2553 = vpop.f32.mrb[0].mxu0
  %2554 = vdwg.mxu0
  %2556 = vset.pattern.permute.xlu0 1
  %2557 = vperm.xlu0 %2556, %v1418
  %v2558 = vpop.permute.xlu0 %2557
  %2561 = vset.pattern.permute.xlu0 1
  %2562 = vperm.xlu0 %2561, %v1419
  %v2563 = vpop.permute.xlu0 %2562
  %2566 = vset.pattern.permute.xlu0 1
  %2567 = vperm.xlu0 %2566, %v1420
  %v2568 = vpop.permute.xlu0 %2567
  %2571 = vset.pattern.permute.xlu0 1
  %2572 = vperm.xlu0 %2571, %v1421
  %v2573 = vpop.permute.xlu0 %2572
  %2576 = vset.pattern.permute.xlu0 1
  %2577 = vperm.xlu0 %2576, %v1422
  %v2578 = vpop.permute.xlu0 %2577
  %2581 = vset.pattern.permute.xlu0 1
  %2582 = vperm.xlu0 %2581, %v1423
  %v2583 = vpop.permute.xlu0 %2582
  %2586 = vset.pattern.permute.xlu0 1
  %2587 = vperm.xlu0 %2586, %v1424
  %v2588 = vpop.permute.xlu0 %2587
  %2591 = vset.pattern.permute.xlu0 1
  %2592 = vperm.xlu0 %2591, %v1425
  %v2593 = vpop.permute.xlu0 %2592
  %v2595 = vmul.f32 %v2517, %v2558
  %v2596 = vmul.f32 %v2522, %v2563
  %v2597 = vmul.f32 %v2527, %v2568
  %v2598 = vmul.f32 %v2532, %v2573
  %v2599 = vmul.f32 %v2537, %v2578
  %v2600 = vmul.f32 %v2542, %v2583
  %v2601 = vmul.f32 %v2547, %v2588
  %v2602 = vmul.f32 %v2552, %v2593
  %v2603 = vsel %vm1256, %v2595, 0.0
  %2604 = vadd.xlane.f32.xlu0 %v2603
  %v2605 = vpop.xlane.xlu0 %2604
  %v2606 = vsel %vm1256, %v2596, 0.0
  %2607 = vadd.xlane.f32.xlu0 %v2606
  %v2608 = vpop.xlane.xlu0 %2607
  %v2609 = vsel %vm1256, %v2597, 0.0
  %2610 = vadd.xlane.f32.xlu0 %v2609
  %v2611 = vpop.xlane.xlu0 %2610
  %v2612 = vsel %vm1256, %v2598, 0.0
  %2613 = vadd.xlane.f32.xlu0 %v2612
  %v2614 = vpop.xlane.xlu0 %2613
  %v2615 = vsel %vm1256, %v2599, 0.0
  %2616 = vadd.xlane.f32.xlu0 %v2615
  %v2617 = vpop.xlane.xlu0 %2616
  %v2618 = vsel %vm1256, %v2600, 0.0
  %2619 = vadd.xlane.f32.xlu0 %v2618
  %v2620 = vpop.xlane.xlu0 %2619
  %v2621 = vsel %vm1256, %v2601, 0.0
  %2622 = vadd.xlane.f32.xlu0 %v2621
  %v2623 = vpop.xlane.xlu0 %2622
  %v2624 = vsel %vm1256, %v2602, 0.0
  %2625 = vadd.xlane.f32.xlu0 %v2624
  %v2626 = vpop.xlane.xlu0 %2625
  %v2627 = vmul.f32 %v2605, %v1281
  %v2628 = vmul.f32 %v2608, %v1281
  %v2629 = vmul.f32 %v2611, %v1281
  %v2630 = vmul.f32 %v2614, %v1281
  %v2631 = vmul.f32 %v2617, %v1281
  %v2632 = vmul.f32 %v2620, %v1281
  %v2633 = vmul.f32 %v2623, %v1281
  %v2634 = vmul.f32 %v2626, %v1281
  %v2635 = vsub.f32 %v2595, %v2627
  %v2636 = vsub.f32 %v2596, %v2628
  %v2637 = vsub.f32 %v2597, %v2629
  %v2638 = vsub.f32 %v2598, %v2630
  %v2639 = vsub.f32 %v2599, %v2631
  %v2640 = vsub.f32 %v2600, %v2632
  %v2641 = vsub.f32 %v2601, %v2633
  %v2642 = vsub.f32 %v2602, %v2634
  %v2643 = vmul.f32 %v2635, %v2635
  %v2644 = vmul.f32 %v2636, %v2636
  %v2645 = vmul.f32 %v2637, %v2637
  %v2646 = vmul.f32 %v2638, %v2638
  %v2647 = vmul.f32 %v2639, %v2639
  %v2648 = vmul.f32 %v2640, %v2640
  %v2649 = vmul.f32 %v2641, %v2641
  %v2650 = vmul.f32 %v2642, %v2642
  %v2651 = vsel %vm1256, %v2643, 0.0
  %2652 = vadd.xlane.f32.xlu0 %v2651
  %v2653 = vpop.xlane.xlu0 %2652
  %v2654 = vsel %vm1256, %v2644, 0.0
  %2655 = vadd.xlane.f32.xlu0 %v2654
  %v2656 = vpop.xlane.xlu0 %2655
  %v2657 = vsel %vm1256, %v2645, 0.0
  %2658 = vadd.xlane.f32.xlu0 %v2657
  %v2659 = vpop.xlane.xlu0 %2658
  %v2660 = vsel %vm1256, %v2646, 0.0
  %2661 = vadd.xlane.f32.xlu0 %v2660
  %v2662 = vpop.xlane.xlu0 %2661
  %v2663 = vsel %vm1256, %v2647, 0.0
  %2664 = vadd.xlane.f32.xlu0 %v2663
  %v2665 = vpop.xlane.xlu0 %2664
  %v2666 = vsel %vm1256, %v2648, 0.0
  %2667 = vadd.xlane.f32.xlu0 %v2666
  %v2668 = vpop.xlane.xlu0 %2667
  %v2669 = vsel %vm1256, %v2649, 0.0
  %2670 = vadd.xlane.f32.xlu0 %v2669
  %v2671 = vpop.xlane.xlu0 %2670
  %v2672 = vsel %vm1256, %v2650, 0.0
  %2673 = vadd.xlane.f32.xlu0 %v2672
  %v2674 = vpop.xlane.xlu0 %2673
  %v2675 = vmul.f32 %v2653, %v1281
  %v2676 = vmul.f32 %v2656, %v1281
  %v2677 = vmul.f32 %v2659, %v1281
  %v2678 = vmul.f32 %v2662, %v1281
  %v2679 = vmul.f32 %v2665, %v1281
  %v2680 = vmul.f32 %v2668, %v1281
  %v2681 = vmul.f32 %v2671, %v1281
  %v2682 = vmul.f32 %v2674, %v1281
  %v2683 = vadd.f32 %v2675, 1e-05
  %v2684 = vadd.f32 %v2676, 1e-05
  %v2685 = vadd.f32 %v2677, 1e-05
  %v2686 = vadd.f32 %v2678, 1e-05
  %v2687 = vadd.f32 %v2679, 1e-05
  %v2688 = vadd.f32 %v2680, 1e-05
  %v2689 = vadd.f32 %v2681, 1e-05
  %v2690 = vadd.f32 %v2682, 1e-05
  %v2691 = vrsqrt.pop %v2683
  %v2692 = vrsqrt.pop %v2684
  %v2693 = vrsqrt.pop %v2685
  %v2694 = vrsqrt.pop %v2686
  %v2695 = vrsqrt.pop %v2687
  %v2696 = vrsqrt.pop %v2688
  %v2697 = vrsqrt.pop %v2689
  %v2698 = vrsqrt.pop %v2690
  %v2699 = vmul.f32 %v2635, %v2691
  %v2700 = vmul.f32 %v2636, %v2692
  %v2701 = vmul.f32 %v2637, %v2693
  %v2702 = vmul.f32 %v2638, %v2694
  %v2703 = vmul.f32 %v2639, %v2695
  %v2704 = vmul.f32 %v2640, %v2696
  %v2705 = vmul.f32 %v2641, %v2697
  %v2706 = vmul.f32 %v2642, %v2698
  %v2707 = vmul.f32 %v2699, %v1365
  %v2708 = vmul.f32 %v2700, %v1365
  %v2709 = vmul.f32 %v2701, %v1365
  %v2710 = vmul.f32 %v2702, %v1365
  %v2711 = vmul.f32 %v2703, %v1365
  %v2712 = vmul.f32 %v2704, %v1365
  %v2713 = vmul.f32 %v2705, %v1365
  %v2714 = vmul.f32 %v2706, %v1365
  %v2715 = vadd.f32 %v2707, %v1377
  %v2716 = vadd.f32 %v2708, %v1377
  %v2717 = vadd.f32 %v2709, %v1377
  %v2718 = vadd.f32 %v2710, %v1377
  %v2719 = vadd.f32 %v2711, %v1377
  %v2720 = vadd.f32 %v2712, %v1377
  %v2721 = vadd.f32 %v2713, %v1377
  %v2722 = vadd.f32 %v2714, %v1377
  %2731 = vrot.lane.b32.xlu0 %v2715, 32
  %v2732 = vpop.permute.xlu0 %2731
  %2733 = vrot.lane.b32.xlu0 %v2716, 32
  %v2734 = vpop.permute.xlu0 %2733
  %2735 = vrot.lane.b32.xlu0 %v2717, 32
  %v2736 = vpop.permute.xlu0 %2735
  %2737 = vrot.lane.b32.xlu0 %v2718, 32
  %v2738 = vpop.permute.xlu0 %2737
  %2739 = vrot.lane.b32.xlu0 %v2719, 32
  %v2740 = vpop.permute.xlu0 %2739
  %2741 = vrot.lane.b32.xlu0 %v2720, 32
  %v2742 = vpop.permute.xlu0 %2741
  %2743 = vrot.lane.b32.xlu0 %v2721, 32
  %v2744 = vpop.permute.xlu0 %2743
  %2745 = vrot.lane.b32.xlu0 %v2722, 32
  %v2746 = vpop.permute.xlu0 %2745
  %vm2755 = vcmask 523520
  %2756 = vst.msk [vmem:[%s4] sm:$0xff] %vm2755, %v2732
  %2757 = vst.msk [vmem:[%s4 + $0x8] sm:$0xff] %vm2755, %v2734
  %2758 = vst.msk [vmem:[%s4 + $0x10] sm:$0xff] %vm2755, %v2736
  %2759 = vst.msk [vmem:[%s4 + $0x18] sm:$0xff] %vm2755, %v2738
  %2760 = vst.msk [vmem:[%s4 + $0x20] sm:$0xff] %vm2755, %v2740
  %2761 = vst.msk [vmem:[%s4 + $0x28] sm:$0xff] %vm2755, %v2742
  %2762 = vst.msk [vmem:[%s4 + $0x30] sm:$0xff] %vm2755, %v2744
  %2763 = vst.msk [vmem:[%s4 + $0x38] sm:$0xff] %vm2755, %v2746
  %v2764 = vld [vmem:[%s0] sm:$0xff]
  %v2765 = vld [vmem:[%s0 + $0x8] sm:$0xff]
  %v2766 = vld [vmem:[%s0 + $0x10] sm:$0xff]
  %v2767 = vld [vmem:[%s0 + $0x18] sm:$0xff]
  %v2768 = vld [vmem:[%s0 + $0x20] sm:$0xff]
  %v2769 = vld [vmem:[%s0 + $0x28] sm:$0xff]
  %v2770 = vld [vmem:[%s0 + $0x30] sm:$0xff]
  %v2771 = vld [vmem:[%s0 + $0x38] sm:$0xff]
  %vm2772 = vcmp.gt.f32.partialorder %v2764, 0.0
  %vm2773 = vcmp.gt.f32.partialorder %v2765, 0.0
  %vm2774 = vcmp.gt.f32.partialorder %v2766, 0.0
  %vm2775 = vcmp.gt.f32.partialorder %v2767, 0.0
  %vm2776 = vcmp.gt.f32.partialorder %v2768, 0.0
  %vm2777 = vcmp.gt.f32.partialorder %v2769, 0.0
  %vm2778 = vcmp.gt.f32.partialorder %v2770, 0.0
  %vm2779 = vcmp.gt.f32.partialorder %v2771, 0.0
  %v2780 = vsel %vm2772, 1, 0
  %v2781 = vsel %vm2773, 1, 0
  %v2782 = vsel %vm2774, 1, 0
  %v2783 = vsel %vm2775, 1, 0
  %v2784 = vsel %vm2776, 1, 0
  %v2785 = vsel %vm2777, 1, 0
  %v2786 = vsel %vm2778, 1, 0
  %v2787 = vsel %vm2779, 1, 0
  %v2788 = vcvt.s32.f32 %v2780
  %v2789 = vcvt.s32.f32 %v2781
  %v2790 = vcvt.s32.f32 %v2782
  %v2791 = vcvt.s32.f32 %v2783
  %v2792 = vcvt.s32.f32 %v2784
  %v2793 = vcvt.s32.f32 %v2785
  %v2794 = vcvt.s32.f32 %v2786
  %v2795 = vcvt.s32.f32 %v2787
  %v2796 = vsel %vm2772, %v2764, 1.0
  %v2797 = vsel %vm2773, %v2765, 1.0
  %v2798 = vsel %vm2774, %v2766, 1.0
  %v2799 = vsel %vm2775, %v2767, 1.0
  %v2800 = vsel %vm2776, %v2768, 1.0
  %v2801 = vsel %vm2777, %v2769, 1.0
  %v2802 = vsel %vm2778, %v2770, 1.0
  %v2803 = vsel %vm2779, %v2771, 1.0
  %v2804 = vadd.f32 %v2796, 1.0
  %v2805 = vadd.f32 %v2797, 1.0
  %v2806 = vadd.f32 %v2798, 1.0
  %v2807 = vadd.f32 %v2799, 1.0
  %v2808 = vadd.f32 %v2800, 1.0
  %v2809 = vadd.f32 %v2801, 1.0
  %v2810 = vadd.f32 %v2802, 1.0
  %v2811 = vadd.f32 %v2803, 1.0
  %v2812 = vlog2.pop %v2804
  %v2813 = vmul.f32 %v2812, 0.6931472
  %v2814 = vlog2.pop %v2805
  %v2815 = vmul.f32 %v2814, 0.6931472
  %v2816 = vlog2.pop %v2806
  %v2817 = vmul.f32 %v2816, 0.6931472
  %v2818 = vlog2.pop %v2807
  %v2819 = vmul.f32 %v2818, 0.6931472
  %v2820 = vlog2.pop %v2808
  %v2821 = vmul.f32 %v2820, 0.6931472
  %v2822 = vlog2.pop %v2809
  %v2823 = vmul.f32 %v2822, 0.6931472
  %v2824 = vlog2.pop %v2810
  %v2825 = vmul.f32 %v2824, 0.6931472
  %v2826 = vlog2.pop %v2811
  %v2827 = vmul.f32 %v2826, 0.6931472
  %v2828 = vmul.f32 %v2813, 4.0
  %v2829 = vmul.f32 %v2815, 4.0
  %v2830 = vmul.f32 %v2817, 4.0
  %v2831 = vmul.f32 %v2819, 4.0
  %v2832 = vmul.f32 %v2821, 4.0
  %v2833 = vmul.f32 %v2823, 4.0
  %v2834 = vmul.f32 %v2825, 4.0
  %v2835 = vmul.f32 %v2827, 4.0
  %v2836 = vcvt.f32.s32.to.zero.pseudo %v2828
  %v2837 = vcvt.f32.s32.to.zero.pseudo %v2829
  %v2838 = vcvt.f32.s32.to.zero.pseudo %v2830
  %v2839 = vcvt.f32.s32.to.zero.pseudo %v2831
  %v2840 = vcvt.f32.s32.to.zero.pseudo %v2832
  %v2841 = vcvt.f32.s32.to.zero.pseudo %v2833
  %v2842 = vcvt.f32.s32.to.zero.pseudo %v2834
  %v2843 = vcvt.f32.s32.to.zero.pseudo %v2835
  %vm2844 = vcmp.gt.s32.totalorder %v2836, 0
  %v2845 = vsel %vm2844, %v2836, 0
  %vm2846 = vcmp.gt.s32.totalorder %v2837, 0
  %v2847 = vsel %vm2846, %v2837, 0
  %vm2848 = vcmp.gt.s32.totalorder %v2838, 0
  %v2849 = vsel %vm2848, %v2838, 0
  %vm2850 = vcmp.gt.s32.totalorder %v2839, 0
  %v2851 = vsel %vm2850, %v2839, 0
  %vm2852 = vcmp.gt.s32.totalorder %v2840, 0
  %v2853 = vsel %vm2852, %v2840, 0
  %vm2854 = vcmp.gt.s32.totalorder %v2841, 0
  %v2855 = vsel %vm2854, %v2841, 0
  %vm2856 = vcmp.gt.s32.totalorder %v2842, 0
  %v2857 = vsel %vm2856, %v2842, 0
  %vm2858 = vcmp.gt.s32.totalorder %v2843, 0
  %v2859 = vsel %vm2858, %v2843, 0
  %vm2860 = vcmp.lt.s32.totalorder %v2845, 63
  %v2861 = vsel %vm2860, %v2845, 63
  %vm2862 = vcmp.lt.s32.totalorder %v2847, 63
  %v2863 = vsel %vm2862, %v2847, 63
  %vm2864 = vcmp.lt.s32.totalorder %v2849, 63
  %v2865 = vsel %vm2864, %v2849, 63
  %vm2866 = vcmp.lt.s32.totalorder %v2851, 63
  %v2867 = vsel %vm2866, %v2851, 63
  %vm2868 = vcmp.lt.s32.totalorder %v2853, 63
  %v2869 = vsel %vm2868, %v2853, 63
  %vm2870 = vcmp.lt.s32.totalorder %v2855, 63
  %v2871 = vsel %vm2870, %v2855, 63
  %vm2872 = vcmp.lt.s32.totalorder %v2857, 63
  %v2873 = vsel %vm2872, %v2857, 63
  %vm2874 = vcmp.lt.s32.totalorder %v2859, 63
  %v2875 = vsel %vm2874, %v2859, 63
  %2876 = vset.pattern.permute.xlu0 2
  %2877 = vperm.xlu0 %2876, %v2861
  %v2878 = vpop.permute.xlu0 %2877
  %2879 = vset.pattern.permute.xlu0 2
  %2880 = vperm.xlu0 %2879, %v2863
  %v2881 = vpop.permute.xlu0 %2880
  %2882 = vset.pattern.permute.xlu0 2
  %2883 = vperm.xlu0 %2882, %v2865
  %v2884 = vpop.permute.xlu0 %2883
  %2885 = vset.pattern.permute.xlu0 2
  %2886 = vperm.xlu0 %2885, %v2867
  %v2887 = vpop.permute.xlu0 %2886
  %2888 = vset.pattern.permute.xlu0 2
  %2889 = vperm.xlu0 %2888, %v2869
  %v2890 = vpop.permute.xlu0 %2889
  %2891 = vset.pattern.permute.xlu0 2
  %2892 = vperm.xlu0 %2891, %v2871
  %v2893 = vpop.permute.xlu0 %2892
  %2894 = vset.pattern.permute.xlu0 2
  %2895 = vperm.xlu0 %2894, %v2873
  %v2896 = vpop.permute.xlu0 %2895
  %2897 = vset.pattern.permute.xlu0 2
  %2898 = vperm.xlu0 %2897, %v2875
  %v2899 = vpop.permute.xlu0 %2898
  %vm2900 = vcmp.eq.s32.totalorder %v38, %v2878
  %vm2901 = vcmp.eq.s32.totalorder %v38, %v2881
  %vm2902 = vcmp.eq.s32.totalorder %v38, %v2884
  %vm2903 = vcmp.eq.s32.totalorder %v38, %v2887
  %vm2904 = vcmp.eq.s32.totalorder %v38, %v2890
  %vm2905 = vcmp.eq.s32.totalorder %v38, %v2893
  %vm2906 = vcmp.eq.s32.totalorder %v38, %v2896
  %vm2907 = vcmp.eq.s32.totalorder %v38, %v2899
  %v2908 = vsel %vm2900, 1, 0
  %v2909 = vsel %vm2901, 1, 0
  %v2910 = vsel %vm2902, 1, 0
  %v2911 = vsel %vm2903, 1, 0
  %v2912 = vsel %vm2904, 1, 0
  %v2913 = vsel %vm2905, 1, 0
  %v2914 = vsel %vm2906, 1, 0
  %v2915 = vsel %vm2907, 1, 0
  %v2916 = vcvt.s32.f32 %v2908
  %v2917 = vcvt.s32.f32 %v2909
  %v2918 = vcvt.s32.f32 %v2910
  %v2919 = vcvt.s32.f32 %v2911
  %v2920 = vcvt.s32.f32 %v2912
  %v2921 = vcvt.s32.f32 %v2913
  %v2922 = vcvt.s32.f32 %v2914
  %v2923 = vcvt.s32.f32 %v2915
  %2925 = vset.pattern.permute.xlu0 2
  %2926 = vperm.xlu0 %2925, %v2796
  %v2927 = vpop.permute.xlu0 %2926
  %2930 = vset.pattern.permute.xlu0 2
  %2931 = vperm.xlu0 %2930, %v2797
  %v2932 = vpop.permute.xlu0 %2931
  %2935 = vset.pattern.permute.xlu0 2
  %2936 = vperm.xlu0 %2935, %v2798
  %v2937 = vpop.permute.xlu0 %2936
  %2940 = vset.pattern.permute.xlu0 2
  %2941 = vperm.xlu0 %2940, %v2799
  %v2942 = vpop.permute.xlu0 %2941
  %2945 = vset.pattern.permute.xlu0 2
  %2946 = vperm.xlu0 %2945, %v2800
  %v2947 = vpop.permute.xlu0 %2946
  %2950 = vset.pattern.permute.xlu0 2
  %2951 = vperm.xlu0 %2950, %v2801
  %v2952 = vpop.permute.xlu0 %2951
  %2955 = vset.pattern.permute.xlu0 2
  %2956 = vperm.xlu0 %2955, %v2802
  %v2957 = vpop.permute.xlu0 %2956
  %2960 = vset.pattern.permute.xlu0 2
  %2961 = vperm.xlu0 %2960, %v2803
  %v2962 = vpop.permute.xlu0 %2961
  %v2964 = vmul.f32 %v2927, %v242
  %v2965 = vmul.f32 %v2932, %v242
  %v2966 = vmul.f32 %v2937, %v242
  %v2967 = vmul.f32 %v2942, %v242
  %v2968 = vmul.f32 %v2947, %v242
  %v2969 = vmul.f32 %v2952, %v242
  %v2970 = vmul.f32 %v2957, %v242
  %v2971 = vmul.f32 %v2962, %v242
  %v2972 = vadd.f32 %v2964, %v254
  %v2973 = vadd.f32 %v2965, %v254
  %v2974 = vadd.f32 %v2966, %v254
  %v2975 = vadd.f32 %v2967, %v254
  %v2976 = vadd.f32 %v2968, %v254
  %v2977 = vadd.f32 %v2969, %v254
  %v2978 = vadd.f32 %v2970, %v254
  %v2979 = vadd.f32 %v2971, %v254
  %v2980 = vand.u32 2147483647, %v2972
  %vm2981 = vcmp.le.f32.partialorder %v2980, 0.7853982
  %vm2982 = vcmp.lt.s32.totalorder %v2972, 0
  %v2983 = vand.u32 %v2972, 2139095040
  %v2984 = vshrl.u32 %v2983, 23
  %v2985 = vsub.s32 %v2984, 127
  %v2986 = vand.u32 2147483647, %v2972
  %v2987 = vand.u32 %v2986, 8388607
  %v2988 = vor.u32 %v2987, 8388608
  %v2989 = vsub.s32 0, %v2988
  %v2990 = vadd.s32 %v2985, 1
  %vm2991 = vcmp.gt.s32.totalorder %v2990, 0
  %v2992 = vsel %vm2991, %v2990, 0
  %v2993 = vshrl.u32 %v2992, 5
  %v2994 = vand.u32 %v2992, 31
  %v2995 = vsub.s32 32, %v2994
  %v2996 = vshrl.u32 683565275, %v2995
  %v2997 = vshll.u32 683565275, %v2994
  %v2998 = vshrl.u32 2475754826, %v2995
  %v2999 = vor.u32 %v2997, %v2998
  %v3000 = vshll.u32 2475754826, %v2994
  %v3001 = vshrl.u32 2131351028, %v2995
  %v3002 = vor.u32 %v3000, %v3001
  %v3003 = vshll.u32 2131351028, %v2994
  %v3004 = vshrl.u32 2102212464, %v2995
  %v3005 = vor.u32 %v3003, %v3004
  %v3006 = vshll.u32 2102212464, %v2994
  %v3007 = vshrl.u32 920167782, %v2995
  %v3008 = vor.u32 %v3006, %v3007
  %v3009 = vshll.u32 920167782, %v2994
  %v3010 = vshrl.u32 1326507024, %v2995
  %v3011 = vor.u32 %v3009, %v3010
  %vm3012 = vcmp.lt.s32.totalorder %v2993, 1
  %vm3013 = vcmp.lt.s32.totalorder %v2993, 2
  %vm3014 = vcmp.lt.s32.totalorder %v2993, 3
  %vm3015 = vcmp.lt.s32.totalorder %v2993, 4
  %v3016 = vsel %vm3012, %v2996, %v2999
  %v3017 = vsel %vm3015, %v3005, 2102212464
  %v3018 = vsel %vm3014, %v3002, %v3017
  %v3019 = vsel %vm3013, %v3016, %v3018
  %v3020 = vsel %vm3012, %v2999, %v3002
  %v3021 = vsel %vm3015, %v3008, 920167782
  %v3022 = vsel %vm3014, %v3005, %v3021
  %v3023 = vsel %vm3013, %v3020, %v3022
  %v3024 = vsel %vm3012, %v3002, %v3005
  %v3025 = vsel %vm3015, %v3011, 1326507024
  %v3026 = vsel %vm3014, %v3008, %v3025
  %v3027 = vsel %vm3013, %v3024, %v3026
  %v3028 = vshll.u32 %v2988, 8
  %v3029 = vmul.u32.u64.compose %v3028, %v3027
  %v3030 = vextract.low.u32 %v3029
  %v3031 = vextract.high.u32 %v3029
  %v3032 = vmul.u32.u64.compose %v3028, %v3023
  %v3033 = vextract.low.u32 %v3032
  %v3034 = vextract.high.u32 %v3032
  %v3035 = vmul.u32 %v3028, %v3019
  %v3036 = vadd.s32 %v3031, %v3033
  %vm3037 = vc.u32 %v3031, %v3033
  %v3038 = vadd.s32 %v3034, 1
  %v3039 = vsel %vm3037, %v3038, %v3034
  %v3040 = vadd.s32 %v3035, %v3039
  %v3041 = vadd.s32 %v3040, 536870912
  %v3042 = vshrl.u32 %v3041, 30
  %v3043 = vshll.u32 %v3042, 30
  %v3044 = vsub.s32 %v3040, %v3043
  %vm3045 = vcmp.lt.s32.totalorder %v3044, 0
  %v3046 = vsub.s32 0, %v3044
  %v3047 = vsel %vm3045, %v3046, %v3044
  %v3048 = vclz %v3047
  %v3049 = vsub.s32 %v3048, 2
  %vm3050 = vcmp.gt.s32.totalorder 0, %v3049
  %v3051 = vsel %vm3050, 0, %v3049
  %v3052 = vsub.s32 32, %v3051
  %v3053 = vshll.u32 %v3044, %v3051
  %v3054 = vshrl.u32 %v3036, %v3052
  %v3055 = vor.u32 %v3053, %v3054
  %v3056 = vsub.s32 4294967266, %v3051
  %v3057 = vadd.s32 %v3056, 127
  %v3058 = vshll.u32 %v3057, 23
  %v3059 = vor.u32 4788187, %v3058
  %v3060 = vand.u32 2147483647, %v3059
  %v3062 = vcvt.s32.f32 %v3055
  %v3063 = vmul.f32 %v3062, %v3060
  %v3064 = vxor.u32 %v3063, 2147483648
  %v3065 = vsel %vm2982, %v3064, %v3063
  %v3066 = vsub.s32 4, %v3042
  %v3067 = vsel %vm2982, %v3066, %v3042
  %v3068 = vsel %vm2981, %v2972, %v3065
  %v3069 = vsel %vm2981, 0, %v3067
  %v3070 = vcosq.f32.pop %v3068
  %v3071 = vsinq.f32.pop %v3068
  %vm3072 = vweird.f32 %v2972
  %v3073 = vadd.s32 %v3069, 3
  %v3074 = vand.u32 %v3073, 3
  %vm3075 = vcmp.lt.s32.totalorder %v3074, 2
  %vm3076 = vcmp.eq.s32.totalorder %v3074, 0
  %v3077 = vxor.u32 %v3071, 2147483648
  %v3078 = vsel %vm3076, %v3070, %v3077
  %vm3079 = vcmp.eq.s32.totalorder %v3074, 2
  %v3080 = vxor.u32 %v3070, 2147483648
  %v3081 = vsel %vm3079, %v3080, %v3071
  %v3082 = vsel %vm3075, %v3078, %v3081
  %v3083 = vsel %vm3072, nan, %v3082
  %v3084 = vand.u32 2147483647, %v2973
  %vm3085 = vcmp.le.f32.partialorder %v3084, 0.7853982
  %vm3086 = vcmp.lt.s32.totalorder %v2973, 0
  %v3087 = vand.u32 %v2973, 2139095040
  %v3088 = vshrl.u32 %v3087, 23
  %v3089 = vsub.s32 %v3088, 127
  %v3090 = vand.u32 2147483647, %v2973
  %v3091 = vand.u32 %v3090, 8388607
  %v3092 = vor.u32 %v3091, 8388608
  %v3093 = vsub.s32 0, %v3092
  %v3094 = vadd.s32 %v3089, 1
  %vm3095 = vcmp.gt.s32.totalorder %v3094, 0
  %v3096 = vsel %vm3095, %v3094, 0
  %v3097 = vshrl.u32 %v3096, 5
  %v3098 = vand.u32 %v3096, 31
  %v3099 = vsub.s32 32, %v3098
  %v3100 = vshrl.u32 683565275, %v3099
  %v3101 = vshll.u32 683565275, %v3098
  %v3102 = vshrl.u32 2475754826, %v3099
  %v3103 = vor.u32 %v3101, %v3102
  %v3104 = vshll.u32 2475754826, %v3098
  %v3105 = vshrl.u32 2131351028, %v3099
  %v3106 = vor.u32 %v3104, %v3105
  %v3107 = vshll.u32 2131351028, %v3098
  %v3108 = vshrl.u32 2102212464, %v3099
  %v3109 = vor.u32 %v3107, %v3108
  %v3110 = vshll.u32 2102212464, %v3098
  %v3111 = vshrl.u32 920167782, %v3099
  %v3112 = vor.u32 %v3110, %v3111
  %v3113 = vshll.u32 920167782, %v3098
  %v3114 = vshrl.u32 1326507024, %v3099
  %v3115 = vor.u32 %v3113, %v3114
  %vm3116 = vcmp.lt.s32.totalorder %v3097, 1
  %vm3117 = vcmp.lt.s32.totalorder %v3097, 2
  %vm3118 = vcmp.lt.s32.totalorder %v3097, 3
  %vm3119 = vcmp.lt.s32.totalorder %v3097, 4
  %v3120 = vsel %vm3116, %v3100, %v3103
  %v3121 = vsel %vm3119, %v3109, 2102212464
  %v3122 = vsel %vm3118, %v3106, %v3121
  %v3123 = vsel %vm3117, %v3120, %v3122
  %v3124 = vsel %vm3116, %v3103, %v3106
  %v3125 = vsel %vm3119, %v3112, 920167782
  %v3126 = vsel %vm3118, %v3109, %v3125
  %v3127 = vsel %vm3117, %v3124, %v3126
  %v3128 = vsel %vm3116, %v3106, %v3109
  %v3129 = vsel %vm3119, %v3115, 1326507024
  %v3130 = vsel %vm3118, %v3112, %v3129
  %v3131 = vsel %vm3117, %v3128, %v3130
  %v3132 = vshll.u32 %v3092, 8
  %v3133 = vmul.u32.u64.compose %v3132, %v3131
  %v3134 = vextract.low.u32 %v3133
  %v3135 = vextract.high.u32 %v3133
  %v3136 = vmul.u32.u64.compose %v3132, %v3127
  %v3137 = vextract.low.u32 %v3136
  %v3138 = vextract.high.u32 %v3136
  %v3139 = vmul.u32 %v3132, %v3123
  %v3140 = vadd.s32 %v3135, %v3137
  %vm3141 = vc.u32 %v3135, %v3137
  %v3142 = vadd.s32 %v3138, 1
  %v3143 = vsel %vm3141, %v3142, %v3138
  %v3144 = vadd.s32 %v3139, %v3143
  %v3145 = vadd.s32 %v3144, 536870912
  %v3146 = vshrl.u32 %v3145, 30
  %v3147 = vshll.u32 %v3146, 30
  %v3148 = vsub.s32 %v3144, %v3147
  %vm3149 = vcmp.lt.s32.totalorder %v3148, 0
  %v3150 = vsub.s32 0, %v3148
  %v3151 = vsel %vm3149, %v3150, %v3148
  %v3152 = vclz %v3151
  %v3153 = vsub.s32 %v3152, 2
  %vm3154 = vcmp.gt.s32.totalorder 0, %v3153
  %v3155 = vsel %vm3154, 0, %v3153
  %v3156 = vsub.s32 32, %v3155
  %v3157 = vshll.u32 %v3148, %v3155
  %v3158 = vshrl.u32 %v3140, %v3156
  %v3159 = vor.u32 %v3157, %v3158
  %v3160 = vsub.s32 4294967266, %v3155
  %v3161 = vadd.s32 %v3160, 127
  %v3162 = vshll.u32 %v3161, 23
  %v3163 = vor.u32 4788187, %v3162
  %v3164 = vand.u32 2147483647, %v3163
  %v3166 = vcvt.s32.f32 %v3159
  %v3167 = vmul.f32 %v3166, %v3164
  %v3168 = vxor.u32 %v3167, 2147483648
  %v3169 = vsel %vm3086, %v3168, %v3167
  %v3170 = vsub.s32 4, %v3146
  %v3171 = vsel %vm3086, %v3170, %v3146
  %v3172 = vsel %vm3085, %v2973, %v3169
  %v3173 = vsel %vm3085, 0, %v3171
  %v3174 = vcosq.f32.pop %v3172
  %v3175 = vsinq.f32.pop %v3172
  %vm3176 = vweird.f32 %v2973
  %v3177 = vadd.s32 %v3173, 3
  %v3178 = vand.u32 %v3177, 3
  %vm3179 = vcmp.lt.s32.totalorder %v3178, 2
  %vm3180 = vcmp.eq.s32.totalorder %v3178, 0
  %v3181 = vxor.u32 %v3175, 2147483648
  %v3182 = vsel %vm3180, %v3174, %v3181
  %vm3183 = vcmp.eq.s32.totalorder %v3178, 2
  %v3184 = vxor.u32 %v3174, 2147483648
  %v3185 = vsel %vm3183, %v3184, %v3175
  %v3186 = vsel %vm3179, %v3182, %v3185
  %v3187 = vsel %vm3176, nan, %v3186
  %v3188 = vand.u32 2147483647, %v2974
  %vm3189 = vcmp.le.f32.partialorder %v3188, 0.7853982
  %vm3190 = vcmp.lt.s32.totalorder %v2974, 0
  %v3191 = vand.u32 %v2974, 2139095040
  %v3192 = vshrl.u32 %v3191, 23
  %v3193 = vsub.s32 %v3192, 127
  %v3194 = vand.u32 2147483647, %v2974
  %v3195 = vand.u32 %v3194, 8388607
  %v3196 = vor.u32 %v3195, 8388608
  %v3197 = vsub.s32 0, %v3196
  %v3198 = vadd.s32 %v3193, 1
  %vm3199 = vcmp.gt.s32.totalorder %v3198, 0
  %v3200 = vsel %vm3199, %v3198, 0
  %v3201 = vshrl.u32 %v3200, 5
  %v3202 = vand.u32 %v3200, 31
  %v3203 = vsub.s32 32, %v3202
  %v3204 = vshrl.u32 683565275, %v3203
  %v3205 = vshll.u32 683565275, %v3202
  %v3206 = vshrl.u32 2475754826, %v3203
  %v3207 = vor.u32 %v3205, %v3206
  %v3208 = vshll.u32 2475754826, %v3202
  %v3209 = vshrl.u32 2131351028, %v3203
  %v3210 = vor.u32 %v3208, %v3209
  %v3211 = vshll.u32 2131351028, %v3202
  %v3212 = vshrl.u32 2102212464, %v3203
  %v3213 = vor.u32 %v3211, %v3212
  %v3214 = vshll.u32 2102212464, %v3202
  %v3215 = vshrl.u32 920167782, %v3203
  %v3216 = vor.u32 %v3214, %v3215
  %v3217 = vshll.u32 920167782, %v3202
  %v3218 = vshrl.u32 1326507024, %v3203
  %v3219 = vor.u32 %v3217, %v3218
  %vm3220 = vcmp.lt.s32.totalorder %v3201, 1
  %vm3221 = vcmp.lt.s32.totalorder %v3201, 2
  %vm3222 = vcmp.lt.s32.totalorder %v3201, 3
  %vm3223 = vcmp.lt.s32.totalorder %v3201, 4
  %v3224 = vsel %vm3220, %v3204, %v3207
  %v3225 = vsel %vm3223, %v3213, 2102212464
  %v3226 = vsel %vm3222, %v3210, %v3225
  %v3227 = vsel %vm3221, %v3224, %v3226
  %v3228 = vsel %vm3220, %v3207, %v3210
  %v3229 = vsel %vm3223, %v3216, 920167782
  %v3230 = vsel %vm3222, %v3213, %v3229
  %v3231 = vsel %vm3221, %v3228, %v3230
  %v3232 = vsel %vm3220, %v3210, %v3213
  %v3233 = vsel %vm3223, %v3219, 1326507024
  %v3234 = vsel %vm3222, %v3216, %v3233
  %v3235 = vsel %vm3221, %v3232, %v3234
  %v3236 = vshll.u32 %v3196, 8
  %v3237 = vmul.u32.u64.compose %v3236, %v3235
  %v3238 = vextract.low.u32 %v3237
  %v3239 = vextract.high.u32 %v3237
  %v3240 = vmul.u32.u64.compose %v3236, %v3231
  %v3241 = vextract.low.u32 %v3240
  %v3242 = vextract.high.u32 %v3240
  %v3243 = vmul.u32 %v3236, %v3227
  %v3244 = vadd.s32 %v3239, %v3241
  %vm3245 = vc.u32 %v3239, %v3241
  %v3246 = vadd.s32 %v3242, 1
  %v3247 = vsel %vm3245, %v3246, %v3242
  %v3248 = vadd.s32 %v3243, %v3247
  %v3249 = vadd.s32 %v3248, 536870912
  %v3250 = vshrl.u32 %v3249, 30
  %v3251 = vshll.u32 %v3250, 30
  %v3252 = vsub.s32 %v3248, %v3251
  %vm3253 = vcmp.lt.s32.totalorder %v3252, 0
  %v3254 = vsub.s32 0, %v3252
  %v3255 = vsel %vm3253, %v3254, %v3252
  %v3256 = vclz %v3255
  %v3257 = vsub.s32 %v3256, 2
  %vm3258 = vcmp.gt.s32.totalorder 0, %v3257
  %v3259 = vsel %vm3258, 0, %v3257
  %v3260 = vsub.s32 32, %v3259
  %v3261 = vshll.u32 %v3252, %v3259
  %v3262 = vshrl.u32 %v3244, %v3260
  %v3263 = vor.u32 %v3261, %v3262
  %v3264 = vsub.s32 4294967266, %v3259
  %v3265 = vadd.s32 %v3264, 127
  %v3266 = vshll.u32 %v3265, 23
  %v3267 = vor.u32 4788187, %v3266
  %v3268 = vand.u32 2147483647, %v3267
  %v3270 = vcvt.s32.f32 %v3263
  %v3271 = vmul.f32 %v3270, %v3268
  %v3272 = vxor.u32 %v3271, 2147483648
  %v3273 = vsel %vm3190, %v3272, %v3271
  %v3274 = vsub.s32 4, %v3250
  %v3275 = vsel %vm3190, %v3274, %v3250
  %v3276 = vsel %vm3189, %v2974, %v3273
  %v3277 = vsel %vm3189, 0, %v3275
  %v3278 = vcosq.f32.pop %v3276
  %v3279 = vsinq.f32.pop %v3276
  %vm3280 = vweird.f32 %v2974
  %v3281 = vadd.s32 %v3277, 3
  %v3282 = vand.u32 %v3281, 3
  %vm3283 = vcmp.lt.s32.totalorder %v3282, 2
  %vm3284 = vcmp.eq.s32.totalorder %v3282, 0
  %v3285 = vxor.u32 %v3279, 2147483648
  %v3286 = vsel %vm3284, %v3278, %v3285
  %vm3287 = vcmp.eq.s32.totalorder %v3282, 2
  %v3288 = vxor.u32 %v3278, 2147483648
  %v3289 = vsel %vm3287, %v3288, %v3279
  %v3290 = vsel %vm3283, %v3286, %v3289
  %v3291 = vsel %vm3280, nan, %v3290
  %v3292 = vand.u32 2147483647, %v2975
  %vm3293 = vcmp.le.f32.partialorder %v3292, 0.7853982
  %vm3294 = vcmp.lt.s32.totalorder %v2975, 0
  %v3295 = vand.u32 %v2975, 2139095040
  %v3296 = vshrl.u32 %v3295, 23
  %v3297 = vsub.s32 %v3296, 127
  %v3298 = vand.u32 2147483647, %v2975
  %v3299 = vand.u32 %v3298, 8388607
  %v3300 = vor.u32 %v3299, 8388608
  %v3301 = vsub.s32 0, %v3300
  %v3302 = vadd.s32 %v3297, 1
  %vm3303 = vcmp.gt.s32.totalorder %v3302, 0
  %v3304 = vsel %vm3303, %v3302, 0
  %v3305 = vshrl.u32 %v3304, 5
  %v3306 = vand.u32 %v3304, 31
  %v3307 = vsub.s32 32, %v3306
  %v3308 = vshrl.u32 683565275, %v3307
  %v3309 = vshll.u32 683565275, %v3306
  %v3310 = vshrl.u32 2475754826, %v3307
  %v3311 = vor.u32 %v3309, %v3310
  %v3312 = vshll.u32 2475754826, %v3306
  %v3313 = vshrl.u32 2131351028, %v3307
  %v3314 = vor.u32 %v3312, %v3313
  %v3315 = vshll.u32 2131351028, %v3306
  %v3316 = vshrl.u32 2102212464, %v3307
  %v3317 = vor.u32 %v3315, %v3316
  %v3318 = vshll.u32 2102212464, %v3306
  %v3319 = vshrl.u32 920167782, %v3307
  %v3320 = vor.u32 %v3318, %v3319
  %v3321 = vshll.u32 920167782, %v3306
  %v3322 = vshrl.u32 1326507024, %v3307
  %v3323 = vor.u32 %v3321, %v3322
  %vm3324 = vcmp.lt.s32.totalorder %v3305, 1
  %vm3325 = vcmp.lt.s32.totalorder %v3305, 2
  %vm3326 = vcmp.lt.s32.totalorder %v3305, 3
  %vm3327 = vcmp.lt.s32.totalorder %v3305, 4
  %v3328 = vsel %vm3324, %v3308, %v3311
  %v3329 = vsel %vm3327, %v3317, 2102212464
  %v3330 = vsel %vm3326, %v3314, %v3329
  %v3331 = vsel %vm3325, %v3328, %v3330
  %v3332 = vsel %vm3324, %v3311, %v3314
  %v3333 = vsel %vm3327, %v3320, 920167782
  %v3334 = vsel %vm3326, %v3317, %v3333
  %v3335 = vsel %vm3325, %v3332, %v3334
  %v3336 = vsel %vm3324, %v3314, %v3317
  %v3337 = vsel %vm3327, %v3323, 1326507024
  %v3338 = vsel %vm3326, %v3320, %v3337
  %v3339 = vsel %vm3325, %v3336, %v3338
  %v3340 = vshll.u32 %v3300, 8
  %v3341 = vmul.u32.u64.compose %v3340, %v3339
  %v3342 = vextract.low.u32 %v3341
  %v3343 = vextract.high.u32 %v3341
  %v3344 = vmul.u32.u64.compose %v3340, %v3335
  %v3345 = vextract.low.u32 %v3344
  %v3346 = vextract.high.u32 %v3344
  %v3347 = vmul.u32 %v3340, %v3331
  %v3348 = vadd.s32 %v3343, %v3345
  %vm3349 = vc.u32 %v3343, %v3345
  %v3350 = vadd.s32 %v3346, 1
  %v3351 = vsel %vm3349, %v3350, %v3346
  %v3352 = vadd.s32 %v3347, %v3351
  %v3353 = vadd.s32 %v3352, 536870912
  %v3354 = vshrl.u32 %v3353, 30
  %v3355 = vshll.u32 %v3354, 30
  %v3356 = vsub.s32 %v3352, %v3355
  %vm3357 = vcmp.lt.s32.totalorder %v3356, 0
  %v3358 = vsub.s32 0, %v3356
  %v3359 = vsel %vm3357, %v3358, %v3356
  %v3360 = vclz %v3359
  %v3361 = vsub.s32 %v3360, 2
  %vm3362 = vcmp.gt.s32.totalorder 0, %v3361
  %v3363 = vsel %vm3362, 0, %v3361
  %v3364 = vsub.s32 32, %v3363
  %v3365 = vshll.u32 %v3356, %v3363
  %v3366 = vshrl.u32 %v3348, %v3364
  %v3367 = vor.u32 %v3365, %v3366
  %v3368 = vsub.s32 4294967266, %v3363
  %v3369 = vadd.s32 %v3368, 127
  %v3370 = vshll.u32 %v3369, 23
  %v3371 = vor.u32 4788187, %v3370
  %v3372 = vand.u32 2147483647, %v3371
  %v3374 = vcvt.s32.f32 %v3367
  %v3375 = vmul.f32 %v3374, %v3372
  %v3376 = vxor.u32 %v3375, 2147483648
  %v3377 = vsel %vm3294, %v3376, %v3375
  %v3378 = vsub.s32 4, %v3354
  %v3379 = vsel %vm3294, %v3378, %v3354
  %v3380 = vsel %vm3293, %v2975, %v3377
  %v3381 = vsel %vm3293, 0, %v3379
  %v3382 = vcosq.f32.pop %v3380
  %v3383 = vsinq.f32.pop %v3380
  %vm3384 = vweird.f32 %v2975
  %v3385 = vadd.s32 %v3381, 3
  %v3386 = vand.u32 %v3385, 3
  %vm3387 = vcmp.lt.s32.totalorder %v3386, 2
  %vm3388 = vcmp.eq.s32.totalorder %v3386, 0
  %v3389 = vxor.u32 %v3383, 2147483648
  %v3390 = vsel %vm3388, %v3382, %v3389
  %vm3391 = vcmp.eq.s32.totalorder %v3386, 2
  %v3392 = vxor.u32 %v3382, 2147483648
  %v3393 = vsel %vm3391, %v3392, %v3383
  %v3394 = vsel %vm3387, %v3390, %v3393
  %v3395 = vsel %vm3384, nan, %v3394
  %v3396 = vand.u32 2147483647, %v2976
  %vm3397 = vcmp.le.f32.partialorder %v3396, 0.7853982
  %vm3398 = vcmp.lt.s32.totalorder %v2976, 0
  %v3399 = vand.u32 %v2976, 2139095040
  %v3400 = vshrl.u32 %v3399, 23
  %v3401 = vsub.s32 %v3400, 127
  %v3402 = vand.u32 2147483647, %v2976
  %v3403 = vand.u32 %v3402, 8388607
  %v3404 = vor.u32 %v3403, 8388608
  %v3405 = vsub.s32 0, %v3404
  %v3406 = vadd.s32 %v3401, 1
  %vm3407 = vcmp.gt.s32.totalorder %v3406, 0
  %v3408 = vsel %vm3407, %v3406, 0
  %v3409 = vshrl.u32 %v3408, 5
  %v3410 = vand.u32 %v3408, 31
  %v3411 = vsub.s32 32, %v3410
  %v3412 = vshrl.u32 683565275, %v3411
  %v3413 = vshll.u32 683565275, %v3410
  %v3414 = vshrl.u32 2475754826, %v3411
  %v3415 = vor.u32 %v3413, %v3414
  %v3416 = vshll.u32 2475754826, %v3410
  %v3417 = vshrl.u32 2131351028, %v3411
  %v3418 = vor.u32 %v3416, %v3417
  %v3419 = vshll.u32 2131351028, %v3410
  %v3420 = vshrl.u32 2102212464, %v3411
  %v3421 = vor.u32 %v3419, %v3420
  %v3422 = vshll.u32 2102212464, %v3410
  %v3423 = vshrl.u32 920167782, %v3411
  %v3424 = vor.u32 %v3422, %v3423
  %v3425 = vshll.u32 920167782, %v3410
  %v3426 = vshrl.u32 1326507024, %v3411
  %v3427 = vor.u32 %v3425, %v3426
  %vm3428 = vcmp.lt.s32.totalorder %v3409, 1
  %vm3429 = vcmp.lt.s32.totalorder %v3409, 2
  %vm3430 = vcmp.lt.s32.totalorder %v3409, 3
  %vm3431 = vcmp.lt.s32.totalorder %v3409, 4
  %v3432 = vsel %vm3428, %v3412, %v3415
  %v3433 = vsel %vm3431, %v3421, 2102212464
  %v3434 = vsel %vm3430, %v3418, %v3433
  %v3435 = vsel %vm3429, %v3432, %v3434
  %v3436 = vsel %vm3428, %v3415, %v3418
  %v3437 = vsel %vm3431, %v3424, 920167782
  %v3438 = vsel %vm3430, %v3421, %v3437
  %v3439 = vsel %vm3429, %v3436, %v3438
  %v3440 = vsel %vm3428, %v3418, %v3421
  %v3441 = vsel %vm3431, %v3427, 1326507024
  %v3442 = vsel %vm3430, %v3424, %v3441
  %v3443 = vsel %vm3429, %v3440, %v3442
  %v3444 = vshll.u32 %v3404, 8
  %v3445 = vmul.u32.u64.compose %v3444, %v3443
  %v3446 = vextract.low.u32 %v3445
  %v3447 = vextract.high.u32 %v3445
  %v3448 = vmul.u32.u64.compose %v3444, %v3439
  %v3449 = vextract.low.u32 %v3448
  %v3450 = vextract.high.u32 %v3448
  %v3451 = vmul.u32 %v3444, %v3435
  %v3452 = vadd.s32 %v3447, %v3449
  %vm3453 = vc.u32 %v3447, %v3449
  %v3454 = vadd.s32 %v3450, 1
  %v3455 = vsel %vm3453, %v3454, %v3450
  %v3456 = vadd.s32 %v3451, %v3455
  %v3457 = vadd.s32 %v3456, 536870912
  %v3458 = vshrl.u32 %v3457, 30
  %v3459 = vshll.u32 %v3458, 30
  %v3460 = vsub.s32 %v3456, %v3459
  %vm3461 = vcmp.lt.s32.totalorder %v3460, 0
  %v3462 = vsub.s32 0, %v3460
  %v3463 = vsel %vm3461, %v3462, %v3460
  %v3464 = vclz %v3463
  %v3465 = vsub.s32 %v3464, 2
  %vm3466 = vcmp.gt.s32.totalorder 0, %v3465
  %v3467 = vsel %vm3466, 0, %v3465
  %v3468 = vsub.s32 32, %v3467
  %v3469 = vshll.u32 %v3460, %v3467
  %v3470 = vshrl.u32 %v3452, %v3468
  %v3471 = vor.u32 %v3469, %v3470
  %v3472 = vsub.s32 4294967266, %v3467
  %v3473 = vadd.s32 %v3472, 127
  %v3474 = vshll.u32 %v3473, 23
  %v3475 = vor.u32 4788187, %v3474
  %v3476 = vand.u32 2147483647, %v3475
  %v3478 = vcvt.s32.f32 %v3471
  %v3479 = vmul.f32 %v3478, %v3476
  %v3480 = vxor.u32 %v3479, 2147483648
  %v3481 = vsel %vm3398, %v3480, %v3479
  %v3482 = vsub.s32 4, %v3458
  %v3483 = vsel %vm3398, %v3482, %v3458
  %v3484 = vsel %vm3397, %v2976, %v3481
  %v3485 = vsel %vm3397, 0, %v3483
  %v3486 = vcosq.f32.pop %v3484
  %v3487 = vsinq.f32.pop %v3484
  %vm3488 = vweird.f32 %v2976
  %v3489 = vadd.s32 %v3485, 3
  %v3490 = vand.u32 %v3489, 3
  %vm3491 = vcmp.lt.s32.totalorder %v3490, 2
  %vm3492 = vcmp.eq.s32.totalorder %v3490, 0
  %v3493 = vxor.u32 %v3487, 2147483648
  %v3494 = vsel %vm3492, %v3486, %v3493
  %vm3495 = vcmp.eq.s32.totalorder %v3490, 2
  %v3496 = vxor.u32 %v3486, 2147483648
  %v3497 = vsel %vm3495, %v3496, %v3487
  %v3498 = vsel %vm3491, %v3494, %v3497
  %v3499 = vsel %vm3488, nan, %v3498
  %v3500 = vand.u32 2147483647, %v2977
  %vm3501 = vcmp.le.f32.partialorder %v3500, 0.7853982
  %vm3502 = vcmp.lt.s32.totalorder %v2977, 0
  %v3503 = vand.u32 %v2977, 2139095040
  %v3504 = vshrl.u32 %v3503, 23
  %v3505 = vsub.s32 %v3504, 127
  %v3506 = vand.u32 2147483647, %v2977
  %v3507 = vand.u32 %v3506, 8388607
  %v3508 = vor.u32 %v3507, 8388608
  %v3509 = vsub.s32 0, %v3508
  %v3510 = vadd.s32 %v3505, 1
  %vm3511 = vcmp.gt.s32.totalorder %v3510, 0
  %v3512 = vsel %vm3511, %v3510, 0
  %v3513 = vshrl.u32 %v3512, 5
  %v3514 = vand.u32 %v3512, 31
  %v3515 = vsub.s32 32, %v3514
  %v3516 = vshrl.u32 683565275, %v3515
  %v3517 = vshll.u32 683565275, %v3514
  %v3518 = vshrl.u32 2475754826, %v3515
  %v3519 = vor.u32 %v3517, %v3518
  %v3520 = vshll.u32 2475754826, %v3514
  %v3521 = vshrl.u32 2131351028, %v3515
  %v3522 = vor.u32 %v3520, %v3521
  %v3523 = vshll.u32 2131351028, %v3514
  %v3524 = vshrl.u32 2102212464, %v3515
  %v3525 = vor.u32 %v3523, %v3524
  %v3526 = vshll.u32 2102212464, %v3514
  %v3527 = vshrl.u32 920167782, %v3515
  %v3528 = vor.u32 %v3526, %v3527
  %v3529 = vshll.u32 920167782, %v3514
  %v3530 = vshrl.u32 1326507024, %v3515
  %v3531 = vor.u32 %v3529, %v3530
  %vm3532 = vcmp.lt.s32.totalorder %v3513, 1
  %vm3533 = vcmp.lt.s32.totalorder %v3513, 2
  %vm3534 = vcmp.lt.s32.totalorder %v3513, 3
  %vm3535 = vcmp.lt.s32.totalorder %v3513, 4
  %v3536 = vsel %vm3532, %v3516, %v3519
  %v3537 = vsel %vm3535, %v3525, 2102212464
  %v3538 = vsel %vm3534, %v3522, %v3537
  %v3539 = vsel %vm3533, %v3536, %v3538
  %v3540 = vsel %vm3532, %v3519, %v3522
  %v3541 = vsel %vm3535, %v3528, 920167782
  %v3542 = vsel %vm3534, %v3525, %v3541
  %v3543 = vsel %vm3533, %v3540, %v3542
  %v3544 = vsel %vm3532, %v3522, %v3525
  %v3545 = vsel %vm3535, %v3531, 1326507024
  %v3546 = vsel %vm3534, %v3528, %v3545
  %v3547 = vsel %vm3533, %v3544, %v3546
  %v3548 = vshll.u32 %v3508, 8
  %v3549 = vmul.u32.u64.compose %v3548, %v3547
  %v3550 = vextract.low.u32 %v3549
  %v3551 = vextract.high.u32 %v3549
  %v3552 = vmul.u32.u64.compose %v3548, %v3543
  %v3553 = vextract.low.u32 %v3552
  %v3554 = vextract.high.u32 %v3552
  %v3555 = vmul.u32 %v3548, %v3539
  %v3556 = vadd.s32 %v3551, %v3553
  %vm3557 = vc.u32 %v3551, %v3553
  %v3558 = vadd.s32 %v3554, 1
  %v3559 = vsel %vm3557, %v3558, %v3554
  %v3560 = vadd.s32 %v3555, %v3559
  %v3561 = vadd.s32 %v3560, 536870912
  %v3562 = vshrl.u32 %v3561, 30
  %v3563 = vshll.u32 %v3562, 30
  %v3564 = vsub.s32 %v3560, %v3563
  %vm3565 = vcmp.lt.s32.totalorder %v3564, 0
  %v3566 = vsub.s32 0, %v3564
  %v3567 = vsel %vm3565, %v3566, %v3564
  %v3568 = vclz %v3567
  %v3569 = vsub.s32 %v3568, 2
  %vm3570 = vcmp.gt.s32.totalorder 0, %v3569
  %v3571 = vsel %vm3570, 0, %v3569
  %v3572 = vsub.s32 32, %v3571
  %v3573 = vshll.u32 %v3564, %v3571
  %v3574 = vshrl.u32 %v3556, %v3572
  %v3575 = vor.u32 %v3573, %v3574
  %v3576 = vsub.s32 4294967266, %v3571
  %v3577 = vadd.s32 %v3576, 127
  %v3578 = vshll.u32 %v3577, 23
  %v3579 = vor.u32 4788187, %v3578
  %v3580 = vand.u32 2147483647, %v3579
  %v3582 = vcvt.s32.f32 %v3575
  %v3583 = vmul.f32 %v3582, %v3580
  %v3584 = vxor.u32 %v3583, 2147483648
  %v3585 = vsel %vm3502, %v3584, %v3583
  %v3586 = vsub.s32 4, %v3562
  %v3587 = vsel %vm3502, %v3586, %v3562
  %v3588 = vsel %vm3501, %v2977, %v3585
  %v3589 = vsel %vm3501, 0, %v3587
  %v3590 = vcosq.f32.pop %v3588
  %v3591 = vsinq.f32.pop %v3588
  %vm3592 = vweird.f32 %v2977
  %v3593 = vadd.s32 %v3589, 3
  %v3594 = vand.u32 %v3593, 3
  %vm3595 = vcmp.lt.s32.totalorder %v3594, 2
  %vm3596 = vcmp.eq.s32.totalorder %v3594, 0
  %v3597 = vxor.u32 %v3591, 2147483648
  %v3598 = vsel %vm3596, %v3590, %v3597
  %vm3599 = vcmp.eq.s32.totalorder %v3594, 2
  %v3600 = vxor.u32 %v3590, 2147483648
  %v3601 = vsel %vm3599, %v3600, %v3591
  %v3602 = vsel %vm3595, %v3598, %v3601
  %v3603 = vsel %vm3592, nan, %v3602
  %v3604 = vand.u32 2147483647, %v2978
  %vm3605 = vcmp.le.f32.partialorder %v3604, 0.7853982
  %vm3606 = vcmp.lt.s32.totalorder %v2978, 0
  %v3607 = vand.u32 %v2978, 2139095040
  %v3608 = vshrl.u32 %v3607, 23
  %v3609 = vsub.s32 %v3608, 127
  %v3610 = vand.u32 2147483647, %v2978
  %v3611 = vand.u32 %v3610, 8388607
  %v3612 = vor.u32 %v3611, 8388608
  %v3613 = vsub.s32 0, %v3612
  %v3614 = vadd.s32 %v3609, 1
  %vm3615 = vcmp.gt.s32.totalorder %v3614, 0
  %v3616 = vsel %vm3615, %v3614, 0
  %v3617 = vshrl.u32 %v3616, 5
  %v3618 = vand.u32 %v3616, 31
  %v3619 = vsub.s32 32, %v3618
  %v3620 = vshrl.u32 683565275, %v3619
  %v3621 = vshll.u32 683565275, %v3618
  %v3622 = vshrl.u32 2475754826, %v3619
  %v3623 = vor.u32 %v3621, %v3622
  %v3624 = vshll.u32 2475754826, %v3618
  %v3625 = vshrl.u32 2131351028, %v3619
  %v3626 = vor.u32 %v3624, %v3625
  %v3627 = vshll.u32 2131351028, %v3618
  %v3628 = vshrl.u32 2102212464, %v3619
  %v3629 = vor.u32 %v3627, %v3628
  %v3630 = vshll.u32 2102212464, %v3618
  %v3631 = vshrl.u32 920167782, %v3619
  %v3632 = vor.u32 %v3630, %v3631
  %v3633 = vshll.u32 920167782, %v3618
  %v3634 = vshrl.u32 1326507024, %v3619
  %v3635 = vor.u32 %v3633, %v3634
  %vm3636 = vcmp.lt.s32.totalorder %v3617, 1
  %vm3637 = vcmp.lt.s32.totalorder %v3617, 2
  %vm3638 = vcmp.lt.s32.totalorder %v3617, 3
  %vm3639 = vcmp.lt.s32.totalorder %v3617, 4
  %v3640 = vsel %vm3636, %v3620, %v3623
  %v3641 = vsel %vm3639, %v3629, 2102212464
  %v3642 = vsel %vm3638, %v3626, %v3641
  %v3643 = vsel %vm3637, %v3640, %v3642
  %v3644 = vsel %vm3636, %v3623, %v3626
  %v3645 = vsel %vm3639, %v3632, 920167782
  %v3646 = vsel %vm3638, %v3629, %v3645
  %v3647 = vsel %vm3637, %v3644, %v3646
  %v3648 = vsel %vm3636, %v3626, %v3629
  %v3649 = vsel %vm3639, %v3635, 1326507024
  %v3650 = vsel %vm3638, %v3632, %v3649
  %v3651 = vsel %vm3637, %v3648, %v3650
  %v3652 = vshll.u32 %v3612, 8
  %v3653 = vmul.u32.u64.compose %v3652, %v3651
  %v3654 = vextract.low.u32 %v3653
  %v3655 = vextract.high.u32 %v3653
  %v3656 = vmul.u32.u64.compose %v3652, %v3647
  %v3657 = vextract.low.u32 %v3656
  %v3658 = vextract.high.u32 %v3656
  %v3659 = vmul.u32 %v3652, %v3643
  %v3660 = vadd.s32 %v3655, %v3657
  %vm3661 = vc.u32 %v3655, %v3657
  %v3662 = vadd.s32 %v3658, 1
  %v3663 = vsel %vm3661, %v3662, %v3658
  %v3664 = vadd.s32 %v3659, %v3663
  %v3665 = vadd.s32 %v3664, 536870912
  %v3666 = vshrl.u32 %v3665, 30
  %v3667 = vshll.u32 %v3666, 30
  %v3668 = vsub.s32 %v3664, %v3667
  %vm3669 = vcmp.lt.s32.totalorder %v3668, 0
  %v3670 = vsub.s32 0, %v3668
  %v3671 = vsel %vm3669, %v3670, %v3668
  %v3672 = vclz %v3671
  %v3673 = vsub.s32 %v3672, 2
  %vm3674 = vcmp.gt.s32.totalorder 0, %v3673
  %v3675 = vsel %vm3674, 0, %v3673
  %v3676 = vsub.s32 32, %v3675
  %v3677 = vshll.u32 %v3668, %v3675
  %v3678 = vshrl.u32 %v3660, %v3676
  %v3679 = vor.u32 %v3677, %v3678
  %v3680 = vsub.s32 4294967266, %v3675
  %v3681 = vadd.s32 %v3680, 127
  %v3682 = vshll.u32 %v3681, 23
  %v3683 = vor.u32 4788187, %v3682
  %v3684 = vand.u32 2147483647, %v3683
  %v3686 = vcvt.s32.f32 %v3679
  %v3687 = vmul.f32 %v3686, %v3684
  %v3688 = vxor.u32 %v3687, 2147483648
  %v3689 = vsel %vm3606, %v3688, %v3687
  %v3690 = vsub.s32 4, %v3666
  %v3691 = vsel %vm3606, %v3690, %v3666
  %v3692 = vsel %vm3605, %v2978, %v3689
  %v3693 = vsel %vm3605, 0, %v3691
  %v3694 = vcosq.f32.pop %v3692
  %v3695 = vsinq.f32.pop %v3692
  %vm3696 = vweird.f32 %v2978
  %v3697 = vadd.s32 %v3693, 3
  %v3698 = vand.u32 %v3697, 3
  %vm3699 = vcmp.lt.s32.totalorder %v3698, 2
  %vm3700 = vcmp.eq.s32.totalorder %v3698, 0
  %v3701 = vxor.u32 %v3695, 2147483648
  %v3702 = vsel %vm3700, %v3694, %v3701
  %vm3703 = vcmp.eq.s32.totalorder %v3698, 2
  %v3704 = vxor.u32 %v3694, 2147483648
  %v3705 = vsel %vm3703, %v3704, %v3695
  %v3706 = vsel %vm3699, %v3702, %v3705
  %v3707 = vsel %vm3696, nan, %v3706
  %v3708 = vand.u32 2147483647, %v2979
  %vm3709 = vcmp.le.f32.partialorder %v3708, 0.7853982
  %vm3710 = vcmp.lt.s32.totalorder %v2979, 0
  %v3711 = vand.u32 %v2979, 2139095040
  %v3712 = vshrl.u32 %v3711, 23
  %v3713 = vsub.s32 %v3712, 127
  %v3714 = vand.u32 2147483647, %v2979
  %v3715 = vand.u32 %v3714, 8388607
  %v3716 = vor.u32 %v3715, 8388608
  %v3717 = vsub.s32 0, %v3716
  %v3718 = vadd.s32 %v3713, 1
  %vm3719 = vcmp.gt.s32.totalorder %v3718, 0
  %v3720 = vsel %vm3719, %v3718, 0
  %v3721 = vshrl.u32 %v3720, 5
  %v3722 = vand.u32 %v3720, 31
  %v3723 = vsub.s32 32, %v3722
  %v3724 = vshrl.u32 683565275, %v3723
  %v3725 = vshll.u32 683565275, %v3722
  %v3726 = vshrl.u32 2475754826, %v3723
  %v3727 = vor.u32 %v3725, %v3726
  %v3728 = vshll.u32 2475754826, %v3722
  %v3729 = vshrl.u32 2131351028, %v3723
  %v3730 = vor.u32 %v3728, %v3729
  %v3731 = vshll.u32 2131351028, %v3722
  %v3732 = vshrl.u32 2102212464, %v3723
  %v3733 = vor.u32 %v3731, %v3732
  %v3734 = vshll.u32 2102212464, %v3722
  %v3735 = vshrl.u32 920167782, %v3723
  %v3736 = vor.u32 %v3734, %v3735
  %v3737 = vshll.u32 920167782, %v3722
  %v3738 = vshrl.u32 1326507024, %v3723
  %v3739 = vor.u32 %v3737, %v3738
  %vm3740 = vcmp.lt.s32.totalorder %v3721, 1
  %vm3741 = vcmp.lt.s32.totalorder %v3721, 2
  %vm3742 = vcmp.lt.s32.totalorder %v3721, 3
  %vm3743 = vcmp.lt.s32.totalorder %v3721, 4
  %v3744 = vsel %vm3740, %v3724, %v3727
  %v3745 = vsel %vm3743, %v3733, 2102212464
  %v3746 = vsel %vm3742, %v3730, %v3745
  %v3747 = vsel %vm3741, %v3744, %v3746
  %v3748 = vsel %vm3740, %v3727, %v3730
  %v3749 = vsel %vm3743, %v3736, 920167782
  %v3750 = vsel %vm3742, %v3733, %v3749
  %v3751 = vsel %vm3741, %v3748, %v3750
  %v3752 = vsel %vm3740, %v3730, %v3733
  %v3753 = vsel %vm3743, %v3739, 1326507024
  %v3754 = vsel %vm3742, %v3736, %v3753
  %v3755 = vsel %vm3741, %v3752, %v3754
  %v3756 = vshll.u32 %v3716, 8
  %v3757 = vmul.u32.u64.compose %v3756, %v3755
  %v3758 = vextract.low.u32 %v3757
  %v3759 = vextract.high.u32 %v3757
  %v3760 = vmul.u32.u64.compose %v3756, %v3751
  %v3761 = vextract.low.u32 %v3760
  %v3762 = vextract.high.u32 %v3760
  %v3763 = vmul.u32 %v3756, %v3747
  %v3764 = vadd.s32 %v3759, %v3761
  %vm3765 = vc.u32 %v3759, %v3761
  %v3766 = vadd.s32 %v3762, 1
  %v3767 = vsel %vm3765, %v3766, %v3762
  %v3768 = vadd.s32 %v3763, %v3767
  %v3769 = vadd.s32 %v3768, 536870912
  %v3770 = vshrl.u32 %v3769, 30
  %v3771 = vshll.u32 %v3770, 30
  %v3772 = vsub.s32 %v3768, %v3771
  %vm3773 = vcmp.lt.s32.totalorder %v3772, 0
  %v3774 = vsub.s32 0, %v3772
  %v3775 = vsel %vm3773, %v3774, %v3772
  %v3776 = vclz %v3775
  %v3777 = vsub.s32 %v3776, 2
  %vm3778 = vcmp.gt.s32.totalorder 0, %v3777
  %v3779 = vsel %vm3778, 0, %v3777
  %v3780 = vsub.s32 32, %v3779
  %v3781 = vshll.u32 %v3772, %v3779
  %v3782 = vshrl.u32 %v3764, %v3780
  %v3783 = vor.u32 %v3781, %v3782
  %v3784 = vsub.s32 4294967266, %v3779
  %v3785 = vadd.s32 %v3784, 127
  %v3786 = vshll.u32 %v3785, 23
  %v3787 = vor.u32 4788187, %v3786
  %v3788 = vand.u32 2147483647, %v3787
  %v3790 = vcvt.s32.f32 %v3783
  %v3791 = vmul.f32 %v3790, %v3788
  %v3792 = vxor.u32 %v3791, 2147483648
  %v3793 = vsel %vm3710, %v3792, %v3791
  %v3794 = vsub.s32 4, %v3770
  %v3795 = vsel %vm3710, %v3794, %v3770
  %v3796 = vsel %vm3709, %v2979, %v3793
  %v3797 = vsel %vm3709, 0, %v3795
  %v3798 = vcosq.f32.pop %v3796
  %v3799 = vsinq.f32.pop %v3796
  %vm3800 = vweird.f32 %v2979
  %v3801 = vadd.s32 %v3797, 3
  %v3802 = vand.u32 %v3801, 3
  %vm3803 = vcmp.lt.s32.totalorder %v3802, 2
  %vm3804 = vcmp.eq.s32.totalorder %v3802, 0
  %v3805 = vxor.u32 %v3799, 2147483648
  %v3806 = vsel %vm3804, %v3798, %v3805
  %vm3807 = vcmp.eq.s32.totalorder %v3802, 2
  %v3808 = vxor.u32 %v3798, 2147483648
  %v3809 = vsel %vm3807, %v3808, %v3799
  %v3810 = vsel %vm3803, %v3806, %v3809
  %v3811 = vsel %vm3800, nan, %v3810
  %v3812 = vadd.f32 %v2916, %v3083
  %v3813 = vadd.f32 %v2917, %v3187
  %v3814 = vadd.f32 %v2918, %v3291
  %v3815 = vadd.f32 %v2919, %v3395
  %v3816 = vadd.f32 %v2920, %v3499
  %v3817 = vadd.f32 %v2921, %v3603
  %v3818 = vadd.f32 %v2922, %v3707
  %v3819 = vadd.f32 %v2923, %v3811
  %3820 = vmatprep.subr.mxu0 0.0
  %3821 = vmatpush1.msra.mxu0 %v17
  %3822 = vmatprep.subr.mxu0 0.0
  %3823 = vmatpush1.msra.mxu0 %v18
  %3824 = vmatprep.subr.mxu0 0.0
  %3825 = vmatpush1.msra.mxu0 %v19
  %3826 = vmatprep.subr.mxu0 0.0
  %3827 = vmatpush1.msra.mxu0 %v20
  %3828 = vmatprep.subr.mxu0 0.0
  %3829 = vmatpush1.msra.mxu0 %v21
  %3830 = vmatprep.subr.mxu0 0.0
  %3831 = vmatpush1.msra.mxu0 %v22
  %3832 = vmatprep.subr.mxu0 0.0
  %3833 = vmatpush1.msra.mxu0 %v23
  %3834 = vmatprep.subr.mxu0 0.0
  %3835 = vmatpush1.msra.mxu0 %v24
  %3836 = vmatprep.subr.mxu0 0.0
  %3837 = vmatpush1.msra.mxu0 %v25
  %3838 = vmatprep.subr.mxu0 0.0
  %3839 = vmatpush1.msra.mxu0 %v26
  %3840 = vmatprep.subr.mxu0 0.0
  %3841 = vmatpush1.msra.mxu0 %v27
  %3842 = vmatprep.subr.mxu0 0.0
  %3843 = vmatpush1.msra.mxu0 %v28
  %3844 = vmatprep.subr.mxu0 0.0
  %3845 = vmatpush1.msra.mxu0 %v29
  %3846 = vmatprep.subr.mxu0 0.0
  %3847 = vmatpush1.msra.mxu0 %v30
  %3848 = vmatprep.subr.mxu0 0.0
  %3849 = vmatpush1.msra.mxu0 %v31
  %3850 = vmatprep.subr.mxu0 0.0
  %3851 = vmatpush1.msra.mxu0 %v32
  %3852 = vmatprep.subr.mxu0 0.0
  %3853 = vmatpush1.msra.mxu0 0.0
  %3854 = vmatprep.subr.mxu0 0.0
  %3855 = vmatpush1.msra.mxu0 0.0
  %3856 = vmatprep.subr.mxu0 0.0
  %3857 = vmatpush1.msra.mxu0 0.0
  %3858 = vmatprep.subr.mxu0 0.0
  %3859 = vmatpush1.msra.mxu0 0.0
  %3860 = vmatprep.subr.mxu0 0.0
  %3861 = vmatpush1.msra.mxu0 0.0
  %3862 = vmatprep.subr.mxu0 0.0
  %3863 = vmatpush1.msra.mxu0 0.0
  %3864 = vmatprep.subr.mxu0 0.0
  %3865 = vmatpush1.msra.mxu0 0.0
  %3866 = vmatprep.subr.mxu0 0.0
  %3867 = vmatpush1.msra.mxu0 0.0
  %3868 = vmatprep.subr.mxu0 0.0
  %3869 = vmatpush1.msra.mxu0 0.0
  %3870 = vmatprep.subr.mxu0 0.0
  %3871 = vmatpush1.msra.mxu0 0.0
  %3872 = vmatprep.subr.mxu0 0.0
  %3873 = vmatpush1.msra.mxu0 0.0
  %3874 = vmatprep.subr.mxu0 0.0
  %3875 = vmatpush1.msra.mxu0 0.0
  %3876 = vmatprep.subr.mxu0 0.0
  %3877 = vmatpush1.msra.mxu0 0.0
  %3878 = vmatprep.subr.mxu0 0.0
  %3879 = vmatpush1.msra.mxu0 0.0
  %3880 = vmatprep.subr.mxu0 0.0
  %3881 = vmatpush1.msra.mxu0 0.0
  %3882 = vmatprep.subr.mxu0 0.0
  %3883 = vmatpush1.msra.mxu0 0.0
  %3884 = vmatprep.mubr.f32.mxu0 0.0
  %3885 = vmatmul.mubr.f32.gmra.mrb[0].mxu0 %v3812
  %v3886 = vpop.f32.mrb[0].mxu0
  %v3887 = vadd.f32 0.0, %v3886
  %v3888 = vpop.f32.mrb[0].mxu0
  %3889 = vmatprep.mubr.f32.mxu0 0.0
  %3890 = vmatmul.mubr.f32.gmra.mrb[0].mxu0 %v3813
  %v3891 = vpop.f32.mrb[0].mxu0
  %v3892 = vadd.f32 0.0, %v3891
  %v3893 = vpop.f32.mrb[0].mxu0
  %3894 = vmatprep.mubr.f32.mxu0 0.0
  %3895 = vmatmul.mubr.f32.gmra.mrb[0].mxu0 %v3814
  %v3896 = vpop.f32.mrb[0].mxu0
  %v3897 = vadd.f32 0.0, %v3896
  %v3898 = vpop.f32.mrb[0].mxu0
  %3899 = vmatprep.mubr.f32.mxu0 0.0
  %3900 = vmatmul.mubr.f32.gmra.mrb[0].mxu0 %v3815
  %v3901 = vpop.f32.mrb[0].mxu0
  %v3902 = vadd.f32 0.0, %v3901
  %v3903 = vpop.f32.mrb[0].mxu0
  %3904 = vmatprep.mubr.f32.mxu0 0.0
  %3905 = vmatmul.mubr.f32.gmra.mrb[0].mxu0 %v3816
  %v3906 = vpop.f32.mrb[0].mxu0
  %v3907 = vadd.f32 0.0, %v3906
  %v3908 = vpop.f32.mrb[0].mxu0
  %3909 = vmatprep.mubr.f32.mxu0 0.0
  %3910 = vmatmul.mubr.f32.gmra.mrb[0].mxu0 %v3817
  %v3911 = vpop.f32.mrb[0].mxu0
  %v3912 = vadd.f32 0.0, %v3911
  %v3913 = vpop.f32.mrb[0].mxu0
  %3914 = vmatprep.mubr.f32.mxu0 0.0
  %3915 = vmatmul.mubr.f32.gmra.mrb[0].mxu0 %v3818
  %v3916 = vpop.f32.mrb[0].mxu0
  %v3917 = vadd.f32 0.0, %v3916
  %v3918 = vpop.f32.mrb[0].mxu0
  %3919 = vmatprep.mubr.f32.mxu0 0.0
  %3920 = vmatmul.mubr.f32.gmra.mrb[0].mxu0 %v3819
  %v3921 = vpop.f32.mrb[0].mxu0
  %v3922 = vadd.f32 0.0, %v3921
  %v3923 = vpop.f32.mrb[0].mxu0
  %3924 = vdwg.mxu0
  %3926 = vset.pattern.permute.xlu0 2
  %3927 = vperm.xlu0 %3926, %v2788
  %v3928 = vpop.permute.xlu0 %3927
  %3931 = vset.pattern.permute.xlu0 2
  %3932 = vperm.xlu0 %3931, %v2789
  %v3933 = vpop.permute.xlu0 %3932
  %3936 = vset.pattern.permute.xlu0 2
  %3937 = vperm.xlu0 %3936, %v2790
  %v3938 = vpop.permute.xlu0 %3937
  %3941 = vset.pattern.permute.xlu0 2
  %3942 = vperm.xlu0 %3941, %v2791
  %v3943 = vpop.permute.xlu0 %3942
  %3946 = vset.pattern.permute.xlu0 2
  %3947 = vperm.xlu0 %3946, %v2792
  %v3948 = vpop.permute.xlu0 %3947
  %3951 = vset.pattern.permute.xlu0 2
  %3952 = vperm.xlu0 %3951, %v2793
  %v3953 = vpop.permute.xlu0 %3952
  %3956 = vset.pattern.permute.xlu0 2
  %3957 = vperm.xlu0 %3956, %v2794
  %v3958 = vpop.permute.xlu0 %3957
  %3961 = vset.pattern.permute.xlu0 2
  %3962 = vperm.xlu0 %3961, %v2795
  %v3963 = vpop.permute.xlu0 %3962
  %v3965 = vmul.f32 %v3887, %v3928
  %v3966 = vmul.f32 %v3892, %v3933
  %v3967 = vmul.f32 %v3897, %v3938
  %v3968 = vmul.f32 %v3902, %v3943
  %v3969 = vmul.f32 %v3907, %v3948
  %v3970 = vmul.f32 %v3912, %v3953
  %v3971 = vmul.f32 %v3917, %v3958
  %v3972 = vmul.f32 %v3922, %v3963
  %v3973 = vsel %vm1256, %v3965, 0.0
  %3974 = vadd.xlane.f32.xlu0 %v3973
  %v3975 = vpop.xlane.xlu0 %3974
  %v3976 = vsel %vm1256, %v3966, 0.0
  %3977 = vadd.xlane.f32.xlu0 %v3976
  %v3978 = vpop.xlane.xlu0 %3977
  %v3979 = vsel %vm1256, %v3967, 0.0
  %3980 = vadd.xlane.f32.xlu0 %v3979
  %v3981 = vpop.xlane.xlu0 %3980
  %v3982 = vsel %vm1256, %v3968, 0.0
  %3983 = vadd.xlane.f32.xlu0 %v3982
  %v3984 = vpop.xlane.xlu0 %3983
  %v3985 = vsel %vm1256, %v3969, 0.0
  %3986 = vadd.xlane.f32.xlu0 %v3985
  %v3987 = vpop.xlane.xlu0 %3986
  %v3988 = vsel %vm1256, %v3970, 0.0
  %3989 = vadd.xlane.f32.xlu0 %v3988
  %v3990 = vpop.xlane.xlu0 %3989
  %v3991 = vsel %vm1256, %v3971, 0.0
  %3992 = vadd.xlane.f32.xlu0 %v3991
  %v3993 = vpop.xlane.xlu0 %3992
  %v3994 = vsel %vm1256, %v3972, 0.0
  %3995 = vadd.xlane.f32.xlu0 %v3994
  %v3996 = vpop.xlane.xlu0 %3995
  %v3997 = vmul.f32 %v3975, %v1281
  %v3998 = vmul.f32 %v3978, %v1281
  %v3999 = vmul.f32 %v3981, %v1281
  %v4000 = vmul.f32 %v3984, %v1281
  %v4001 = vmul.f32 %v3987, %v1281
  %v4002 = vmul.f32 %v3990, %v1281
  %v4003 = vmul.f32 %v3993, %v1281
  %v4004 = vmul.f32 %v3996, %v1281
  %v4005 = vsub.f32 %v3965, %v3997
  %v4006 = vsub.f32 %v3966, %v3998
  %v4007 = vsub.f32 %v3967, %v3999
  %v4008 = vsub.f32 %v3968, %v4000
  %v4009 = vsub.f32 %v3969, %v4001
  %v4010 = vsub.f32 %v3970, %v4002
  %v4011 = vsub.f32 %v3971, %v4003
  %v4012 = vsub.f32 %v3972, %v4004
  %v4013 = vmul.f32 %v4005, %v4005
  %v4014 = vmul.f32 %v4006, %v4006
  %v4015 = vmul.f32 %v4007, %v4007
  %v4016 = vmul.f32 %v4008, %v4008
  %v4017 = vmul.f32 %v4009, %v4009
  %v4018 = vmul.f32 %v4010, %v4010
  %v4019 = vmul.f32 %v4011, %v4011
  %v4020 = vmul.f32 %v4012, %v4012
  %v4021 = vsel %vm1256, %v4013, 0.0
  %4022 = vadd.xlane.f32.xlu0 %v4021
  %v4023 = vpop.xlane.xlu0 %4022
  %v4024 = vsel %vm1256, %v4014, 0.0
  %4025 = vadd.xlane.f32.xlu0 %v4024
  %v4026 = vpop.xlane.xlu0 %4025
  %v4027 = vsel %vm1256, %v4015, 0.0
  %4028 = vadd.xlane.f32.xlu0 %v4027
  %v4029 = vpop.xlane.xlu0 %4028
  %v4030 = vsel %vm1256, %v4016, 0.0
  %4031 = vadd.xlane.f32.xlu0 %v4030
  %v4032 = vpop.xlane.xlu0 %4031
  %v4033 = vsel %vm1256, %v4017, 0.0
  %4034 = vadd.xlane.f32.xlu0 %v4033
  %v4035 = vpop.xlane.xlu0 %4034
  %v4036 = vsel %vm1256, %v4018, 0.0
  %4037 = vadd.xlane.f32.xlu0 %v4036
  %v4038 = vpop.xlane.xlu0 %4037
  %v4039 = vsel %vm1256, %v4019, 0.0
  %4040 = vadd.xlane.f32.xlu0 %v4039
  %v4041 = vpop.xlane.xlu0 %4040
  %v4042 = vsel %vm1256, %v4020, 0.0
  %4043 = vadd.xlane.f32.xlu0 %v4042
  %v4044 = vpop.xlane.xlu0 %4043
  %v4045 = vmul.f32 %v4023, %v1281
  %v4046 = vmul.f32 %v4026, %v1281
  %v4047 = vmul.f32 %v4029, %v1281
  %v4048 = vmul.f32 %v4032, %v1281
  %v4049 = vmul.f32 %v4035, %v1281
  %v4050 = vmul.f32 %v4038, %v1281
  %v4051 = vmul.f32 %v4041, %v1281
  %v4052 = vmul.f32 %v4044, %v1281
  %v4053 = vadd.f32 %v4045, 1e-05
  %v4054 = vadd.f32 %v4046, 1e-05
  %v4055 = vadd.f32 %v4047, 1e-05
  %v4056 = vadd.f32 %v4048, 1e-05
  %v4057 = vadd.f32 %v4049, 1e-05
  %v4058 = vadd.f32 %v4050, 1e-05
  %v4059 = vadd.f32 %v4051, 1e-05
  %v4060 = vadd.f32 %v4052, 1e-05
  %v4061 = vrsqrt.pop %v4053
  %v4062 = vrsqrt.pop %v4054
  %v4063 = vrsqrt.pop %v4055
  %v4064 = vrsqrt.pop %v4056
  %v4065 = vrsqrt.pop %v4057
  %v4066 = vrsqrt.pop %v4058
  %v4067 = vrsqrt.pop %v4059
  %v4068 = vrsqrt.pop %v4060
  %v4069 = vmul.f32 %v4005, %v4061
  %v4070 = vmul.f32 %v4006, %v4062
  %v4071 = vmul.f32 %v4007, %v4063
  %v4072 = vmul.f32 %v4008, %v4064
  %v4073 = vmul.f32 %v4009, %v4065
  %v4074 = vmul.f32 %v4010, %v4066
  %v4075 = vmul.f32 %v4011, %v4067
  %v4076 = vmul.f32 %v4012, %v4068
  %v4077 = vmul.f32 %v4069, %v1365
  %v4078 = vmul.f32 %v4070, %v1365
  %v4079 = vmul.f32 %v4071, %v1365
  %v4080 = vmul.f32 %v4072, %v1365
  %v4081 = vmul.f32 %v4073, %v1365
  %v4082 = vmul.f32 %v4074, %v1365
  %v4083 = vmul.f32 %v4075, %v1365
  %v4084 = vmul.f32 %v4076, %v1365
  %v4085 = vadd.f32 %v4077, %v1377
  %v4086 = vadd.f32 %v4078, %v1377
  %v4087 = vadd.f32 %v4079, %v1377
  %v4088 = vadd.f32 %v4080, %v1377
  %v4089 = vadd.f32 %v4081, %v1377
  %v4090 = vadd.f32 %v4082, %v1377
  %v4091 = vadd.f32 %v4083, %v1377
  %v4092 = vadd.f32 %v4084, %v1377
  %4101 = vrot.lane.b32.xlu0 %v4085, 64
  %v4102 = vpop.permute.xlu0 %4101
  %4103 = vrot.lane.b32.xlu0 %v4086, 64
  %v4104 = vpop.permute.xlu0 %4103
  %4105 = vrot.lane.b32.xlu0 %v4087, 64
  %v4106 = vpop.permute.xlu0 %4105
  %4107 = vrot.lane.b32.xlu0 %v4088, 64
  %v4108 = vpop.permute.xlu0 %4107
  %4109 = vrot.lane.b32.xlu0 %v4089, 64
  %v4110 = vpop.permute.xlu0 %4109
  %4111 = vrot.lane.b32.xlu0 %v4090, 64
  %v4112 = vpop.permute.xlu0 %4111
  %4113 = vrot.lane.b32.xlu0 %v4091, 64
  %v4114 = vpop.permute.xlu0 %4113
  %4115 = vrot.lane.b32.xlu0 %v4092, 64
  %v4116 = vpop.permute.xlu0 %4115
  %vm4125 = vcmask 785920
  %4126 = vst.msk [vmem:[%s4] sm:$0xff] %vm4125, %v4102
  %4127 = vst.msk [vmem:[%s4 + $0x8] sm:$0xff] %vm4125, %v4104
  %4128 = vst.msk [vmem:[%s4 + $0x10] sm:$0xff] %vm4125, %v4106
  %4129 = vst.msk [vmem:[%s4 + $0x18] sm:$0xff] %vm4125, %v4108
  %4130 = vst.msk [vmem:[%s4 + $0x20] sm:$0xff] %vm4125, %v4110
  %4131 = vst.msk [vmem:[%s4 + $0x28] sm:$0xff] %vm4125, %v4112
  %4132 = vst.msk [vmem:[%s4 + $0x30] sm:$0xff] %vm4125, %v4114
  %4133 = vst.msk [vmem:[%s4 + $0x38] sm:$0xff] %vm4125, %v4116
  %v4134 = vld [vmem:[%s0] sm:$0xff]
  %v4135 = vld [vmem:[%s0 + $0x8] sm:$0xff]
  %v4136 = vld [vmem:[%s0 + $0x10] sm:$0xff]
  %v4137 = vld [vmem:[%s0 + $0x18] sm:$0xff]
  %v4138 = vld [vmem:[%s0 + $0x20] sm:$0xff]
  %v4139 = vld [vmem:[%s0 + $0x28] sm:$0xff]
  %v4140 = vld [vmem:[%s0 + $0x30] sm:$0xff]
  %v4141 = vld [vmem:[%s0 + $0x38] sm:$0xff]
  %vm4142 = vcmp.gt.f32.partialorder %v4134, 0.0
  %vm4143 = vcmp.gt.f32.partialorder %v4135, 0.0
  %vm4144 = vcmp.gt.f32.partialorder %v4136, 0.0
  %vm4145 = vcmp.gt.f32.partialorder %v4137, 0.0
  %vm4146 = vcmp.gt.f32.partialorder %v4138, 0.0
  %vm4147 = vcmp.gt.f32.partialorder %v4139, 0.0
  %vm4148 = vcmp.gt.f32.partialorder %v4140, 0.0
  %vm4149 = vcmp.gt.f32.partialorder %v4141, 0.0
  %v4150 = vsel %vm4142, 1, 0
  %v4151 = vsel %vm4143, 1, 0
  %v4152 = vsel %vm4144, 1, 0
  %v4153 = vsel %vm4145, 1, 0
  %v4154 = vsel %vm4146, 1, 0
  %v4155 = vsel %vm4147, 1, 0
  %v4156 = vsel %vm4148, 1, 0
  %v4157 = vsel %vm4149, 1, 0
  %v4158 = vcvt.s32.f32 %v4150
  %v4159 = vcvt.s32.f32 %v4151
  %v4160 = vcvt.s32.f32 %v4152
  %v4161 = vcvt.s32.f32 %v4153
  %v4162 = vcvt.s32.f32 %v4154
  %v4163 = vcvt.s32.f32 %v4155
  %v4164 = vcvt.s32.f32 %v4156
  %v4165 = vcvt.s32.f32 %v4157
  %v4166 = vsel %vm4142, %v4134, 1.0
  %v4167 = vsel %vm4143, %v4135, 1.0
  %v4168 = vsel %vm4144, %v4136, 1.0
  %v4169 = vsel %vm4145, %v4137, 1.0
  %v4170 = vsel %vm4146, %v4138, 1.0
  %v4171 = vsel %vm4147, %v4139, 1.0
  %v4172 = vsel %vm4148, %v4140, 1.0
  %v4173 = vsel %vm4149, %v4141, 1.0
  %v4174 = vadd.f32 %v4166, 1.0
  %v4175 = vadd.f32 %v4167, 1.0
  %v4176 = vadd.f32 %v4168, 1.0
  %v4177 = vadd.f32 %v4169, 1.0
  %v4178 = vadd.f32 %v4170, 1.0
  %v4179 = vadd.f32 %v4171, 1.0
  %v4180 = vadd.f32 %v4172, 1.0
  %v4181 = vadd.f32 %v4173, 1.0
  %v4182 = vlog2.pop %v4174
  %v4183 = vmul.f32 %v4182, 0.6931472
  %v4184 = vlog2.pop %v4175
  %v4185 = vmul.f32 %v4184, 0.6931472
  %v4186 = vlog2.pop %v4176
  %v4187 = vmul.f32 %v4186, 0.6931472
  %v4188 = vlog2.pop %v4177
  %v4189 = vmul.f32 %v4188, 0.6931472
  %v4190 = vlog2.pop %v4178
  %v4191 = vmul.f32 %v4190, 0.6931472
  %v4192 = vlog2.pop %v4179
  %v4193 = vmul.f32 %v4192, 0.6931472
  %v4194 = vlog2.pop %v4180
  %v4195 = vmul.f32 %v4194, 0.6931472
  %v4196 = vlog2.pop %v4181
  %v4197 = vmul.f32 %v4196, 0.6931472
  %v4198 = vmul.f32 %v4183, 4.0
  %v4199 = vmul.f32 %v4185, 4.0
  %v4200 = vmul.f32 %v4187, 4.0
  %v4201 = vmul.f32 %v4189, 4.0
  %v4202 = vmul.f32 %v4191, 4.0
  %v4203 = vmul.f32 %v4193, 4.0
  %v4204 = vmul.f32 %v4195, 4.0
  %v4205 = vmul.f32 %v4197, 4.0
  %v4206 = vcvt.f32.s32.to.zero.pseudo %v4198
  %v4207 = vcvt.f32.s32.to.zero.pseudo %v4199
  %v4208 = vcvt.f32.s32.to.zero.pseudo %v4200
  %v4209 = vcvt.f32.s32.to.zero.pseudo %v4201
  %v4210 = vcvt.f32.s32.to.zero.pseudo %v4202
  %v4211 = vcvt.f32.s32.to.zero.pseudo %v4203
  %v4212 = vcvt.f32.s32.to.zero.pseudo %v4204
  %v4213 = vcvt.f32.s32.to.zero.pseudo %v4205
  %vm4214 = vcmp.gt.s32.totalorder %v4206, 0
  %v4215 = vsel %vm4214, %v4206, 0
  %vm4216 = vcmp.gt.s32.totalorder %v4207, 0
  %v4217 = vsel %vm4216, %v4207, 0
  %vm4218 = vcmp.gt.s32.totalorder %v4208, 0
  %v4219 = vsel %vm4218, %v4208, 0
  %vm4220 = vcmp.gt.s32.totalorder %v4209, 0
  %v4221 = vsel %vm4220, %v4209, 0
  %vm4222 = vcmp.gt.s32.totalorder %v4210, 0
  %v4223 = vsel %vm4222, %v4210, 0
  %vm4224 = vcmp.gt.s32.totalorder %v4211, 0
  %v4225 = vsel %vm4224, %v4211, 0
  %vm4226 = vcmp.gt.s32.totalorder %v4212, 0
  %v4227 = vsel %vm4226, %v4212, 0
  %vm4228 = vcmp.gt.s32.totalorder %v4213, 0
  %v4229 = vsel %vm4228, %v4213, 0
  %vm4230 = vcmp.lt.s32.totalorder %v4215, 63
  %v4231 = vsel %vm4230, %v4215, 63
  %vm4232 = vcmp.lt.s32.totalorder %v4217, 63
  %v4233 = vsel %vm4232, %v4217, 63
  %vm4234 = vcmp.lt.s32.totalorder %v4219, 63
  %v4235 = vsel %vm4234, %v4219, 63
  %vm4236 = vcmp.lt.s32.totalorder %v4221, 63
  %v4237 = vsel %vm4236, %v4221, 63
  %vm4238 = vcmp.lt.s32.totalorder %v4223, 63
  %v4239 = vsel %vm4238, %v4223, 63
  %vm4240 = vcmp.lt.s32.totalorder %v4225, 63
  %v4241 = vsel %vm4240, %v4225, 63
  %vm4242 = vcmp.lt.s32.totalorder %v4227, 63
  %v4243 = vsel %vm4242, %v4227, 63
  %vm4244 = vcmp.lt.s32.totalorder %v4229, 63
  %v4245 = vsel %vm4244, %v4229, 63
  %4246 = vset.pattern.permute.xlu0 3
  %4247 = vperm.xlu0 %4246, %v4231
  %v4248 = vpop.permute.xlu0 %4247
  %4249 = vset.pattern.permute.xlu0 3
  %4250 = vperm.xlu0 %4249, %v4233
  %v4251 = vpop.permute.xlu0 %4250
  %4252 = vset.pattern.permute.xlu0 3
  %4253 = vperm.xlu0 %4252, %v4235
  %v4254 = vpop.permute.xlu0 %4253
  %4255 = vset.pattern.permute.xlu0 3
  %4256 = vperm.xlu0 %4255, %v4237
  %v4257 = vpop.permute.xlu0 %4256
  %4258 = vset.pattern.permute.xlu0 3
  %4259 = vperm.xlu0 %4258, %v4239
  %v4260 = vpop.permute.xlu0 %4259
  %4261 = vset.pattern.permute.xlu0 3
  %4262 = vperm.xlu0 %4261, %v4241
  %v4263 = vpop.permute.xlu0 %4262
  %4264 = vset.pattern.permute.xlu0 3
  %4265 = vperm.xlu0 %4264, %v4243
  %v4266 = vpop.permute.xlu0 %4265
  %4267 = vset.pattern.permute.xlu0 3
  %4268 = vperm.xlu0 %4267, %v4245
  %v4269 = vpop.permute.xlu0 %4268
  %vm4270 = vcmp.eq.s32.totalorder %v38, %v4248
  %vm4271 = vcmp.eq.s32.totalorder %v38, %v4251
  %vm4272 = vcmp.eq.s32.totalorder %v38, %v4254
  %vm4273 = vcmp.eq.s32.totalorder %v38, %v4257
  %vm4274 = vcmp.eq.s32.totalorder %v38, %v4260
  %vm4275 = vcmp.eq.s32.totalorder %v38, %v4263
  %vm4276 = vcmp.eq.s32.totalorder %v38, %v4266
  %vm4277 = vcmp.eq.s32.totalorder %v38, %v4269
  %v4278 = vsel %vm4270, 1, 0
  %v4279 = vsel %vm4271, 1, 0
  %v4280 = vsel %vm4272, 1, 0
  %v4281 = vsel %vm4273, 1, 0
  %v4282 = vsel %vm4274, 1, 0
  %v4283 = vsel %vm4275, 1, 0
  %v4284 = vsel %vm4276, 1, 0
  %v4285 = vsel %vm4277, 1, 0
  %v4286 = vcvt.s32.f32 %v4278
  %v4287 = vcvt.s32.f32 %v4279
  %v4288 = vcvt.s32.f32 %v4280
  %v4289 = vcvt.s32.f32 %v4281
  %v4290 = vcvt.s32.f32 %v4282
  %v4291 = vcvt.s32.f32 %v4283
  %v4292 = vcvt.s32.f32 %v4284
  %v4293 = vcvt.s32.f32 %v4285
  %4295 = vset.pattern.permute.xlu0 3
  %4296 = vperm.xlu0 %4295, %v4166
  %v4297 = vpop.permute.xlu0 %4296
  %4300 = vset.pattern.permute.xlu0 3
  %4301 = vperm.xlu0 %4300, %v4167
  %v4302 = vpop.permute.xlu0 %4301
  %4305 = vset.pattern.permute.xlu0 3
  %4306 = vperm.xlu0 %4305, %v4168
  %v4307 = vpop.permute.xlu0 %4306
  %4310 = vset.pattern.permute.xlu0 3
  %4311 = vperm.xlu0 %4310, %v4169
  %v4312 = vpop.permute.xlu0 %4311
  %4315 = vset.pattern.permute.xlu0 3
  %4316 = vperm.xlu0 %4315, %v4170
  %v4317 = vpop.permute.xlu0 %4316
  %4320 = vset.pattern.permute.xlu0 3
  %4321 = vperm.xlu0 %4320, %v4171
  %v4322 = vpop.permute.xlu0 %4321
  %4325 = vset.pattern.permute.xlu0 3
  %4326 = vperm.xlu0 %4325, %v4172
  %v4327 = vpop.permute.xlu0 %4326
  %4330 = vset.pattern.permute.xlu0 3
  %4331 = vperm.xlu0 %4330, %v4173
  %v4332 = vpop.permute.xlu0 %4331
  %v4334 = vmul.f32 %v4297, %v242
  %v4335 = vmul.f32 %v4302, %v242
  %v4336 = vmul.f32 %v4307, %v242
  %v4337 = vmul.f32 %v4312, %v242
  %v4338 = vmul.f32 %v4317, %v242
  %v4339 = vmul.f32 %v4322, %v242
  %v4340 = vmul.f32 %v4327, %v242
  %v4341 = vmul.f32 %v4332, %v242
  %v4342 = vadd.f32 %v4334, %v254
  %v4343 = vadd.f32 %v4335, %v254
  %v4344 = vadd.f32 %v4336, %v254
  %v4345 = vadd.f32 %v4337, %v254
  %v4346 = vadd.f32 %v4338, %v254
  %v4347 = vadd.f32 %v4339, %v254
  %v4348 = vadd.f32 %v4340, %v254
  %v4349 = vadd.f32 %v4341, %v254
  %v4350 = vand.u32 2147483647, %v4342
  %vm4351 = vcmp.le.f32.partialorder %v4350, 0.7853982
  %vm4352 = vcmp.lt.s32.totalorder %v4342, 0
  %v4353 = vand.u32 %v4342, 2139095040
  %v4354 = vshrl.u32 %v4353, 23
  %v4355 = vsub.s32 %v4354, 127
  %v4356 = vand.u32 2147483647, %v4342
  %v4357 = vand.u32 %v4356, 8388607
  %v4358 = vor.u32 %v4357, 8388608
  %v4359 = vsub.s32 0, %v4358
  %v4360 = vadd.s32 %v4355, 1
  %vm4361 = vcmp.gt.s32.totalorder %v4360, 0
  %v4362 = vsel %vm4361, %v4360, 0
  %v4363 = vshrl.u32 %v4362, 5
  %v4364 = vand.u32 %v4362, 31
  %v4365 = vsub.s32 32, %v4364
  %v4366 = vshrl.u32 683565275, %v4365
  %v4367 = vshll.u32 683565275, %v4364
  %v4368 = vshrl.u32 2475754826, %v4365
  %v4369 = vor.u32 %v4367, %v4368
  %v4370 = vshll.u32 2475754826, %v4364
  %v4371 = vshrl.u32 2131351028, %v4365
  %v4372 = vor.u32 %v4370, %v4371
  %v4373 = vshll.u32 2131351028, %v4364
  %v4374 = vshrl.u32 2102212464, %v4365
  %v4375 = vor.u32 %v4373, %v4374
  %v4376 = vshll.u32 2102212464, %v4364
  %v4377 = vshrl.u32 920167782, %v4365
  %v4378 = vor.u32 %v4376, %v4377
  %v4379 = vshll.u32 920167782, %v4364
  %v4380 = vshrl.u32 1326507024, %v4365
  %v4381 = vor.u32 %v4379, %v4380
  %vm4382 = vcmp.lt.s32.totalorder %v4363, 1
  %vm4383 = vcmp.lt.s32.totalorder %v4363, 2
  %vm4384 = vcmp.lt.s32.totalorder %v4363, 3
  %vm4385 = vcmp.lt.s32.totalorder %v4363, 4
  %v4386 = vsel %vm4382, %v4366, %v4369
  %v4387 = vsel %vm4385, %v4375, 2102212464
  %v4388 = vsel %vm4384, %v4372, %v4387
  %v4389 = vsel %vm4383, %v4386, %v4388
  %v4390 = vsel %vm4382, %v4369, %v4372
  %v4391 = vsel %vm4385, %v4378, 920167782
  %v4392 = vsel %vm4384, %v4375, %v4391
  %v4393 = vsel %vm4383, %v4390, %v4392
  %v4394 = vsel %vm4382, %v4372, %v4375
  %v4395 = vsel %vm4385, %v4381, 1326507024
  %v4396 = vsel %vm4384, %v4378, %v4395
  %v4397 = vsel %vm4383, %v4394, %v4396
  %v4398 = vshll.u32 %v4358, 8
  %v4399 = vmul.u32.u64.compose %v4398, %v4397
  %v4400 = vextract.low.u32 %v4399
  %v4401 = vextract.high.u32 %v4399
  %v4402 = vmul.u32.u64.compose %v4398, %v4393
  %v4403 = vextract.low.u32 %v4402
  %v4404 = vextract.high.u32 %v4402
  %v4405 = vmul.u32 %v4398, %v4389
  %v4406 = vadd.s32 %v4401, %v4403
  %vm4407 = vc.u32 %v4401, %v4403
  %v4408 = vadd.s32 %v4404, 1
  %v4409 = vsel %vm4407, %v4408, %v4404
  %v4410 = vadd.s32 %v4405, %v4409
  %v4411 = vadd.s32 %v4410, 536870912
  %v4412 = vshrl.u32 %v4411, 30
  %v4413 = vshll.u32 %v4412, 30
  %v4414 = vsub.s32 %v4410, %v4413
  %vm4415 = vcmp.lt.s32.totalorder %v4414, 0
  %v4416 = vsub.s32 0, %v4414
  %v4417 = vsel %vm4415, %v4416, %v4414
  %v4418 = vclz %v4417
  %v4419 = vsub.s32 %v4418, 2
  %vm4420 = vcmp.gt.s32.totalorder 0, %v4419
  %v4421 = vsel %vm4420, 0, %v4419
  %v4422 = vsub.s32 32, %v4421
  %v4423 = vshll.u32 %v4414, %v4421
  %v4424 = vshrl.u32 %v4406, %v4422
  %v4425 = vor.u32 %v4423, %v4424
  %v4426 = vsub.s32 4294967266, %v4421
  %v4427 = vadd.s32 %v4426, 127
  %v4428 = vshll.u32 %v4427, 23
  %v4429 = vor.u32 4788187, %v4428
  %v4430 = vand.u32 2147483647, %v4429
  %v4432 = vcvt.s32.f32 %v4425
  %v4433 = vmul.f32 %v4432, %v4430
  %v4434 = vxor.u32 %v4433, 2147483648
  %v4435 = vsel %vm4352, %v4434, %v4433
  %v4436 = vsub.s32 4, %v4412
  %v4437 = vsel %vm4352, %v4436, %v4412
  %v4438 = vsel %vm4351, %v4342, %v4435
  %v4439 = vsel %vm4351, 0, %v4437
  %v4440 = vcosq.f32.pop %v4438
  %v4441 = vsinq.f32.pop %v4438
  %vm4442 = vweird.f32 %v4342
  %v4443 = vadd.s32 %v4439, 3
  %v4444 = vand.u32 %v4443, 3
  %vm4445 = vcmp.lt.s32.totalorder %v4444, 2
  %vm4446 = vcmp.eq.s32.totalorder %v4444, 0
  %v4447 = vxor.u32 %v4441, 2147483648
  %v4448 = vsel %vm4446, %v4440, %v4447
  %vm4449 = vcmp.eq.s32.totalorder %v4444, 2
  %v4450 = vxor.u32 %v4440, 2147483648
  %v4451 = vsel %vm4449, %v4450, %v4441
  %v4452 = vsel %vm4445, %v4448, %v4451
  %v4453 = vsel %vm4442, nan, %v4452
  %v4454 = vand.u32 2147483647, %v4343
  %vm4455 = vcmp.le.f32.partialorder %v4454, 0.7853982
  %vm4456 = vcmp.lt.s32.totalorder %v4343, 0
  %v4457 = vand.u32 %v4343, 2139095040
  %v4458 = vshrl.u32 %v4457, 23
  %v4459 = vsub.s32 %v4458, 127
  %v4460 = vand.u32 2147483647, %v4343
  %v4461 = vand.u32 %v4460, 8388607
  %v4462 = vor.u32 %v4461, 8388608
  %v4463 = vsub.s32 0, %v4462
  %v4464 = vadd.s32 %v4459, 1
  %vm4465 = vcmp.gt.s32.totalorder %v4464, 0
  %v4466 = vsel %vm4465, %v4464, 0
  %v4467 = vshrl.u32 %v4466, 5
  %v4468 = vand.u32 %v4466, 31
  %v4469 = vsub.s32 32, %v4468
  %v4470 = vshrl.u32 683565275, %v4469
  %v4471 = vshll.u32 683565275, %v4468
  %v4472 = vshrl.u32 2475754826, %v4469
  %v4473 = vor.u32 %v4471, %v4472
  %v4474 = vshll.u32 2475754826, %v4468
  %v4475 = vshrl.u32 2131351028, %v4469
  %v4476 = vor.u32 %v4474, %v4475
  %v4477 = vshll.u32 2131351028, %v4468
  %v4478 = vshrl.u32 2102212464, %v4469
  %v4479 = vor.u32 %v4477, %v4478
  %v4480 = vshll.u32 2102212464, %v4468
  %v4481 = vshrl.u32 920167782, %v4469
  %v4482 = vor.u32 %v4480, %v4481
  %v4483 = vshll.u32 920167782, %v4468
  %v4484 = vshrl.u32 1326507024, %v4469
  %v4485 = vor.u32 %v4483, %v4484
  %vm4486 = vcmp.lt.s32.totalorder %v4467, 1
  %vm4487 = vcmp.lt.s32.totalorder %v4467, 2
  %vm4488 = vcmp.lt.s32.totalorder %v4467, 3
  %vm4489 = vcmp.lt.s32.totalorder %v4467, 4
  %v4490 = vsel %vm4486, %v4470, %v4473
  %v4491 = vsel %vm4489, %v4479, 2102212464
  %v4492 = vsel %vm4488, %v4476, %v4491
  %v4493 = vsel %vm4487, %v4490, %v4492
  %v4494 = vsel %vm4486, %v4473, %v4476
  %v4495 = vsel %vm4489, %v4482, 920167782
  %v4496 = vsel %vm4488, %v4479, %v4495
  %v4497 = vsel %vm4487, %v4494, %v4496
  %v4498 = vsel %vm4486, %v4476, %v4479
  %v4499 = vsel %vm4489, %v4485, 1326507024
  %v4500 = vsel %vm4488, %v4482, %v4499
  %v4501 = vsel %vm4487, %v4498, %v4500
  %v4502 = vshll.u32 %v4462, 8
  %v4503 = vmul.u32.u64.compose %v4502, %v4501
  %v4504 = vextract.low.u32 %v4503
  %v4505 = vextract.high.u32 %v4503
  %v4506 = vmul.u32.u64.compose %v4502, %v4497
  %v4507 = vextract.low.u32 %v4506
  %v4508 = vextract.high.u32 %v4506
  %v4509 = vmul.u32 %v4502, %v4493
  %v4510 = vadd.s32 %v4505, %v4507
  %vm4511 = vc.u32 %v4505, %v4507
  %v4512 = vadd.s32 %v4508, 1
  %v4513 = vsel %vm4511, %v4512, %v4508
  %v4514 = vadd.s32 %v4509, %v4513
  %v4515 = vadd.s32 %v4514, 536870912
  %v4516 = vshrl.u32 %v4515, 30
  %v4517 = vshll.u32 %v4516, 30
  %v4518 = vsub.s32 %v4514, %v4517
  %vm4519 = vcmp.lt.s32.totalorder %v4518, 0
  %v4520 = vsub.s32 0, %v4518
  %v4521 = vsel %vm4519, %v4520, %v4518
  %v4522 = vclz %v4521
  %v4523 = vsub.s32 %v4522, 2
  %vm4524 = vcmp.gt.s32.totalorder 0, %v4523
  %v4525 = vsel %vm4524, 0, %v4523
  %v4526 = vsub.s32 32, %v4525
  %v4527 = vshll.u32 %v4518, %v4525
  %v4528 = vshrl.u32 %v4510, %v4526
  %v4529 = vor.u32 %v4527, %v4528
  %v4530 = vsub.s32 4294967266, %v4525
  %v4531 = vadd.s32 %v4530, 127
  %v4532 = vshll.u32 %v4531, 23
  %v4533 = vor.u32 4788187, %v4532
  %v4534 = vand.u32 2147483647, %v4533
  %v4536 = vcvt.s32.f32 %v4529
  %v4537 = vmul.f32 %v4536, %v4534
  %v4538 = vxor.u32 %v4537, 2147483648
  %v4539 = vsel %vm4456, %v4538, %v4537
  %v4540 = vsub.s32 4, %v4516
  %v4541 = vsel %vm4456, %v4540, %v4516
  %v4542 = vsel %vm4455, %v4343, %v4539
  %v4543 = vsel %vm4455, 0, %v4541
  %v4544 = vcosq.f32.pop %v4542
  %v4545 = vsinq.f32.pop %v4542
  %vm4546 = vweird.f32 %v4343
  %v4547 = vadd.s32 %v4543, 3
  %v4548 = vand.u32 %v4547, 3
  %vm4549 = vcmp.lt.s32.totalorder %v4548, 2
  %vm4550 = vcmp.eq.s32.totalorder %v4548, 0
  %v4551 = vxor.u32 %v4545, 2147483648
  %v4552 = vsel %vm4550, %v4544, %v4551
  %vm4553 = vcmp.eq.s32.totalorder %v4548, 2
  %v4554 = vxor.u32 %v4544, 2147483648
  %v4555 = vsel %vm4553, %v4554, %v4545
  %v4556 = vsel %vm4549, %v4552, %v4555
  %v4557 = vsel %vm4546, nan, %v4556
  %v4558 = vand.u32 2147483647, %v4344
  %vm4559 = vcmp.le.f32.partialorder %v4558, 0.7853982
  %vm4560 = vcmp.lt.s32.totalorder %v4344, 0
  %v4561 = vand.u32 %v4344, 2139095040
  %v4562 = vshrl.u32 %v4561, 23
  %v4563 = vsub.s32 %v4562, 127
  %v4564 = vand.u32 2147483647, %v4344
  %v4565 = vand.u32 %v4564, 8388607
  %v4566 = vor.u32 %v4565, 8388608
  %v4567 = vsub.s32 0, %v4566
  %v4568 = vadd.s32 %v4563, 1
  %vm4569 = vcmp.gt.s32.totalorder %v4568, 0
  %v4570 = vsel %vm4569, %v4568, 0
  %v4571 = vshrl.u32 %v4570, 5
  %v4572 = vand.u32 %v4570, 31
  %v4573 = vsub.s32 32, %v4572
  %v4574 = vshrl.u32 683565275, %v4573
  %v4575 = vshll.u32 683565275, %v4572
  %v4576 = vshrl.u32 2475754826, %v4573
  %v4577 = vor.u32 %v4575, %v4576
  %v4578 = vshll.u32 2475754826, %v4572
  %v4579 = vshrl.u32 2131351028, %v4573
  %v4580 = vor.u32 %v4578, %v4579
  %v4581 = vshll.u32 2131351028, %v4572
  %v4582 = vshrl.u32 2102212464, %v4573
  %v4583 = vor.u32 %v4581, %v4582
  %v4584 = vshll.u32 2102212464, %v4572
  %v4585 = vshrl.u32 920167782, %v4573
  %v4586 = vor.u32 %v4584, %v4585
  %v4587 = vshll.u32 920167782, %v4572
  %v4588 = vshrl.u32 1326507024, %v4573
  %v4589 = vor.u32 %v4587, %v4588
  %vm4590 = vcmp.lt.s32.totalorder %v4571, 1
  %vm4591 = vcmp.lt.s32.totalorder %v4571, 2
  %vm4592 = vcmp.lt.s32.totalorder %v4571, 3
  %vm4593 = vcmp.lt.s32.totalorder %v4571, 4
  %v4594 = vsel %vm4590, %v4574, %v4577
  %v4595 = vsel %vm4593, %v4583, 2102212464
  %v4596 = vsel %vm4592, %v4580, %v4595
  %v4597 = vsel %vm4591, %v4594, %v4596
  %v4598 = vsel %vm4590, %v4577, %v4580
  %v4599 = vsel %vm4593, %v4586, 920167782
  %v4600 = vsel %vm4592, %v4583, %v4599
  %v4601 = vsel %vm4591, %v4598, %v4600
  %v4602 = vsel %vm4590, %v4580, %v4583
  %v4603 = vsel %vm4593, %v4589, 1326507024
  %v4604 = vsel %vm4592, %v4586, %v4603
  %v4605 = vsel %vm4591, %v4602, %v4604
  %v4606 = vshll.u32 %v4566, 8
  %v4607 = vmul.u32.u64.compose %v4606, %v4605
  %v4608 = vextract.low.u32 %v4607
  %v4609 = vextract.high.u32 %v4607
  %v4610 = vmul.u32.u64.compose %v4606, %v4601
  %v4611 = vextract.low.u32 %v4610
  %v4612 = vextract.high.u32 %v4610
  %v4613 = vmul.u32 %v4606, %v4597
  %v4614 = vadd.s32 %v4609, %v4611
  %vm4615 = vc.u32 %v4609, %v4611
  %v4616 = vadd.s32 %v4612, 1
  %v4617 = vsel %vm4615, %v4616, %v4612
  %v4618 = vadd.s32 %v4613, %v4617
  %v4619 = vadd.s32 %v4618, 536870912
  %v4620 = vshrl.u32 %v4619, 30
  %v4621 = vshll.u32 %v4620, 30
  %v4622 = vsub.s32 %v4618, %v4621
  %vm4623 = vcmp.lt.s32.totalorder %v4622, 0
  %v4624 = vsub.s32 0, %v4622
  %v4625 = vsel %vm4623, %v4624, %v4622
  %v4626 = vclz %v4625
  %v4627 = vsub.s32 %v4626, 2
  %vm4628 = vcmp.gt.s32.totalorder 0, %v4627
  %v4629 = vsel %vm4628, 0, %v4627
  %v4630 = vsub.s32 32, %v4629
  %v4631 = vshll.u32 %v4622, %v4629
  %v4632 = vshrl.u32 %v4614, %v4630
  %v4633 = vor.u32 %v4631, %v4632
  %v4634 = vsub.s32 4294967266, %v4629
  %v4635 = vadd.s32 %v4634, 127
  %v4636 = vshll.u32 %v4635, 23
  %v4637 = vor.u32 4788187, %v4636
  %v4638 = vand.u32 2147483647, %v4637
  %v4640 = vcvt.s32.f32 %v4633
  %v4641 = vmul.f32 %v4640, %v4638
  %v4642 = vxor.u32 %v4641, 2147483648
  %v4643 = vsel %vm4560, %v4642, %v4641
  %v4644 = vsub.s32 4, %v4620
  %v4645 = vsel %vm4560, %v4644, %v4620
  %v4646 = vsel %vm4559, %v4344, %v4643
  %v4647 = vsel %vm4559, 0, %v4645
  %v4648 = vcosq.f32.pop %v4646
  %v4649 = vsinq.f32.pop %v4646
  %vm4650 = vweird.f32 %v4344
  %v4651 = vadd.s32 %v4647, 3
  %v4652 = vand.u32 %v4651, 3
  %vm4653 = vcmp.lt.s32.totalorder %v4652, 2
  %vm4654 = vcmp.eq.s32.totalorder %v4652, 0
  %v4655 = vxor.u32 %v4649, 2147483648
  %v4656 = vsel %vm4654, %v4648, %v4655
  %vm4657 = vcmp.eq.s32.totalorder %v4652, 2
  %v4658 = vxor.u32 %v4648, 2147483648
  %v4659 = vsel %vm4657, %v4658, %v4649
  %v4660 = vsel %vm4653, %v4656, %v4659
  %v4661 = vsel %vm4650, nan, %v4660
  %v4662 = vand.u32 2147483647, %v4345
  %vm4663 = vcmp.le.f32.partialorder %v4662, 0.7853982
  %vm4664 = vcmp.lt.s32.totalorder %v4345, 0
  %v4665 = vand.u32 %v4345, 2139095040
  %v4666 = vshrl.u32 %v4665, 23
  %v4667 = vsub.s32 %v4666, 127
  %v4668 = vand.u32 2147483647, %v4345
  %v4669 = vand.u32 %v4668, 8388607
  %v4670 = vor.u32 %v4669, 8388608
  %v4671 = vsub.s32 0, %v4670
  %v4672 = vadd.s32 %v4667, 1
  %vm4673 = vcmp.gt.s32.totalorder %v4672, 0
  %v4674 = vsel %vm4673, %v4672, 0
  %v4675 = vshrl.u32 %v4674, 5
  %v4676 = vand.u32 %v4674, 31
  %v4677 = vsub.s32 32, %v4676
  %v4678 = vshrl.u32 683565275, %v4677
  %v4679 = vshll.u32 683565275, %v4676
  %v4680 = vshrl.u32 2475754826, %v4677
  %v4681 = vor.u32 %v4679, %v4680
  %v4682 = vshll.u32 2475754826, %v4676
  %v4683 = vshrl.u32 2131351028, %v4677
  %v4684 = vor.u32 %v4682, %v4683
  %v4685 = vshll.u32 2131351028, %v4676
  %v4686 = vshrl.u32 2102212464, %v4677
  %v4687 = vor.u32 %v4685, %v4686
  %v4688 = vshll.u32 2102212464, %v4676
  %v4689 = vshrl.u32 920167782, %v4677
  %v4690 = vor.u32 %v4688, %v4689
  %v4691 = vshll.u32 920167782, %v4676
  %v4692 = vshrl.u32 1326507024, %v4677
  %v4693 = vor.u32 %v4691, %v4692
  %vm4694 = vcmp.lt.s32.totalorder %v4675, 1
  %vm4695 = vcmp.lt.s32.totalorder %v4675, 2
  %vm4696 = vcmp.lt.s32.totalorder %v4675, 3
  %vm4697 = vcmp.lt.s32.totalorder %v4675, 4
  %v4698 = vsel %vm4694, %v4678, %v4681
  %v4699 = vsel %vm4697, %v4687, 2102212464
  %v4700 = vsel %vm4696, %v4684, %v4699
  %v4701 = vsel %vm4695, %v4698, %v4700
  %v4702 = vsel %vm4694, %v4681, %v4684
  %v4703 = vsel %vm4697, %v4690, 920167782
  %v4704 = vsel %vm4696, %v4687, %v4703
  %v4705 = vsel %vm4695, %v4702, %v4704
  %v4706 = vsel %vm4694, %v4684, %v4687
  %v4707 = vsel %vm4697, %v4693, 1326507024
  %v4708 = vsel %vm4696, %v4690, %v4707
  %v4709 = vsel %vm4695, %v4706, %v4708
  %v4710 = vshll.u32 %v4670, 8
  %v4711 = vmul.u32.u64.compose %v4710, %v4709
  %v4712 = vextract.low.u32 %v4711
  %v4713 = vextract.high.u32 %v4711
  %v4714 = vmul.u32.u64.compose %v4710, %v4705
  %v4715 = vextract.low.u32 %v4714
  %v4716 = vextract.high.u32 %v4714
  %v4717 = vmul.u32 %v4710, %v4701
  %v4718 = vadd.s32 %v4713, %v4715
  %vm4719 = vc.u32 %v4713, %v4715
  %v4720 = vadd.s32 %v4716, 1
  %v4721 = vsel %vm4719, %v4720, %v4716
  %v4722 = vadd.s32 %v4717, %v4721
  %v4723 = vadd.s32 %v4722, 536870912
  %v4724 = vshrl.u32 %v4723, 30
  %v4725 = vshll.u32 %v4724, 30
  %v4726 = vsub.s32 %v4722, %v4725
  %vm4727 = vcmp.lt.s32.totalorder %v4726, 0
  %v4728 = vsub.s32 0, %v4726
  %v4729 = vsel %vm4727, %v4728, %v4726
  %v4730 = vclz %v4729
  %v4731 = vsub.s32 %v4730, 2
  %vm4732 = vcmp.gt.s32.totalorder 0, %v4731
  %v4733 = vsel %vm4732, 0, %v4731
  %v4734 = vsub.s32 32, %v4733
  %v4735 = vshll.u32 %v4726, %v4733
  %v4736 = vshrl.u32 %v4718, %v4734
  %v4737 = vor.u32 %v4735, %v4736
  %v4738 = vsub.s32 4294967266, %v4733
  %v4739 = vadd.s32 %v4738, 127
  %v4740 = vshll.u32 %v4739, 23
  %v4741 = vor.u32 4788187, %v4740
  %v4742 = vand.u32 2147483647, %v4741
  %v4744 = vcvt.s32.f32 %v4737
  %v4745 = vmul.f32 %v4744, %v4742
  %v4746 = vxor.u32 %v4745, 2147483648
  %v4747 = vsel %vm4664, %v4746, %v4745
  %v4748 = vsub.s32 4, %v4724
  %v4749 = vsel %vm4664, %v4748, %v4724
  %v4750 = vsel %vm4663, %v4345, %v4747
  %v4751 = vsel %vm4663, 0, %v4749
  %v4752 = vcosq.f32.pop %v4750
  %v4753 = vsinq.f32.pop %v4750
  %vm4754 = vweird.f32 %v4345
  %v4755 = vadd.s32 %v4751, 3
  %v4756 = vand.u32 %v4755, 3
  %vm4757 = vcmp.lt.s32.totalorder %v4756, 2
  %vm4758 = vcmp.eq.s32.totalorder %v4756, 0
  %v4759 = vxor.u32 %v4753, 2147483648
  %v4760 = vsel %vm4758, %v4752, %v4759
  %vm4761 = vcmp.eq.s32.totalorder %v4756, 2
  %v4762 = vxor.u32 %v4752, 2147483648
  %v4763 = vsel %vm4761, %v4762, %v4753
  %v4764 = vsel %vm4757, %v4760, %v4763
  %v4765 = vsel %vm4754, nan, %v4764
  %v4766 = vand.u32 2147483647, %v4346
  %vm4767 = vcmp.le.f32.partialorder %v4766, 0.7853982
  %vm4768 = vcmp.lt.s32.totalorder %v4346, 0
  %v4769 = vand.u32 %v4346, 2139095040
  %v4770 = vshrl.u32 %v4769, 23
  %v4771 = vsub.s32 %v4770, 127
  %v4772 = vand.u32 2147483647, %v4346
  %v4773 = vand.u32 %v4772, 8388607
  %v4774 = vor.u32 %v4773, 8388608
  %v4775 = vsub.s32 0, %v4774
  %v4776 = vadd.s32 %v4771, 1
  %vm4777 = vcmp.gt.s32.totalorder %v4776, 0
  %v4778 = vsel %vm4777, %v4776, 0
  %v4779 = vshrl.u32 %v4778, 5
  %v4780 = vand.u32 %v4778, 31
  %v4781 = vsub.s32 32, %v4780
  %v4782 = vshrl.u32 683565275, %v4781
  %v4783 = vshll.u32 683565275, %v4780
  %v4784 = vshrl.u32 2475754826, %v4781
  %v4785 = vor.u32 %v4783, %v4784
  %v4786 = vshll.u32 2475754826, %v4780
  %v4787 = vshrl.u32 2131351028, %v4781
  %v4788 = vor.u32 %v4786, %v4787
  %v4789 = vshll.u32 2131351028, %v4780
  %v4790 = vshrl.u32 2102212464, %v4781
  %v4791 = vor.u32 %v4789, %v4790
  %v4792 = vshll.u32 2102212464, %v4780
  %v4793 = vshrl.u32 920167782, %v4781
  %v4794 = vor.u32 %v4792, %v4793
  %v4795 = vshll.u32 920167782, %v4780
  %v4796 = vshrl.u32 1326507024, %v4781
  %v4797 = vor.u32 %v4795, %v4796
  %vm4798 = vcmp.lt.s32.totalorder %v4779, 1
  %vm4799 = vcmp.lt.s32.totalorder %v4779, 2
  %vm4800 = vcmp.lt.s32.totalorder %v4779, 3
  %vm4801 = vcmp.lt.s32.totalorder %v4779, 4
  %v4802 = vsel %vm4798, %v4782, %v4785
  %v4803 = vsel %vm4801, %v4791, 2102212464
  %v4804 = vsel %vm4800, %v4788, %v4803
  %v4805 = vsel %vm4799, %v4802, %v4804
  %v4806 = vsel %vm4798, %v4785, %v4788
  %v4807 = vsel %vm4801, %v4794, 920167782
  %v4808 = vsel %vm4800, %v4791, %v4807
  %v4809 = vsel %vm4799, %v4806, %v4808
  %v4810 = vsel %vm4798, %v4788, %v4791
  %v4811 = vsel %vm4801, %v4797, 1326507024
  %v4812 = vsel %vm4800, %v4794, %v4811
  %v4813 = vsel %vm4799, %v4810, %v4812
  %v4814 = vshll.u32 %v4774, 8
  %v4815 = vmul.u32.u64.compose %v4814, %v4813
  %v4816 = vextract.low.u32 %v4815
  %v4817 = vextract.high.u32 %v4815
  %v4818 = vmul.u32.u64.compose %v4814, %v4809
  %v4819 = vextract.low.u32 %v4818
  %v4820 = vextract.high.u32 %v4818
  %v4821 = vmul.u32 %v4814, %v4805
  %v4822 = vadd.s32 %v4817, %v4819
  %vm4823 = vc.u32 %v4817, %v4819
  %v4824 = vadd.s32 %v4820, 1
  %v4825 = vsel %vm4823, %v4824, %v4820
  %v4826 = vadd.s32 %v4821, %v4825
  %v4827 = vadd.s32 %v4826, 536870912
  %v4828 = vshrl.u32 %v4827, 30
  %v4829 = vshll.u32 %v4828, 30
  %v4830 = vsub.s32 %v4826, %v4829
  %vm4831 = vcmp.lt.s32.totalorder %v4830, 0
  %v4832 = vsub.s32 0, %v4830
  %v4833 = vsel %vm4831, %v4832, %v4830
  %v4834 = vclz %v4833
  %v4835 = vsub.s32 %v4834, 2
  %vm4836 = vcmp.gt.s32.totalorder 0, %v4835
  %v4837 = vsel %vm4836, 0, %v4835
  %v4838 = vsub.s32 32, %v4837
  %v4839 = vshll.u32 %v4830, %v4837
  %v4840 = vshrl.u32 %v4822, %v4838
  %v4841 = vor.u32 %v4839, %v4840
  %v4842 = vsub.s32 4294967266, %v4837
  %v4843 = vadd.s32 %v4842, 127
  %v4844 = vshll.u32 %v4843, 23
  %v4845 = vor.u32 4788187, %v4844
  %v4846 = vand.u32 2147483647, %v4845
  %v4848 = vcvt.s32.f32 %v4841
  %v4849 = vmul.f32 %v4848, %v4846
  %v4850 = vxor.u32 %v4849, 2147483648
  %v4851 = vsel %vm4768, %v4850, %v4849
  %v4852 = vsub.s32 4, %v4828
  %v4853 = vsel %vm4768, %v4852, %v4828
  %v4854 = vsel %vm4767, %v4346, %v4851
  %v4855 = vsel %vm4767, 0, %v4853
  %v4856 = vcosq.f32.pop %v4854
  %v4857 = vsinq.f32.pop %v4854
  %vm4858 = vweird.f32 %v4346
  %v4859 = vadd.s32 %v4855, 3
  %v4860 = vand.u32 %v4859, 3
  %vm4861 = vcmp.lt.s32.totalorder %v4860, 2
  %vm4862 = vcmp.eq.s32.totalorder %v4860, 0
  %v4863 = vxor.u32 %v4857, 2147483648
  %v4864 = vsel %vm4862, %v4856, %v4863
  %vm4865 = vcmp.eq.s32.totalorder %v4860, 2
  %v4866 = vxor.u32 %v4856, 2147483648
  %v4867 = vsel %vm4865, %v4866, %v4857
  %v4868 = vsel %vm4861, %v4864, %v4867
  %v4869 = vsel %vm4858, nan, %v4868
  %v4870 = vand.u32 2147483647, %v4347
  %vm4871 = vcmp.le.f32.partialorder %v4870, 0.7853982
  %vm4872 = vcmp.lt.s32.totalorder %v4347, 0
  %v4873 = vand.u32 %v4347, 2139095040
  %v4874 = vshrl.u32 %v4873, 23
  %v4875 = vsub.s32 %v4874, 127
  %v4876 = vand.u32 2147483647, %v4347
  %v4877 = vand.u32 %v4876, 8388607
  %v4878 = vor.u32 %v4877, 8388608
  %v4879 = vsub.s32 0, %v4878
  %v4880 = vadd.s32 %v4875, 1
  %vm4881 = vcmp.gt.s32.totalorder %v4880, 0
  %v4882 = vsel %vm4881, %v4880, 0
  %v4883 = vshrl.u32 %v4882, 5
  %v4884 = vand.u32 %v4882, 31
  %v4885 = vsub.s32 32, %v4884
  %v4886 = vshrl.u32 683565275, %v4885
  %v4887 = vshll.u32 683565275, %v4884
  %v4888 = vshrl.u32 2475754826, %v4885
  %v4889 = vor.u32 %v4887, %v4888
  %v4890 = vshll.u32 2475754826, %v4884
  %v4891 = vshrl.u32 2131351028, %v4885
  %v4892 = vor.u32 %v4890, %v4891
  %v4893 = vshll.u32 2131351028, %v4884
  %v4894 = vshrl.u32 2102212464, %v4885
  %v4895 = vor.u32 %v4893, %v4894
  %v4896 = vshll.u32 2102212464, %v4884
  %v4897 = vshrl.u32 920167782, %v4885
  %v4898 = vor.u32 %v4896, %v4897
  %v4899 = vshll.u32 920167782, %v4884
  %v4900 = vshrl.u32 1326507024, %v4885
  %v4901 = vor.u32 %v4899, %v4900
  %vm4902 = vcmp.lt.s32.totalorder %v4883, 1
  %vm4903 = vcmp.lt.s32.totalorder %v4883, 2
  %vm4904 = vcmp.lt.s32.totalorder %v4883, 3
  %vm4905 = vcmp.lt.s32.totalorder %v4883, 4
  %v4906 = vsel %vm4902, %v4886, %v4889
  %v4907 = vsel %vm4905, %v4895, 2102212464
  %v4908 = vsel %vm4904, %v4892, %v4907
  %v4909 = vsel %vm4903, %v4906, %v4908
  %v4910 = vsel %vm4902, %v4889, %v4892
  %v4911 = vsel %vm4905, %v4898, 920167782
  %v4912 = vsel %vm4904, %v4895, %v4911
  %v4913 = vsel %vm4903, %v4910, %v4912
  %v4914 = vsel %vm4902, %v4892, %v4895
  %v4915 = vsel %vm4905, %v4901, 1326507024
  %v4916 = vsel %vm4904, %v4898, %v4915
  %v4917 = vsel %vm4903, %v4914, %v4916
  %v4918 = vshll.u32 %v4878, 8
  %v4919 = vmul.u32.u64.compose %v4918, %v4917
  %v4920 = vextract.low.u32 %v4919
  %v4921 = vextract.high.u32 %v4919
  %v4922 = vmul.u32.u64.compose %v4918, %v4913
  %v4923 = vextract.low.u32 %v4922
  %v4924 = vextract.high.u32 %v4922
  %v4925 = vmul.u32 %v4918, %v4909
  %v4926 = vadd.s32 %v4921, %v4923
  %vm4927 = vc.u32 %v4921, %v4923
  %v4928 = vadd.s32 %v4924, 1
  %v4929 = vsel %vm4927, %v4928, %v4924
  %v4930 = vadd.s32 %v4925, %v4929
  %v4931 = vadd.s32 %v4930, 536870912
  %v4932 = vshrl.u32 %v4931, 30
  %v4933 = vshll.u32 %v4932, 30
  %v4934 = vsub.s32 %v4930, %v4933
  %vm4935 = vcmp.lt.s32.totalorder %v4934, 0
  %v4936 = vsub.s32 0, %v4934
  %v4937 = vsel %vm4935, %v4936, %v4934
  %v4938 = vclz %v4937
  %v4939 = vsub.s32 %v4938, 2
  %vm4940 = vcmp.gt.s32.totalorder 0, %v4939
  %v4941 = vsel %vm4940, 0, %v4939
  %v4942 = vsub.s32 32, %v4941
  %v4943 = vshll.u32 %v4934, %v4941
  %v4944 = vshrl.u32 %v4926, %v4942
  %v4945 = vor.u32 %v4943, %v4944
  %v4946 = vsub.s32 4294967266, %v4941
  %v4947 = vadd.s32 %v4946, 127
  %v4948 = vshll.u32 %v4947, 23
  %v4949 = vor.u32 4788187, %v4948
  %v4950 = vand.u32 2147483647, %v4949
  %v4952 = vcvt.s32.f32 %v4945
  %v4953 = vmul.f32 %v4952, %v4950
  %v4954 = vxor.u32 %v4953, 2147483648
  %v4955 = vsel %vm4872, %v4954, %v4953
  %v4956 = vsub.s32 4, %v4932
  %v4957 = vsel %vm4872, %v4956, %v4932
  %v4958 = vsel %vm4871, %v4347, %v4955
  %v4959 = vsel %vm4871, 0, %v4957
  %v4960 = vcosq.f32.pop %v4958
  %v4961 = vsinq.f32.pop %v4958
  %vm4962 = vweird.f32 %v4347
  %v4963 = vadd.s32 %v4959, 3
  %v4964 = vand.u32 %v4963, 3
  %vm4965 = vcmp.lt.s32.totalorder %v4964, 2
  %vm4966 = vcmp.eq.s32.totalorder %v4964, 0
  %v4967 = vxor.u32 %v4961, 2147483648
  %v4968 = vsel %vm4966, %v4960, %v4967
  %vm4969 = vcmp.eq.s32.totalorder %v4964, 2
  %v4970 = vxor.u32 %v4960, 2147483648
  %v4971 = vsel %vm4969, %v4970, %v4961
  %v4972 = vsel %vm4965, %v4968, %v4971
  %v4973 = vsel %vm4962, nan, %v4972
  %v4974 = vand.u32 2147483647, %v4348
  %vm4975 = vcmp.le.f32.partialorder %v4974, 0.7853982
  %vm4976 = vcmp.lt.s32.totalorder %v4348, 0
  %v4977 = vand.u32 %v4348, 2139095040
  %v4978 = vshrl.u32 %v4977, 23
  %v4979 = vsub.s32 %v4978, 127
  %v4980 = vand.u32 2147483647, %v4348
  %v4981 = vand.u32 %v4980, 8388607
  %v4982 = vor.u32 %v4981, 8388608
  %v4983 = vsub.s32 0, %v4982
  %v4984 = vadd.s32 %v4979, 1
  %vm4985 = vcmp.gt.s32.totalorder %v4984, 0
  %v4986 = vsel %vm4985, %v4984, 0
  %v4987 = vshrl.u32 %v4986, 5
  %v4988 = vand.u32 %v4986, 31
  %v4989 = vsub.s32 32, %v4988
  %v4990 = vshrl.u32 683565275, %v4989
  %v4991 = vshll.u32 683565275, %v4988
  %v4992 = vshrl.u32 2475754826, %v4989
  %v4993 = vor.u32 %v4991, %v4992
  %v4994 = vshll.u32 2475754826, %v4988
  %v4995 = vshrl.u32 2131351028, %v4989
  %v4996 = vor.u32 %v4994, %v4995
  %v4997 = vshll.u32 2131351028, %v4988
  %v4998 = vshrl.u32 2102212464, %v4989
  %v4999 = vor.u32 %v4997, %v4998
  %v5000 = vshll.u32 2102212464, %v4988
  %v5001 = vshrl.u32 920167782, %v4989
  %v5002 = vor.u32 %v5000, %v5001
  %v5003 = vshll.u32 920167782, %v4988
  %v5004 = vshrl.u32 1326507024, %v4989
  %v5005 = vor.u32 %v5003, %v5004
  %vm5006 = vcmp.lt.s32.totalorder %v4987, 1
  %vm5007 = vcmp.lt.s32.totalorder %v4987, 2
  %vm5008 = vcmp.lt.s32.totalorder %v4987, 3
  %vm5009 = vcmp.lt.s32.totalorder %v4987, 4
  %v5010 = vsel %vm5006, %v4990, %v4993
  %v5011 = vsel %vm5009, %v4999, 2102212464
  %v5012 = vsel %vm5008, %v4996, %v5011
  %v5013 = vsel %vm5007, %v5010, %v5012
  %v5014 = vsel %vm5006, %v4993, %v4996
  %v5015 = vsel %vm5009, %v5002, 920167782
  %v5016 = vsel %vm5008, %v4999, %v5015
  %v5017 = vsel %vm5007, %v5014, %v5016
  %v5018 = vsel %vm5006, %v4996, %v4999
  %v5019 = vsel %vm5009, %v5005, 1326507024
  %v5020 = vsel %vm5008, %v5002, %v5019
  %v5021 = vsel %vm5007, %v5018, %v5020
  %v5022 = vshll.u32 %v4982, 8
  %v5023 = vmul.u32.u64.compose %v5022, %v5021
  %v5024 = vextract.low.u32 %v5023
  %v5025 = vextract.high.u32 %v5023
  %v5026 = vmul.u32.u64.compose %v5022, %v5017
  %v5027 = vextract.low.u32 %v5026
  %v5028 = vextract.high.u32 %v5026
  %v5029 = vmul.u32 %v5022, %v5013
  %v5030 = vadd.s32 %v5025, %v5027
  %vm5031 = vc.u32 %v5025, %v5027
  %v5032 = vadd.s32 %v5028, 1
  %v5033 = vsel %vm5031, %v5032, %v5028
  %v5034 = vadd.s32 %v5029, %v5033
  %v5035 = vadd.s32 %v5034, 536870912
  %v5036 = vshrl.u32 %v5035, 30
  %v5037 = vshll.u32 %v5036, 30
  %v5038 = vsub.s32 %v5034, %v5037
  %vm5039 = vcmp.lt.s32.totalorder %v5038, 0
  %v5040 = vsub.s32 0, %v5038
  %v5041 = vsel %vm5039, %v5040, %v5038
  %v5042 = vclz %v5041
  %v5043 = vsub.s32 %v5042, 2
  %vm5044 = vcmp.gt.s32.totalorder 0, %v5043
  %v5045 = vsel %vm5044, 0, %v5043
  %v5046 = vsub.s32 32, %v5045
  %v5047 = vshll.u32 %v5038, %v5045
  %v5048 = vshrl.u32 %v5030, %v5046
  %v5049 = vor.u32 %v5047, %v5048
  %v5050 = vsub.s32 4294967266, %v5045
  %v5051 = vadd.s32 %v5050, 127
  %v5052 = vshll.u32 %v5051, 23
  %v5053 = vor.u32 4788187, %v5052
  %v5054 = vand.u32 2147483647, %v5053
  %v5056 = vcvt.s32.f32 %v5049
  %v5057 = vmul.f32 %v5056, %v5054
  %v5058 = vxor.u32 %v5057, 2147483648
  %v5059 = vsel %vm4976, %v5058, %v5057
  %v5060 = vsub.s32 4, %v5036
  %v5061 = vsel %vm4976, %v5060, %v5036
  %v5062 = vsel %vm4975, %v4348, %v5059
  %v5063 = vsel %vm4975, 0, %v5061
  %v5064 = vcosq.f32.pop %v5062
  %v5065 = vsinq.f32.pop %v5062
  %vm5066 = vweird.f32 %v4348
  %v5067 = vadd.s32 %v5063, 3
  %v5068 = vand.u32 %v5067, 3
  %vm5069 = vcmp.lt.s32.totalorder %v5068, 2
  %vm5070 = vcmp.eq.s32.totalorder %v5068, 0
  %v5071 = vxor.u32 %v5065, 2147483648
  %v5072 = vsel %vm5070, %v5064, %v5071
  %vm5073 = vcmp.eq.s32.totalorder %v5068, 2
  %v5074 = vxor.u32 %v5064, 2147483648
  %v5075 = vsel %vm5073, %v5074, %v5065
  %v5076 = vsel %vm5069, %v5072, %v5075
  %v5077 = vsel %vm5066, nan, %v5076
  %v5078 = vand.u32 2147483647, %v4349
  %vm5079 = vcmp.le.f32.partialorder %v5078, 0.7853982
  %vm5080 = vcmp.lt.s32.totalorder %v4349, 0
  %v5081 = vand.u32 %v4349, 2139095040
  %v5082 = vshrl.u32 %v5081, 23
  %v5083 = vsub.s32 %v5082, 127
  %v5084 = vand.u32 2147483647, %v4349
  %v5085 = vand.u32 %v5084, 8388607
  %v5086 = vor.u32 %v5085, 8388608
  %v5087 = vsub.s32 0, %v5086
  %v5088 = vadd.s32 %v5083, 1
  %vm5089 = vcmp.gt.s32.totalorder %v5088, 0
  %v5090 = vsel %vm5089, %v5088, 0
  %v5091 = vshrl.u32 %v5090, 5
  %v5092 = vand.u32 %v5090, 31
  %v5093 = vsub.s32 32, %v5092
  %v5094 = vshrl.u32 683565275, %v5093
  %v5095 = vshll.u32 683565275, %v5092
  %v5096 = vshrl.u32 2475754826, %v5093
  %v5097 = vor.u32 %v5095, %v5096
  %v5098 = vshll.u32 2475754826, %v5092
  %v5099 = vshrl.u32 2131351028, %v5093
  %v5100 = vor.u32 %v5098, %v5099
  %v5101 = vshll.u32 2131351028, %v5092
  %v5102 = vshrl.u32 2102212464, %v5093
  %v5103 = vor.u32 %v5101, %v5102
  %v5104 = vshll.u32 2102212464, %v5092
  %v5105 = vshrl.u32 920167782, %v5093
  %v5106 = vor.u32 %v5104, %v5105
  %v5107 = vshll.u32 920167782, %v5092
  %v5108 = vshrl.u32 1326507024, %v5093
  %v5109 = vor.u32 %v5107, %v5108
  %vm5110 = vcmp.lt.s32.totalorder %v5091, 1
  %vm5111 = vcmp.lt.s32.totalorder %v5091, 2
  %vm5112 = vcmp.lt.s32.totalorder %v5091, 3
  %vm5113 = vcmp.lt.s32.totalorder %v5091, 4
  %v5114 = vsel %vm5110, %v5094, %v5097
  %v5115 = vsel %vm5113, %v5103, 2102212464
  %v5116 = vsel %vm5112, %v5100, %v5115
  %v5117 = vsel %vm5111, %v5114, %v5116
  %v5118 = vsel %vm5110, %v5097, %v5100
  %v5119 = vsel %vm5113, %v5106, 920167782
  %v5120 = vsel %vm5112, %v5103, %v5119
  %v5121 = vsel %vm5111, %v5118, %v5120
  %v5122 = vsel %vm5110, %v5100, %v5103
  %v5123 = vsel %vm5113, %v5109, 1326507024
  %v5124 = vsel %vm5112, %v5106, %v5123
  %v5125 = vsel %vm5111, %v5122, %v5124
  %v5126 = vshll.u32 %v5086, 8
  %v5127 = vmul.u32.u64.compose %v5126, %v5125
  %v5128 = vextract.low.u32 %v5127
  %v5129 = vextract.high.u32 %v5127
  %v5130 = vmul.u32.u64.compose %v5126, %v5121
  %v5131 = vextract.low.u32 %v5130
  %v5132 = vextract.high.u32 %v5130
  %v5133 = vmul.u32 %v5126, %v5117
  %v5134 = vadd.s32 %v5129, %v5131
  %vm5135 = vc.u32 %v5129, %v5131
  %v5136 = vadd.s32 %v5132, 1
  %v5137 = vsel %vm5135, %v5136, %v5132
  %v5138 = vadd.s32 %v5133, %v5137
  %v5139 = vadd.s32 %v5138, 536870912
  %v5140 = vshrl.u32 %v5139, 30
  %v5141 = vshll.u32 %v5140, 30
  %v5142 = vsub.s32 %v5138, %v5141
  %vm5143 = vcmp.lt.s32.totalorder %v5142, 0
  %v5144 = vsub.s32 0, %v5142
  %v5145 = vsel %vm5143, %v5144, %v5142
  %v5146 = vclz %v5145
  %v5147 = vsub.s32 %v5146, 2
  %vm5148 = vcmp.gt.s32.totalorder 0, %v5147
  %v5149 = vsel %vm5148, 0, %v5147
  %v5150 = vsub.s32 32, %v5149
  %v5151 = vshll.u32 %v5142, %v5149
  %v5152 = vshrl.u32 %v5134, %v5150
  %v5153 = vor.u32 %v5151, %v5152
  %v5154 = vsub.s32 4294967266, %v5149
  %v5155 = vadd.s32 %v5154, 127
  %v5156 = vshll.u32 %v5155, 23
  %v5157 = vor.u32 4788187, %v5156
  %v5158 = vand.u32 2147483647, %v5157
  %v5160 = vcvt.s32.f32 %v5153
  %v5161 = vmul.f32 %v5160, %v5158
  %v5162 = vxor.u32 %v5161, 2147483648
  %v5163 = vsel %vm5080, %v5162, %v5161
  %v5164 = vsub.s32 4, %v5140
  %v5165 = vsel %vm5080, %v5164, %v5140
  %v5166 = vsel %vm5079, %v4349, %v5163
  %v5167 = vsel %vm5079, 0, %v5165
  %v5168 = vcosq.f32.pop %v5166
  %v5169 = vsinq.f32.pop %v5166
  %vm5170 = vweird.f32 %v4349
  %v5171 = vadd.s32 %v5167, 3
  %v5172 = vand.u32 %v5171, 3
  %vm5173 = vcmp.lt.s32.totalorder %v5172, 2
  %vm5174 = vcmp.eq.s32.totalorder %v5172, 0
  %v5175 = vxor.u32 %v5169, 2147483648
  %v5176 = vsel %vm5174, %v5168, %v5175
  %vm5177 = vcmp.eq.s32.totalorder %v5172, 2
  %v5178 = vxor.u32 %v5168, 2147483648
  %v5179 = vsel %vm5177, %v5178, %v5169
  %v5180 = vsel %vm5173, %v5176, %v5179
  %v5181 = vsel %vm5170, nan, %v5180
  %v5182 = vadd.f32 %v4286, %v4453
  %v5183 = vadd.f32 %v4287, %v4557
  %v5184 = vadd.f32 %v4288, %v4661
  %v5185 = vadd.f32 %v4289, %v4765
  %v5186 = vadd.f32 %v4290, %v4869
  %v5187 = vadd.f32 %v4291, %v4973
  %v5188 = vadd.f32 %v4292, %v5077
  %v5189 = vadd.f32 %v4293, %v5181
  %5190 = vmatprep.subr.mxu0 0.0
  %5191 = vmatpush1.msra.mxu0 %v17
  %5192 = vmatprep.subr.mxu0 0.0
  %5193 = vmatpush1.msra.mxu0 %v18
  %5194 = vmatprep.subr.mxu0 0.0
  %5195 = vmatpush1.msra.mxu0 %v19
  %5196 = vmatprep.subr.mxu0 0.0
  %5197 = vmatpush1.msra.mxu0 %v20
  %5198 = vmatprep.subr.mxu0 0.0
  %5199 = vmatpush1.msra.mxu0 %v21
  %5200 = vmatprep.subr.mxu0 0.0
  %5201 = vmatpush1.msra.mxu0 %v22
  %5202 = vmatprep.subr.mxu0 0.0
  %5203 = vmatpush1.msra.mxu0 %v23
  %5204 = vmatprep.subr.mxu0 0.0
  %5205 = vmatpush1.msra.mxu0 %v24
  %5206 = vmatprep.subr.mxu0 0.0
  %5207 = vmatpush1.msra.mxu0 %v25
  %5208 = vmatprep.subr.mxu0 0.0
  %5209 = vmatpush1.msra.mxu0 %v26
  %5210 = vmatprep.subr.mxu0 0.0
  %5211 = vmatpush1.msra.mxu0 %v27
  %5212 = vmatprep.subr.mxu0 0.0
  %5213 = vmatpush1.msra.mxu0 %v28
  %5214 = vmatprep.subr.mxu0 0.0
  %5215 = vmatpush1.msra.mxu0 %v29
  %5216 = vmatprep.subr.mxu0 0.0
  %5217 = vmatpush1.msra.mxu0 %v30
  %5218 = vmatprep.subr.mxu0 0.0
  %5219 = vmatpush1.msra.mxu0 %v31
  %5220 = vmatprep.subr.mxu0 0.0
  %5221 = vmatpush1.msra.mxu0 %v32
  %5222 = vmatprep.subr.mxu0 0.0
  %5223 = vmatpush1.msra.mxu0 0.0
  %5224 = vmatprep.subr.mxu0 0.0
  %5225 = vmatpush1.msra.mxu0 0.0
  %5226 = vmatprep.subr.mxu0 0.0
  %5227 = vmatpush1.msra.mxu0 0.0
  %5228 = vmatprep.subr.mxu0 0.0
  %5229 = vmatpush1.msra.mxu0 0.0
  %5230 = vmatprep.subr.mxu0 0.0
  %5231 = vmatpush1.msra.mxu0 0.0
  %5232 = vmatprep.subr.mxu0 0.0
  %5233 = vmatpush1.msra.mxu0 0.0
  %5234 = vmatprep.subr.mxu0 0.0
  %5235 = vmatpush1.msra.mxu0 0.0
  %5236 = vmatprep.subr.mxu0 0.0
  %5237 = vmatpush1.msra.mxu0 0.0
  %5238 = vmatprep.subr.mxu0 0.0
  %5239 = vmatpush1.msra.mxu0 0.0
  %5240 = vmatprep.subr.mxu0 0.0
  %5241 = vmatpush1.msra.mxu0 0.0
  %5242 = vmatprep.subr.mxu0 0.0
  %5243 = vmatpush1.msra.mxu0 0.0
  %5244 = vmatprep.subr.mxu0 0.0
  %5245 = vmatpush1.msra.mxu0 0.0
  %5246 = vmatprep.subr.mxu0 0.0
  %5247 = vmatpush1.msra.mxu0 0.0
  %5248 = vmatprep.subr.mxu0 0.0
  %5249 = vmatpush1.msra.mxu0 0.0
  %5250 = vmatprep.subr.mxu0 0.0
  %5251 = vmatpush1.msra.mxu0 0.0
  %5252 = vmatprep.subr.mxu0 0.0
  %5253 = vmatpush1.msra.mxu0 0.0
  %5254 = vmatprep.mubr.f32.mxu0 0.0
  %5255 = vmatmul.mubr.f32.gmra.mrb[0].mxu0 %v5182
  %v5256 = vpop.f32.mrb[0].mxu0
  %v5257 = vadd.f32 0.0, %v5256
  %v5258 = vpop.f32.mrb[0].mxu0
  %5259 = vmatprep.mubr.f32.mxu0 0.0
  %5260 = vmatmul.mubr.f32.gmra.mrb[0].mxu0 %v5183
  %v5261 = vpop.f32.mrb[0].mxu0
  %v5262 = vadd.f32 0.0, %v5261
  %v5263 = vpop.f32.mrb[0].mxu0
  %5264 = vmatprep.mubr.f32.mxu0 0.0
  %5265 = vmatmul.mubr.f32.gmra.mrb[0].mxu0 %v5184
  %v5266 = vpop.f32.mrb[0].mxu0
  %v5267 = vadd.f32 0.0, %v5266
  %v5268 = vpop.f32.mrb[0].mxu0
  %5269 = vmatprep.mubr.f32.mxu0 0.0
  %5270 = vmatmul.mubr.f32.gmra.mrb[0].mxu0 %v5185
  %v5271 = vpop.f32.mrb[0].mxu0
  %v5272 = vadd.f32 0.0, %v5271
  %v5273 = vpop.f32.mrb[0].mxu0
  %5274 = vmatprep.mubr.f32.mxu0 0.0
  %5275 = vmatmul.mubr.f32.gmra.mrb[0].mxu0 %v5186
  %v5276 = vpop.f32.mrb[0].mxu0
  %v5277 = vadd.f32 0.0, %v5276
  %v5278 = vpop.f32.mrb[0].mxu0
  %5279 = vmatprep.mubr.f32.mxu0 0.0
  %5280 = vmatmul.mubr.f32.gmra.mrb[0].mxu0 %v5187
  %v5281 = vpop.f32.mrb[0].mxu0
  %v5282 = vadd.f32 0.0, %v5281
  %v5283 = vpop.f32.mrb[0].mxu0
  %5284 = vmatprep.mubr.f32.mxu0 0.0
  %5285 = vmatmul.mubr.f32.gmra.mrb[0].mxu0 %v5188
  %v5286 = vpop.f32.mrb[0].mxu0
  %v5287 = vadd.f32 0.0, %v5286
  %v5288 = vpop.f32.mrb[0].mxu0
  %5289 = vmatprep.mubr.f32.mxu0 0.0
  %5290 = vmatmul.mubr.f32.gmra.mrb[0].mxu0 %v5189
  %v5291 = vpop.f32.mrb[0].mxu0
  %v5292 = vadd.f32 0.0, %v5291
  %v5293 = vpop.f32.mrb[0].mxu0
  %5294 = vdwg.mxu0
  %5296 = vset.pattern.permute.xlu0 3
  %5297 = vperm.xlu0 %5296, %v4158
  %v5298 = vpop.permute.xlu0 %5297
  %5301 = vset.pattern.permute.xlu0 3
  %5302 = vperm.xlu0 %5301, %v4159
  %v5303 = vpop.permute.xlu0 %5302
  %5306 = vset.pattern.permute.xlu0 3
  %5307 = vperm.xlu0 %5306, %v4160
  %v5308 = vpop.permute.xlu0 %5307
  %5311 = vset.pattern.permute.xlu0 3
  %5312 = vperm.xlu0 %5311, %v4161
  %v5313 = vpop.permute.xlu0 %5312
  %5316 = vset.pattern.permute.xlu0 3
  %5317 = vperm.xlu0 %5316, %v4162
  %v5318 = vpop.permute.xlu0 %5317
  %5321 = vset.pattern.permute.xlu0 3
  %5322 = vperm.xlu0 %5321, %v4163
  %v5323 = vpop.permute.xlu0 %5322
  %5326 = vset.pattern.permute.xlu0 3
  %5327 = vperm.xlu0 %5326, %v4164
  %v5328 = vpop.permute.xlu0 %5327
  %5331 = vset.pattern.permute.xlu0 3
  %5332 = vperm.xlu0 %5331, %v4165
  %v5333 = vpop.permute.xlu0 %5332
  %v5335 = vmul.f32 %v5257, %v5298
  %v5336 = vmul.f32 %v5262, %v5303
  %v5337 = vmul.f32 %v5267, %v5308
  %v5338 = vmul.f32 %v5272, %v5313
  %v5339 = vmul.f32 %v5277, %v5318
  %v5340 = vmul.f32 %v5282, %v5323
  %v5341 = vmul.f32 %v5287, %v5328
  %v5342 = vmul.f32 %v5292, %v5333
  %v5343 = vsel %vm1256, %v5335, 0.0
  %5344 = vadd.xlane.f32.xlu0 %v5343
  %v5345 = vpop.xlane.xlu0 %5344
  %v5346 = vsel %vm1256, %v5336, 0.0
  %5347 = vadd.xlane.f32.xlu0 %v5346
  %v5348 = vpop.xlane.xlu0 %5347
  %v5349 = vsel %vm1256, %v5337, 0.0
  %5350 = vadd.xlane.f32.xlu0 %v5349
  %v5351 = vpop.xlane.xlu0 %5350
  %v5352 = vsel %vm1256, %v5338, 0.0
  %5353 = vadd.xlane.f32.xlu0 %v5352
  %v5354 = vpop.xlane.xlu0 %5353
  %v5355 = vsel %vm1256, %v5339, 0.0
  %5356 = vadd.xlane.f32.xlu0 %v5355
  %v5357 = vpop.xlane.xlu0 %5356
  %v5358 = vsel %vm1256, %v5340, 0.0
  %5359 = vadd.xlane.f32.xlu0 %v5358
  %v5360 = vpop.xlane.xlu0 %5359
  %v5361 = vsel %vm1256, %v5341, 0.0
  %5362 = vadd.xlane.f32.xlu0 %v5361
  %v5363 = vpop.xlane.xlu0 %5362
  %v5364 = vsel %vm1256, %v5342, 0.0
  %5365 = vadd.xlane.f32.xlu0 %v5364
  %v5366 = vpop.xlane.xlu0 %5365
  %v5367 = vmul.f32 %v5345, %v1281
  %v5368 = vmul.f32 %v5348, %v1281
  %v5369 = vmul.f32 %v5351, %v1281
  %v5370 = vmul.f32 %v5354, %v1281
  %v5371 = vmul.f32 %v5357, %v1281
  %v5372 = vmul.f32 %v5360, %v1281
  %v5373 = vmul.f32 %v5363, %v1281
  %v5374 = vmul.f32 %v5366, %v1281
  %v5375 = vsub.f32 %v5335, %v5367
  %v5376 = vsub.f32 %v5336, %v5368
  %v5377 = vsub.f32 %v5337, %v5369
  %v5378 = vsub.f32 %v5338, %v5370
  %v5379 = vsub.f32 %v5339, %v5371
  %v5380 = vsub.f32 %v5340, %v5372
  %v5381 = vsub.f32 %v5341, %v5373
  %v5382 = vsub.f32 %v5342, %v5374
  %v5383 = vmul.f32 %v5375, %v5375
  %v5384 = vmul.f32 %v5376, %v5376
  %v5385 = vmul.f32 %v5377, %v5377
  %v5386 = vmul.f32 %v5378, %v5378
  %v5387 = vmul.f32 %v5379, %v5379
  %v5388 = vmul.f32 %v5380, %v5380
  %v5389 = vmul.f32 %v5381, %v5381
  %v5390 = vmul.f32 %v5382, %v5382
  %v5391 = vsel %vm1256, %v5383, 0.0
  %5392 = vadd.xlane.f32.xlu0 %v5391
  %v5393 = vpop.xlane.xlu0 %5392
  %v5394 = vsel %vm1256, %v5384, 0.0
  %5395 = vadd.xlane.f32.xlu0 %v5394
  %v5396 = vpop.xlane.xlu0 %5395
  %v5397 = vsel %vm1256, %v5385, 0.0
  %5398 = vadd.xlane.f32.xlu0 %v5397
  %v5399 = vpop.xlane.xlu0 %5398
  %v5400 = vsel %vm1256, %v5386, 0.0
  %5401 = vadd.xlane.f32.xlu0 %v5400
  %v5402 = vpop.xlane.xlu0 %5401
  %v5403 = vsel %vm1256, %v5387, 0.0
  %5404 = vadd.xlane.f32.xlu0 %v5403
  %v5405 = vpop.xlane.xlu0 %5404
  %v5406 = vsel %vm1256, %v5388, 0.0
  %5407 = vadd.xlane.f32.xlu0 %v5406
  %v5408 = vpop.xlane.xlu0 %5407
  %v5409 = vsel %vm1256, %v5389, 0.0
  %5410 = vadd.xlane.f32.xlu0 %v5409
  %v5411 = vpop.xlane.xlu0 %5410
  %v5412 = vsel %vm1256, %v5390, 0.0
  %5413 = vadd.xlane.f32.xlu0 %v5412
  %v5414 = vpop.xlane.xlu0 %5413
  %v5415 = vmul.f32 %v5393, %v1281
  %v5416 = vmul.f32 %v5396, %v1281
  %v5417 = vmul.f32 %v5399, %v1281
  %v5418 = vmul.f32 %v5402, %v1281
  %v5419 = vmul.f32 %v5405, %v1281
  %v5420 = vmul.f32 %v5408, %v1281
  %v5421 = vmul.f32 %v5411, %v1281
  %v5422 = vmul.f32 %v5414, %v1281
  %v5423 = vadd.f32 %v5415, 1e-05
  %v5424 = vadd.f32 %v5416, 1e-05
  %v5425 = vadd.f32 %v5417, 1e-05
  %v5426 = vadd.f32 %v5418, 1e-05
  %v5427 = vadd.f32 %v5419, 1e-05
  %v5428 = vadd.f32 %v5420, 1e-05
  %v5429 = vadd.f32 %v5421, 1e-05
  %v5430 = vadd.f32 %v5422, 1e-05
  %v5431 = vrsqrt.pop %v5423
  %v5432 = vrsqrt.pop %v5424
  %v5433 = vrsqrt.pop %v5425
  %v5434 = vrsqrt.pop %v5426
  %v5435 = vrsqrt.pop %v5427
  %v5436 = vrsqrt.pop %v5428
  %v5437 = vrsqrt.pop %v5429
  %v5438 = vrsqrt.pop %v5430
  %v5439 = vmul.f32 %v5375, %v5431
  %v5440 = vmul.f32 %v5376, %v5432
  %v5441 = vmul.f32 %v5377, %v5433
  %v5442 = vmul.f32 %v5378, %v5434
  %v5443 = vmul.f32 %v5379, %v5435
  %v5444 = vmul.f32 %v5380, %v5436
  %v5445 = vmul.f32 %v5381, %v5437
  %v5446 = vmul.f32 %v5382, %v5438
  %v5447 = vmul.f32 %v5439, %v1365
  %v5448 = vmul.f32 %v5440, %v1365
  %v5449 = vmul.f32 %v5441, %v1365
  %v5450 = vmul.f32 %v5442, %v1365
  %v5451 = vmul.f32 %v5443, %v1365
  %v5452 = vmul.f32 %v5444, %v1365
  %v5453 = vmul.f32 %v5445, %v1365
  %v5454 = vmul.f32 %v5446, %v1365
  %v5455 = vadd.f32 %v5447, %v1377
  %v5456 = vadd.f32 %v5448, %v1377
  %v5457 = vadd.f32 %v5449, %v1377
  %v5458 = vadd.f32 %v5450, %v1377
  %v5459 = vadd.f32 %v5451, %v1377
  %v5460 = vadd.f32 %v5452, %v1377
  %v5461 = vadd.f32 %v5453, %v1377
  %v5462 = vadd.f32 %v5454, %v1377
  %5471 = vrot.lane.b32.xlu0 %v5455, 96
  %v5472 = vpop.permute.xlu0 %5471
  %5473 = vrot.lane.b32.xlu0 %v5456, 96
  %v5474 = vpop.permute.xlu0 %5473
  %5475 = vrot.lane.b32.xlu0 %v5457, 96
  %v5476 = vpop.permute.xlu0 %5475
  %5477 = vrot.lane.b32.xlu0 %v5458, 96
  %v5478 = vpop.permute.xlu0 %5477
  %5479 = vrot.lane.b32.xlu0 %v5459, 96
  %v5480 = vpop.permute.xlu0 %5479
  %5481 = vrot.lane.b32.xlu0 %v5460, 96
  %v5482 = vpop.permute.xlu0 %5481
  %5483 = vrot.lane.b32.xlu0 %v5461, 96
  %v5484 = vpop.permute.xlu0 %5483
  %5485 = vrot.lane.b32.xlu0 %v5462, 96
  %v5486 = vpop.permute.xlu0 %5485
  %vm5495 = vcmask 1048320
  %5496 = vst.msk [vmem:[%s4] sm:$0xff] %vm5495, %v5472
  %5497 = vst.msk [vmem:[%s4 + $0x8] sm:$0xff] %vm5495, %v5474
  %5498 = vst.msk [vmem:[%s4 + $0x10] sm:$0xff] %vm5495, %v5476
  %5499 = vst.msk [vmem:[%s4 + $0x18] sm:$0xff] %vm5495, %v5478
  %5500 = vst.msk [vmem:[%s4 + $0x20] sm:$0xff] %vm5495, %v5480
  %5501 = vst.msk [vmem:[%s4 + $0x28] sm:$0xff] %vm5495, %v5482
  %5502 = vst.msk [vmem:[%s4 + $0x30] sm:$0xff] %vm5495, %v5484
  %5503 = vst.msk [vmem:[%s4 + $0x38] sm:$0xff] %vm5495, %v5486
  // Predicated region
  $region18: #{time_interval_encoder.1} parent=0 // pred_check
    _
  $region19: #{time_interval_encoder.1} parent=0 // pred_check_branch
    %5505 = sbr.rel (0) target = $region21
  $region20: #{time_interval_encoder.1} parent=0 // pred_region
    _
  $region21: #{time_interval_encoder.1} parent=0 // pred_fallthru
    _
  // Predicated region
  $region22: #{time_interval_encoder.1} parent=0 // pred_check
    _
  $region23: #{time_interval_encoder.1} parent=0 // pred_check_branch
    %5507 = sbr.rel (0) target = $region25
  $region24: #{time_interval_encoder.1} parent=0 // pred_region
    _
  $region25: #{time_interval_encoder.1} parent=0 // pred_fallthru
    _

</llo_original>
